<compile_context>
chip_gen: v5e
topology: v5e:2x2
jax: 0.10.0
libtpu: 0.0.40
codegen_flags: <defaults>
</compile_context>

<pallas_src>
import functools

import jax
import jax.numpy as jnp
from jax.experimental import pallas as pl
from jax.experimental.pallas import tpu as pltpu

BN_EPS = 1e-5  # nn.BatchNorm2d default


# ----------------------------- Pallas kernel -----------------------------

def _bottleneck_kernel(use_add, H, W, Cin, Chid, Cout,
                       x_ref, w1_ref, b1_ref, w2_ref, b2_ref, o_ref, pad_ref):
    """Fused Bottleneck for one image.

    x_ref  : (1, H, W, Cin)  f32   input tile (NHWC)
    w1_ref : (Cin, Chid)     bf16  conv1 1x1 weight with BN1 scale folded in
    b1_ref : (1, Chid)       f32   folded BN1 bias
    w2_ref : (9*Chid, Cout)  bf16  conv2 3x3 weight, taps stacked along rows, BN2 folded
    b2_ref : (1, Cout)       f32   folded BN2 bias
    o_ref  : (1, H, W, Cout) f32   output tile (NHWC)
    pad_ref: (H+2, W+2, Chid) f32  VMEM scratch: zero-padded conv1 activation (halo)
    """
    x = x_ref[0]                                   # (H, W, Cin)
    xt = x.reshape(H * W, Cin)                     # tokens-major, channels on lanes

    # ---- conv1 (1x1) + folded eval-BN1 + SiLU ----
    h = jnp.dot(xt.astype(w1_ref.dtype), w1_ref[...],
                preferred_element_type=jnp.float32) + b1_ref[0]
    h = h * (1.0 / (1.0 + jnp.exp(-h)))            # SiLU in f32 (EUP exp)

    # ---- build zero halo for the 3x3 conv in VMEM scratch ----
    pad_ref[...] = jnp.zeros_like(pad_ref)
    pad_ref[1:H + 1, 1:W + 1, :] = h.reshape(H, W, Chid)

    # ---- conv2 (3x3, pad=1, stride=1) as 9 shifted matmuls + folded eval-BN2 ----
    acc = jnp.zeros((H * W, Cout), jnp.float32)
    for ky in range(3):                            # static unroll: 9 MXU matmuls
        for kx in range(3):
            tap = ky * 3 + kx
            patch = pad_ref[ky:ky + H, kx:kx + W, :].reshape(H * W, Chid)
            w_tap = w2_ref[tap * Chid:(tap + 1) * Chid, :]
            acc = acc + jnp.dot(patch.astype(w2_ref.dtype), w_tap,
                                preferred_element_type=jnp.float32)
    y = acc + b2_ref[0]
    y = y * (1.0 / (1.0 + jnp.exp(-y)))            # SiLU

    if use_add:                                    # residual (shortcut and Cin == Cout)
        y = y + xt

    o_ref[0] = y.reshape(H, W, Cout).astype(o_ref.dtype)


# ----------------------------- wrapper -----------------------------

def _fold_bn(w, gamma, beta, mean, var, eps=BN_EPS):
    """Fold eval-mode BatchNorm into the preceding (bias-free) conv."""
    scale = gamma / jnp.sqrt(var + eps)            # (Cout,)
    w_f = w * scale[:, None, None, None]           # (Cout, Cin, kh, kw)
    b_f = beta - mean * scale                      # (Cout,)
    return w_f, b_f


def bottleneck_forward(x_nchw, params, shortcut=True):
    """x_nchw: (B, Cin, H, W) f32, PyTorch layout. Returns (B, Cout, H, W) f32."""
    B, Cin, H, W = x_nchw.shape
    w1, g1, be1, m1, v1 = (params[k] for k in ("w1", "g1", "b1", "m1", "v1"))
    w2, g2, be2, m2, v2 = (params[k] for k in ("w2", "g2", "b2", "m2", "v2"))
    Chid = w1.shape[0]
    Cout = w2.shape[0]
    use_add = bool(shortcut and Cin == Cout)

    # Host-side parameter prep: fold BN, rearrange to matmul layout, cast to bf16.
    w1f, b1f = _fold_bn(w1, g1, be1, m1, v1)
    w2f, b2f = _fold_bn(w2, g2, be2, m2, v2)
    w1_mat = w1f[:, :, 0, 0].T.astype(jnp.bfloat16)                       # (Cin, Chid)
    # (Cout, Chid, 3, 3) -> (ky, kx, Chid, Cout) -> (9*Chid, Cout)
    w2_mat = jnp.transpose(w2f, (2, 3, 1, 0)).reshape(9 * Chid, Cout).astype(jnp.bfloat16)

    x_nhwc = jnp.transpose(x_nchw, (0, 2, 3, 1))                          # (B, H, W, Cin)

    kernel = functools.partial(_bottleneck_kernel, use_add, H, W, Cin, Chid, Cout)
    out_nhwc = pl.pallas_call(
        kernel,
        out_shape=jax.ShapeDtypeStruct((B, H, W, Cout), x_nchw.dtype),
        grid=(B,),
        in_specs=[
            pl.BlockSpec((1, H, W, Cin), lambda b: (b, 0, 0, 0)),
            pl.BlockSpec((Cin, Chid), lambda b: (0, 0)),
            pl.BlockSpec((1, Chid), lambda b: (0, 0)),
            pl.BlockSpec((9 * Chid, Cout), lambda b: (0, 0)),
            pl.BlockSpec((1, Cout), lambda b: (0, 0)),
        ],
        out_specs=pl.BlockSpec((1, H, W, Cout), lambda b: (b, 0, 0, 0)),
        scratch_shapes=[pltpu.VMEM((H + 2, W + 2, Chid), jnp.float32)],
        compiler_params=pltpu.CompilerParams(dimension_semantics=("parallel",)),
    )(x_nhwc, w1_mat, b1f.reshape(1, Chid), w2_mat, b2f.reshape(1, Cout))

    return jnp.transpose(out_nhwc, (0, 3, 1, 2))                          # back to NCHW


# ----------------------------- pure-JAX reference -----------------------------

def _base_conv_ref(x, w, gamma, beta, mean, var):
    pad = (w.shape[-1] - 1) // 2
    y = jax.lax.conv_general_dilated(
        x, w, window_strides=(1, 1), padding=((pad, pad), (pad, pad)),
        dimension_numbers=("NCHW", "OIHW", "NCHW"))
    scale = gamma / jnp.sqrt(var + BN_EPS)
    y = y * scale[None, :, None, None] + (beta - mean * scale)[None, :, None, None]
    return y * jax.nn.sigmoid(y)                   # SiLU


def bottleneck_reference(x, p, shortcut=True):
    y = _base_conv_ref(x, p["w1"], p["g1"], p["b1"], p["m1"], p["v1"])
    y = _base_conv_ref(y, p["w2"], p["g2"], p["b2"], p["m2"], p["v2"])
    if shortcut and x.shape[1] == y.shape[1]:
        y = y + x
    return y


# ----------------------------- main -----------------------------

if __name__ == "__main__":
    # Small config consistent with the module: in == out so the shortcut is active,
    # expansion=0.5 -> hidden = out // 2.
    B, Cin, H, W = 2, 64, 16, 16
    Cout = Cin
    Chid = int(Cout * 0.5)

    key = jax.random.PRNGKey(0)
    ks = jax.random.split(key, 11)
    x = jax.random.normal(ks[0], (B, Cin, H, W), jnp.float32)

    params = dict(
        w1=0.05 * jax.random.normal(ks[1], (Chid, Cin, 1, 1), jnp.float32),
        g1=1.0 + 0.1 * jax.random.normal(ks[2], (Chid,), jnp.float32),
        b1=0.1 * jax.random.normal(ks[3], (Chid,), jnp.float32),
        m1=0.1 * jax.random.normal(ks[4], (Chid,), jnp.float32),
        v1=0.5 + jax.random.uniform(ks[5], (Chid,), jnp.float32),
        w2=0.05 * jax.random.normal(ks[6], (Cout, Chid, 3, 3), jnp.float32),
        g2=1.0 + 0.1 * jax.random.normal(ks[7], (Cout,), jnp.float32),
        b2=0.1 * jax.random.normal(ks[8], (Cout,), jnp.float32),
        m2=0.1 * jax.random.normal(ks[9], (Cout,), jnp.float32),
        v2=0.5 + jax.random.uniform(ks[10], (Cout,), jnp.float32),
    )

    out = bottleneck_forward(x, params, shortcut=True)
    out = jax.block_until_ready(out)
    assert out.shape == (B, Cout, H, W) and out.dtype == jnp.float32

    ref = jax.block_until_ready(bottleneck_reference(x, params, shortcut=True))
    max_err = float(jnp.max(jnp.abs(out - ref)))
    assert max_err < 5e-2, f"max abs err {max_err}"   # bf16 matmul operands, f32 accumulate

    print("KERNEL_OK")
</pallas_src>

<mosaic_0001>
module attributes {stable_mosaic.version = 11 : i64} {
  func.func @_bottleneck_kernel(%arg0: i32, %arg1: memref<1x16x16x64xf32, #tpu.memory_space<vmem>>, %arg2: memref<64x32xbf16, #tpu.memory_space<vmem>>, %arg3: memref<1x32xf32, #tpu.memory_space<vmem>>, %arg4: memref<288x64xbf16, #tpu.memory_space<vmem>>, %arg5: memref<1x64xf32, #tpu.memory_space<vmem>>, %arg6: memref<1x16x16x64xf32, #tpu.memory_space<vmem>>, %arg7: memref<18x18x32xf32, #tpu.memory_space<vmem>>) attributes {dimension_semantics = [#tpu.dimension_semantics<parallel>], iteration_bounds = array<i64: 2>, scalar_prefetch = 0 : i64, scratch_operands = 1 : i64, tpu.core_type = #tpu.core_type<tc>, window_params = [{transform_indices = @transform_0, window_bounds = array<i64: 1, 16, 16, 64>}, {pipeline_mode = #tpu.pipeline_mode<synchronous>, transform_indices = @transform_1, window_bounds = array<i64: 64, 32>}, {pipeline_mode = #tpu.pipeline_mode<synchronous>, transform_indices = @transform_2, window_bounds = array<i64: 1, 32>}, {pipeline_mode = #tpu.pipeline_mode<synchronous>, transform_indices = @transform_3, window_bounds = array<i64: 288, 64>}, {pipeline_mode = #tpu.pipeline_mode<synchronous>, transform_indices = @transform_4, window_bounds = array<i64: 1, 64>}, {transform_indices = @transform_5, window_bounds = array<i64: 1, 16, 16, 64>}]} {
    %c0 = arith.constant 0 : index
    %c0_0 = arith.constant 0 : index
    %c0_1 = arith.constant 0 : index
    %c0_2 = arith.constant 0 : index
    %0 = vector.load %arg1[%c0, %c0_0, %c0_1, %c0_2] : memref<1x16x16x64xf32, #tpu.memory_space<vmem>>, vector<1x16x16x64xf32>
    %1 = vector.shape_cast %0 : vector<1x16x16x64xf32> to vector<16x16x64xf32>
    %2 = vector.shape_cast %1 : vector<16x16x64xf32> to vector<256x64xf32>
    %3 = arith.truncf %2 : vector<256x64xf32> to vector<256x64xbf16>
    %c0_3 = arith.constant 0 : index
    %c0_4 = arith.constant 0 : index
    %4 = vector.load %arg2[%c0_3, %c0_4] : memref<64x32xbf16, #tpu.memory_space<vmem>>, vector<64x32xbf16>
    %cst = arith.constant dense<0.000000e+00> : vector<256x32xf32>
    %5 = tpu.matmul %3, %4, %cst {dimension_numbers = #tpu.dot_dimension_numbers<[1], [0], [0], [1], [0, 0, 1, 1], [], []>} : vector<256x64xbf16>, vector<64x32xbf16>, vector<256x32xf32> -> vector<256x32xf32>
    %c0_5 = arith.constant 0 : index
    %c0_6 = arith.constant 0 : index
    %6 = vector.load %arg3[%c0_5, %c0_6] : memref<1x32xf32, #tpu.memory_space<vmem>>, vector<1x32xf32>
    %7 = vector.shape_cast %6 : vector<1x32xf32> to vector<32xf32>
    %8 = vector.shape_cast %7 : vector<32xf32> to vector<1x32xf32>
    %9 = vector.broadcast %8 : vector<1x32xf32> to vector<256x32xf32>
    %10 = arith.addf %5, %9 : vector<256x32xf32>
    %cst_7 = arith.constant 0.000000e+00 : f32
    %11 = vector.broadcast %cst_7 : f32 to vector<256x32xf32>
    %12 = arith.subf %11, %10 : vector<256x32xf32>
    %13 = math.exp %12 : vector<256x32xf32>
    %cst_8 = arith.constant 1.000000e+00 : f32
    %14 = vector.broadcast %cst_8 : f32 to vector<256x32xf32>
    %15 = arith.addf %14, %13 : vector<256x32xf32>
    %cst_9 = arith.constant 1.000000e+00 : f32
    %16 = vector.broadcast %cst_9 : f32 to vector<256x32xf32>
    %17 = arith.divf %16, %15 : vector<256x32xf32>
    %18 = arith.mulf %10, %17 : vector<256x32xf32>
    %cst_10 = arith.constant 0.000000e+00 : f32
    %19 = vector.broadcast %cst_10 : f32 to vector<18x18x32xf32>
    %c0_11 = arith.constant 0 : index
    %c0_12 = arith.constant 0 : index
    %c0_13 = arith.constant 0 : index
    %20 = vector.load %arg7[%c0_11, %c0_12, %c0_13] : memref<18x18x32xf32, #tpu.memory_space<vmem>>, vector<18x18x32xf32>
    tpu.vector_store %arg7[%c0_11, %c0_12, %c0_13], %19 {strides = array<i32>} : memref<18x18x32xf32, #tpu.memory_space<vmem>>, vector<18x18x32xf32>,
    %21 = vector.shape_cast %18 : vector<256x32xf32> to vector<16x16x32xf32>
    %c1 = arith.constant 1 : index
    %c1_14 = arith.constant 1 : index
    %c0_15 = arith.constant 0 : index
    %22 = vector.load %arg7[%c1, %c1_14, %c0_15] : memref<18x18x32xf32, #tpu.memory_space<vmem>>, vector<16x16x32xf32>
    tpu.vector_store %arg7[%c1, %c1_14, %c0_15], %21 {strides = array<i32>} : memref<18x18x32xf32, #tpu.memory_space<vmem>>, vector<16x16x32xf32>,
    %cst_16 = arith.constant 0.000000e+00 : f32
    %23 = vector.broadcast %cst_16 : f32 to vector<256x64xf32>
    %c0_17 = arith.constant 0 : index
    %c0_18 = arith.constant 0 : index
    %c0_19 = arith.constant 0 : index
    %24 = vector.load %arg7[%c0_17, %c0_18, %c0_19] : memref<18x18x32xf32, #tpu.memory_space<vmem>>, vector<16x16x32xf32>
    %25 = vector.shape_cast %24 : vector<16x16x32xf32> to vector<256x32xf32>
    %c0_20 = arith.constant 0 : index
    %c0_21 = arith.constant 0 : index
    %26 = vector.load %arg4[%c0_20, %c0_21] : memref<288x64xbf16, #tpu.memory_space<vmem>>, vector<32x64xbf16>
    %27 = arith.truncf %25 : vector<256x32xf32> to vector<256x32xbf16>
    %cst_22 = arith.constant dense<0.000000e+00> : vector<256x64xf32>
    %28 = tpu.matmul %27, %26, %cst_22 {dimension_numbers = #tpu.dot_dimension_numbers<[1], [0], [0], [1], [0, 0, 1, 1], [], []>} : vector<256x32xbf16>, vector<32x64xbf16>, vector<256x64xf32> -> vector<256x64xf32>
    %29 = arith.addf %23, %28 : vector<256x64xf32>
    %c0_23 = arith.constant 0 : index
    %c1_24 = arith.constant 1 : index
    %c0_25 = arith.constant 0 : index
    %30 = vector.load %arg7[%c0_23, %c1_24, %c0_25] : memref<18x18x32xf32, #tpu.memory_space<vmem>>, vector<16x16x32xf32>
    %31 = vector.shape_cast %30 : vector<16x16x32xf32> to vector<256x32xf32>
    %c32 = arith.constant 32 : index
    %c0_26 = arith.constant 0 : index
    %32 = vector.load %arg4[%c32, %c0_26] : memref<288x64xbf16, #tpu.memory_space<vmem>>, vector<32x64xbf16>
    %33 = arith.truncf %31 : vector<256x32xf32> to vector<256x32xbf16>
    %cst_27 = arith.constant dense<0.000000e+00> : vector<256x64xf32>
    %34 = tpu.matmul %33, %32, %cst_27 {dimension_numbers = #tpu.dot_dimension_numbers<[1], [0], [0], [1], [0, 0, 1, 1], [], []>} : vector<256x32xbf16>, vector<32x64xbf16>, vector<256x64xf32> -> vector<256x64xf32>
    %35 = arith.addf %29, %34 : vector<256x64xf32>
    %c0_28 = arith.constant 0 : index
    %c2 = arith.constant 2 : index
    %c0_29 = arith.constant 0 : index
    %36 = vector.load %arg7[%c0_28, %c2, %c0_29] : memref<18x18x32xf32, #tpu.memory_space<vmem>>, vector<16x16x32xf32>
    %37 = vector.shape_cast %36 : vector<16x16x32xf32> to vector<256x32xf32>
    %c64 = arith.constant 64 : index
    %c0_30 = arith.constant 0 : index
    %38 = vector.load %arg4[%c64, %c0_30] : memref<288x64xbf16, #tpu.memory_space<vmem>>, vector<32x64xbf16>
    %39 = arith.truncf %37 : vector<256x32xf32> to vector<256x32xbf16>
    %cst_31 = arith.constant dense<0.000000e+00> : vector<256x64xf32>
    %40 = tpu.matmul %39, %38, %cst_31 {dimension_numbers = #tpu.dot_dimension_numbers<[1], [0], [0], [1], [0, 0, 1, 1], [], []>} : vector<256x32xbf16>, vector<32x64xbf16>, vector<256x64xf32> -> vector<256x64xf32>
    %41 = arith.addf %35, %40 : vector<256x64xf32>
    %c1_32 = arith.constant 1 : index
    %c0_33 = arith.constant 0 : index
    %c0_34 = arith.constant 0 : index
    %42 = vector.load %arg7[%c1_32, %c0_33, %c0_34] : memref<18x18x32xf32, #tpu.memory_space<vmem>>, vector<16x16x32xf32>
    %43 = vector.shape_cast %42 : vector<16x16x32xf32> to vector<256x32xf32>
    %c96 = arith.constant 96 : index
    %c0_35 = arith.constant 0 : index
    %44 = vector.load %arg4[%c96, %c0_35] : memref<288x64xbf16, #tpu.memory_space<vmem>>, vector<32x64xbf16>
    %45 = arith.truncf %43 : vector<256x32xf32> to vector<256x32xbf16>
    %cst_36 = arith.constant dense<0.000000e+00> : vector<256x64xf32>
    %46 = tpu.matmul %45, %44, %cst_36 {dimension_numbers = #tpu.dot_dimension_numbers<[1], [0], [0], [1], [0, 0, 1, 1], [], []>} : vector<256x32xbf16>, vector<32x64xbf16>, vector<256x64xf32> -> vector<256x64xf32>
    %47 = arith.addf %41, %46 : vector<256x64xf32>
    %c1_37 = arith.constant 1 : index
    %c1_38 = arith.constant 1 : index
    %c0_39 = arith.constant 0 : index
    %48 = vector.load %arg7[%c1_37, %c1_38, %c0_39] : memref<18x18x32xf32, #tpu.memory_space<vmem>>, vector<16x16x32xf32>
    %49 = vector.shape_cast %48 : vector<16x16x32xf32> to vector<256x32xf32>
    %c128 = arith.constant 128 : index
    %c0_40 = arith.constant 0 : index
    %50 = vector.load %arg4[%c128, %c0_40] : memref<288x64xbf16, #tpu.memory_space<vmem>>, vector<32x64xbf16>
    %51 = arith.truncf %49 : vector<256x32xf32> to vector<256x32xbf16>
    %cst_41 = arith.constant dense<0.000000e+00> : vector<256x64xf32>
    %52 = tpu.matmul %51, %50, %cst_41 {dimension_numbers = #tpu.dot_dimension_numbers<[1], [0], [0], [1], [0, 0, 1, 1], [], []>} : vector<256x32xbf16>, vector<32x64xbf16>, vector<256x64xf32> -> vector<256x64xf32>
    %53 = arith.addf %47, %52 : vector<256x64xf32>
    %c1_42 = arith.constant 1 : index
    %c2_43 = arith.constant 2 : index
    %c0_44 = arith.constant 0 : index
    %54 = vector.load %arg7[%c1_42, %c2_43, %c0_44] : memref<18x18x32xf32, #tpu.memory_space<vmem>>, vector<16x16x32xf32>
    %55 = vector.shape_cast %54 : vector<16x16x32xf32> to vector<256x32xf32>
    %c160 = arith.constant 160 : index
    %c0_45 = arith.constant 0 : index
    %56 = vector.load %arg4[%c160, %c0_45] : memref<288x64xbf16, #tpu.memory_space<vmem>>, vector<32x64xbf16>
    %57 = arith.truncf %55 : vector<256x32xf32> to vector<256x32xbf16>
    %cst_46 = arith.constant dense<0.000000e+00> : vector<256x64xf32>
    %58 = tpu.matmul %57, %56, %cst_46 {dimension_numbers = #tpu.dot_dimension_numbers<[1], [0], [0], [1], [0, 0, 1, 1], [], []>} : vector<256x32xbf16>, vector<32x64xbf16>, vector<256x64xf32> -> vector<256x64xf32>
    %59 = arith.addf %53, %58 : vector<256x64xf32>
    %c2_47 = arith.constant 2 : index
    %c0_48 = arith.constant 0 : index
    %c0_49 = arith.constant 0 : index
    %60 = vector.load %arg7[%c2_47, %c0_48, %c0_49] : memref<18x18x32xf32, #tpu.memory_space<vmem>>, vector<16x16x32xf32>
    %61 = vector.shape_cast %60 : vector<16x16x32xf32> to vector<256x32xf32>
    %c192 = arith.constant 192 : index
    %c0_50 = arith.constant 0 : index
    %62 = vector.load %arg4[%c192, %c0_50] : memref<288x64xbf16, #tpu.memory_space<vmem>>, vector<32x64xbf16>
    %63 = arith.truncf %61 : vector<256x32xf32> to vector<256x32xbf16>
    %cst_51 = arith.constant dense<0.000000e+00> : vector<256x64xf32>
    %64 = tpu.matmul %63, %62, %cst_51 {dimension_numbers = #tpu.dot_dimension_numbers<[1], [0], [0], [1], [0, 0, 1, 1], [], []>} : vector<256x32xbf16>, vector<32x64xbf16>, vector<256x64xf32> -> vector<256x64xf32>
    %65 = arith.addf %59, %64 : vector<256x64xf32>
    %c2_52 = arith.constant 2 : index
    %c1_53 = arith.constant 1 : index
    %c0_54 = arith.constant 0 : index
    %66 = vector.load %arg7[%c2_52, %c1_53, %c0_54] : memref<18x18x32xf32, #tpu.memory_space<vmem>>, vector<16x16x32xf32>
    %67 = vector.shape_cast %66 : vector<16x16x32xf32> to vector<256x32xf32>
    %c224 = arith.constant 224 : index
    %c0_55 = arith.constant 0 : index
    %68 = vector.load %arg4[%c224, %c0_55] : memref<288x64xbf16, #tpu.memory_space<vmem>>, vector<32x64xbf16>
    %69 = arith.truncf %67 : vector<256x32xf32> to vector<256x32xbf16>
    %cst_56 = arith.constant dense<0.000000e+00> : vector<256x64xf32>
    %70 = tpu.matmul %69, %68, %cst_56 {dimension_numbers = #tpu.dot_dimension_numbers<[1], [0], [0], [1], [0, 0, 1, 1], [], []>} : vector<256x32xbf16>, vector<32x64xbf16>, vector<256x64xf32> -> vector<256x64xf32>
    %71 = arith.addf %65, %70 : vector<256x64xf32>
    %c2_57 = arith.constant 2 : index
    %c2_58 = arith.constant 2 : index
    %c0_59 = arith.constant 0 : index
    %72 = vector.load %arg7[%c2_57, %c2_58, %c0_59] : memref<18x18x32xf32, #tpu.memory_space<vmem>>, vector<16x16x32xf32>
    %73 = vector.shape_cast %72 : vector<16x16x32xf32> to vector<256x32xf32>
    %c256 = arith.constant 256 : index
    %c0_60 = arith.constant 0 : index
    %74 = vector.load %arg4[%c256, %c0_60] : memref<288x64xbf16, #tpu.memory_space<vmem>>, vector<32x64xbf16>
    %75 = arith.truncf %73 : vector<256x32xf32> to vector<256x32xbf16>
    %cst_61 = arith.constant dense<0.000000e+00> : vector<256x64xf32>
    %76 = tpu.matmul %75, %74, %cst_61 {dimension_numbers = #tpu.dot_dimension_numbers<[1], [0], [0], [1], [0, 0, 1, 1], [], []>} : vector<256x32xbf16>, vector<32x64xbf16>, vector<256x64xf32> -> vector<256x64xf32>
    %77 = arith.addf %71, %76 : vector<256x64xf32>
    %c0_62 = arith.constant 0 : index
    %c0_63 = arith.constant 0 : index
    %78 = vector.load %arg5[%c0_62, %c0_63] : memref<1x64xf32, #tpu.memory_space<vmem>>, vector<1x64xf32>
    %79 = vector.shape_cast %78 : vector<1x64xf32> to vector<64xf32>
    %80 = vector.shape_cast %79 : vector<64xf32> to vector<1x64xf32>
    %81 = vector.broadcast %80 : vector<1x64xf32> to vector<256x64xf32>
    %82 = arith.addf %77, %81 : vector<256x64xf32>
    %cst_64 = arith.constant 0.000000e+00 : f32
    %83 = vector.broadcast %cst_64 : f32 to vector<256x64xf32>
    %84 = arith.subf %83, %82 : vector<256x64xf32>
    %85 = math.exp %84 : vector<256x64xf32>
    %cst_65 = arith.constant 1.000000e+00 : f32
    %86 = vector.broadcast %cst_65 : f32 to vector<256x64xf32>
    %87 = arith.addf %86, %85 : vector<256x64xf32>
    %cst_66 = arith.constant 1.000000e+00 : f32
    %88 = vector.broadcast %cst_66 : f32 to vector<256x64xf32>
    %89 = arith.divf %88, %87 : vector<256x64xf32>
    %90 = arith.mulf %82, %89 : vector<256x64xf32>
    %91 = arith.addf %90, %2 : vector<256x64xf32>
    %92 = vector.shape_cast %91 : vector<256x64xf32> to vector<16x16x64xf32>
    %c0_67 = arith.constant 0 : index
    %c0_68 = arith.constant 0 : index
    %c0_69 = arith.constant 0 : index
    %c0_70 = arith.constant 0 : index
    %93 = vector.load %arg6[%c0_67, %c0_68, %c0_69, %c0_70] : memref<1x16x16x64xf32, #tpu.memory_space<vmem>>, vector<1x16x16x64xf32>
    %94 = vector.shape_cast %93 : vector<1x16x16x64xf32> to vector<16x16x64xf32>
    %95 = vector.shape_cast %92 : vector<16x16x64xf32> to vector<1x16x16x64xf32>
    tpu.vector_store %arg6[%c0_67, %c0_68, %c0_69, %c0_70], %95 {strides = array<i32>} : memref<1x16x16x64xf32, #tpu.memory_space<vmem>>, vector<1x16x16x64xf32>,
    return
  }
  func.func @transform_0(%arg0: i32) -> (i32, i32, i32, i32) {
    %c0_i32 = arith.constant 0 : i32
    %c0_i32_0 = arith.constant 0 : i32
    %c0_i32_1 = arith.constant 0 : i32
    %c0_i32_2 = arith.constant 0 : i32
    return %arg0, %c0_i32, %c0_i32_0, %c0_i32_1 : i32, i32, i32, i32
  }
  func.func @transform_1(%arg0: i32) -> (i32, i32) {
    %c0_i32 = arith.constant 0 : i32
    %c0_i32_0 = arith.constant 0 : i32
    %c0_i32_1 = arith.constant 0 : i32
    return %c0_i32, %c0_i32_0 : i32, i32
  }
  func.func @transform_2(%arg0: i32) -> (i32, i32) {
    %c0_i32 = arith.constant 0 : i32
    %c0_i32_0 = arith.constant 0 : i32
    %c0_i32_1 = arith.constant 0 : i32
    return %c0_i32, %c0_i32_0 : i32, i32
  }
  func.func @transform_3(%arg0: i32) -> (i32, i32) {
    %c0_i32 = arith.constant 0 : i32
    %c0_i32_0 = arith.constant 0 : i32
    %c0_i32_1 = arith.constant 0 : i32
    return %c0_i32, %c0_i32_0 : i32, i32
  }
  func.func @transform_4(%arg0: i32) -> (i32, i32) {
    %c0_i32 = arith.constant 0 : i32
    %c0_i32_0 = arith.constant 0 : i32
    %c0_i32_1 = arith.constant 0 : i32
    return %c0_i32, %c0_i32_0 : i32, i32
  }
  func.func @transform_5(%arg0: i32) -> (i32, i32, i32, i32) {
    %c0_i32 = arith.constant 0 : i32
    %c0_i32_0 = arith.constant 0 : i32
    %c0_i32_1 = arith.constant 0 : i32
    %c0_i32_2 = arith.constant 0 : i32
    return %arg0, %c0_i32, %c0_i32_0, %c0_i32_1 : i32, i32, i32, i32
  }
}

</mosaic_0001>

<llo_original>
// kernel: tpu_custom_call.1
$region0: #{tpu_custom_call.1}
  #allocation0 [shape = 'u32[]', space=smem, size = 0x4, offset = 0x4, fixed_abs, tag = 'smem constant byte address 0x4 - core index']
  #allocation1 [shape = 'u32[72,128]{1,0:T(1,128)}', space=vmem, size = 0x9000, scoped, tag = 'internal scratch']
  #allocation2 [shape = 'f32[18,18,32]{2,1,0:T(8,128)}', space=vmem, size = 0x36000, scoped, tag = 'scratch operand']
  %s0 = inlined_call_operand.hbm [shape: f32[2,16,16,64], index: 0, kind: input, shape index: {}]
  %s1 = inlined_call_operand.vmem [shape: bf16[64,32], index: 1, kind: input, shape index: {}]
  %s2 = inlined_call_operand.vmem [shape: f32[1,32], index: 2, kind: input, shape index: {}]
  %s3 = inlined_call_operand.vmem [shape: bf16[288,64], index: 3, kind: input, shape index: {}]
  %s4 = inlined_call_operand.vmem [shape: f32[1,64], index: 4, kind: input, shape index: {}]
  %s5 = inlined_call_operand.hbm [shape: f32[2,16,16,64], index: 5, kind: output, shape index: {}]
  %s6 = sld [smem:[#allocation0]]
  $region57: #{tpu_custom_call.1} parent=0
    _
  %s8 = ssub.s32 1, %s6
  %s9 = scalar_select 0, %s8, %s6
  $region1: #{tpu_custom_call.1} parent=0
    #allocation3 [shape = 'u8[262144]{0}', space=vmem, size = 0x40000, scoped, tag = 'input window, operand 0']
    #allocation4 [shape = 's32[2]{0}', space=sflag, size = 0x8, scoped, tag = 'scoped memory for tpu_custom_call.1']
    #allocation5 [shape = 's32[2]{0}', space=sflag, size = 0x8, scoped, tag = 'scoped memory for tpu_custom_call.1']
    #allocation6 [shape = 'u8[262144]{0}', space=vmem, size = 0x40000, scoped, tag = 'output window, operand 0']
    %10 = vsyncpa [#allocation4], 0
    %s11 = scalar_lea.sflag [#allocation4], 1
    %12 = vsyncpa %s11, 0
    %13 = vsyncpa [#allocation5], 0
    %s14 = scalar_lea.sflag [#allocation5], 1
    %15 = vsyncpa %s14, 0
    loop: start=0, step=1, limit=4
    $region2: #{tpu_custom_call.1} parent=1 // loop_pre_header
      _
    $region3: #{tpu_custom_call.1} parent=1 // loop_header
      %s17 = sphi 0, %s21
      %p18 = scmp.ge.s32.totalorder %s17, 4
      %s27 = sphi 0, %s29
      %s30 = sphi 0, %s27
      %s31 = sphi 0, %s30
      %s47 = sphi 0, %s31
      %s51 = sphi 0, %s51
      %s53 = sphi 0, %s51
      %s54 = sphi 0, %s53
      %s68 = sphi 0, %s54
      %s72 = sphi 0, %s72
      %s74 = sphi 0, %s72
      %s75 = sphi 0, %s74
      %s89 = sphi 0, %s75
      %s93 = sphi 0, %s93
      %s95 = sphi 0, %s93
      %s96 = sphi 0, %s95
      %s110 = sphi 0, %s96
      %s114 = sphi 0, %s114
      %s116 = sphi 0, %s114
      %s117 = sphi 0, %s116
      %s131 = sphi 0, %s117
      %s137 = sphi 0, %s139
      %s140 = sphi 0, %s137
      %s141 = sphi 0, %s140
      %s157 = sphi 0, %s141
    $region4: #{tpu_custom_call.1} parent=1 // loop_header_branch
      %20 = sbr.rel (%p18) target = $region8
    $region5: #{tpu_custom_call.1} parent=1 // loop_body
      %s22 = ssub.s32 %s17, 1
      %s23 = ssub.s32 %s17, 2
      %s24 = sadd.s32 %s17, 1
      %s25 = ssub.s32 %s17, %s24
      %p26 = scmp.eq.s32.totalorder %s25, 0
      %s28 = sadd.s32 %s27, 1
      %s29 = scalar_select %p26, %s27, %s28
      %p32 = pneg %p26
      %p33 = scmp.eq.s32.totalorder %s17, 1
      %p34 = por %p32, %p33
      %p35 = scmp.ne.s32.totalorder %s27, %s30
      %p36 = scmp.eq.s32.totalorder %s17, 0
      %p37 = por %p35, %p36
      %p38 = scmp.ne.s32.totalorder %s27, %s30
      %p39 = scmp.eq.s32.totalorder %s22, 1
      %p40 = por %p38, %p39
      %p41 = scmp.ne.s32.totalorder %s30, %s31
      %p42 = scmp.eq.s32.totalorder %s22, 0
      %p43 = por %p41, %p42
      %p44 = scmp.ne.s32.totalorder %s30, %s31
      %p45 = scmp.eq.s32.totalorder %s23, 1
      %p46 = por %p44, %p45
      %p48 = scmp.ne.s32.totalorder %s31, %s47
      %p49 = scmp.eq.s32.totalorder %s23, 0
      %p50 = por %p48, %p49
      %s52 = sadd.s32 %s51, 1
      %p55 = scmp.eq.s32.totalorder %s17, 1
      %p56 = scmp.ne.s32.totalorder %s51, %s53
      %p57 = scmp.eq.s32.totalorder %s17, 0
      %p58 = por %p56, %p57
      %p59 = scmp.ne.s32.totalorder %s51, %s53
      %p60 = scmp.eq.s32.totalorder %s22, 1
      %p61 = por %p59, %p60
      %p62 = scmp.ne.s32.totalorder %s53, %s54
      %p63 = scmp.eq.s32.totalorder %s22, 0
      %p64 = por %p62, %p63
      %p65 = scmp.ne.s32.totalorder %s53, %s54
      %p66 = scmp.eq.s32.totalorder %s23, 1
      %p67 = por %p65, %p66
      %p69 = scmp.ne.s32.totalorder %s54, %s68
      %p70 = scmp.eq.s32.totalorder %s23, 0
      %p71 = por %p69, %p70
      %s73 = sadd.s32 %s72, 1
      %p76 = scmp.eq.s32.totalorder %s17, 1
      %p77 = scmp.ne.s32.totalorder %s72, %s74
      %p78 = scmp.eq.s32.totalorder %s17, 0
      %p79 = por %p77, %p78
      %p80 = scmp.ne.s32.totalorder %s72, %s74
      %p81 = scmp.eq.s32.totalorder %s22, 1
      %p82 = por %p80, %p81
      %p83 = scmp.ne.s32.totalorder %s74, %s75
      %p84 = scmp.eq.s32.totalorder %s22, 0
      %p85 = por %p83, %p84
      %p86 = scmp.ne.s32.totalorder %s74, %s75
      %p87 = scmp.eq.s32.totalorder %s23, 1
      %p88 = por %p86, %p87
      %p90 = scmp.ne.s32.totalorder %s75, %s89
      %p91 = scmp.eq.s32.totalorder %s23, 0
      %p92 = por %p90, %p91
      %s94 = sadd.s32 %s93, 1
      %p97 = scmp.eq.s32.totalorder %s17, 1
      %p98 = scmp.ne.s32.totalorder %s93, %s95
      %p99 = scmp.eq.s32.totalorder %s17, 0
      %p100 = por %p98, %p99
      %p101 = scmp.ne.s32.totalorder %s93, %s95
      %p102 = scmp.eq.s32.totalorder %s22, 1
      %p103 = por %p101, %p102
      %p104 = scmp.ne.s32.totalorder %s95, %s96
      %p105 = scmp.eq.s32.totalorder %s22, 0
      %p106 = por %p104, %p105
      %p107 = scmp.ne.s32.totalorder %s95, %s96
      %p108 = scmp.eq.s32.totalorder %s23, 1
      %p109 = por %p107, %p108
      %p111 = scmp.ne.s32.totalorder %s96, %s110
      %p112 = scmp.eq.s32.totalorder %s23, 0
      %p113 = por %p111, %p112
      %s115 = sadd.s32 %s114, 1
      %p118 = scmp.eq.s32.totalorder %s17, 1
      %p119 = scmp.ne.s32.totalorder %s114, %s116
      %p120 = scmp.eq.s32.totalorder %s17, 0
      %p121 = por %p119, %p120
      %p122 = scmp.ne.s32.totalorder %s114, %s116
      %p123 = scmp.eq.s32.totalorder %s22, 1
      %p124 = por %p122, %p123
      %p125 = scmp.ne.s32.totalorder %s116, %s117
      %p126 = scmp.eq.s32.totalorder %s22, 0
      %p127 = por %p125, %p126
      %p128 = scmp.ne.s32.totalorder %s116, %s117
      %p129 = scmp.eq.s32.totalorder %s23, 1
      %p130 = por %p128, %p129
      %p132 = scmp.ne.s32.totalorder %s117, %s131
      %p133 = scmp.eq.s32.totalorder %s23, 0
      %p134 = por %p132, %p133
      %s135 = ssub.s32 %s17, %s24
      %p136 = scmp.eq.s32.totalorder %s135, 0
      %s138 = sadd.s32 %s137, 1
      %s139 = scalar_select %p136, %s137, %s138
      %p142 = pneg %p136
      %p143 = scmp.eq.s32.totalorder %s17, 1
      %p144 = por %p142, %p143
      %p145 = scmp.ne.s32.totalorder %s137, %s140
      %p146 = scmp.eq.s32.totalorder %s17, 0
      %p147 = por %p145, %p146
      %p148 = scmp.ne.s32.totalorder %s137, %s140
      %p149 = scmp.eq.s32.totalorder %s22, 1
      %p150 = por %p148, %p149
      %p151 = scmp.ne.s32.totalorder %s140, %s141
      %p152 = scmp.eq.s32.totalorder %s22, 0
      %p153 = por %p151, %p152
      %p154 = scmp.ne.s32.totalorder %s140, %s141
      %p155 = scmp.eq.s32.totalorder %s23, 1
      %p156 = por %p154, %p155
      %p158 = scmp.ne.s32.totalorder %s141, %s157
      %p159 = scmp.eq.s32.totalorder %s23, 0
      %p160 = por %p158, %p159
      %p161 = scmp.le.s32.totalorder 1, %s17
      %p162 = scmp.lt.s32.totalorder %s17, 3
      %p163 = pnand %p161, %p162
      %p164 = pneg %p163
      // Predicated region
      $region9: #{tpu_custom_call.1} parent=5 // pred_check
        _
      $region10: #{tpu_custom_call.1} parent=5 // pred_check_branch
        %166 = sbr.rel (%p163) target = $region12
      $region11: #{tpu_custom_call.1} parent=5 // pred_region
        %s167 = ssub.s32 %s17, 1
        // Predicated region
        $region13: #{tpu_custom_call.1} parent=11 // pred_check
          %p168 = pneg %p64
        $region14: #{tpu_custom_call.1} parent=11 // pred_check_branch
          %170 = sbr.rel (%p168) target = $region16
        $region15: #{tpu_custom_call.1} parent=11 // pred_region
          _
        $region16: #{tpu_custom_call.1} parent=11 // pred_fallthru
          _
        // Predicated region
        $region17: #{tpu_custom_call.1} parent=11 // pred_check
          %p171 = pneg %p85
        $region18: #{tpu_custom_call.1} parent=11 // pred_check_branch
          %173 = sbr.rel (%p171) target = $region20
        $region19: #{tpu_custom_call.1} parent=11 // pred_region
          _
        $region20: #{tpu_custom_call.1} parent=11 // pred_fallthru
          _
        // Predicated region
        $region21: #{tpu_custom_call.1} parent=11 // pred_check
          %p174 = pneg %p106
        $region22: #{tpu_custom_call.1} parent=11 // pred_check_branch
          %176 = sbr.rel (%p174) target = $region24
        $region23: #{tpu_custom_call.1} parent=11 // pred_region
          _
        $region24: #{tpu_custom_call.1} parent=11 // pred_fallthru
          _
        // Predicated region
        $region25: #{tpu_custom_call.1} parent=11 // pred_check
          %p177 = pneg %p127
        $region26: #{tpu_custom_call.1} parent=11 // pred_check_branch
          %179 = sbr.rel (%p177) target = $region28
        $region27: #{tpu_custom_call.1} parent=11 // pred_region
          _
        $region28: #{tpu_custom_call.1} parent=11 // pred_fallthru
          _
      $region12: #{tpu_custom_call.1} parent=5 // pred_fallthru
        _
      %p180 = scmp.lt.s32.totalorder %s17, 2
      // Predicated region
      $region29: #{tpu_custom_call.1} parent=5 // pred_check
        %p181 = pneg %p180
      $region30: #{tpu_custom_call.1} parent=5 // pred_check_branch
        %183 = sbr.rel (%p181) target = $region32
      $region31: #{tpu_custom_call.1} parent=5 // pred_region
        // Predicated region
        $region33: #{tpu_custom_call.1} parent=31 // pred_check
          %p184 = pneg %p37
        $region34: #{tpu_custom_call.1} parent=31 // pred_check_branch
          %186 = sbr.rel (%p184) target = $region36
        $region35: #{tpu_custom_call.1} parent=31 // pred_region
          %s187 = sand.u32 %s27, 1
          %s188 = scalar_lea.sflag [#allocation4], %s187
          %s189 = sand.u32 %s27, 1
          %s190 = smul.addr %s189, 256
          %s191 = scalar_lea.vmem [#allocation3], %s190
          %193 = vsyncadd %s188, 0
          %s194 = smul.addr %s17, 32
          %s195 = smul.addr %s194, 8
          %s196 = scalar_lea.hbm %s0, %s195
          %s197 = sshll.u32 %s196, 4
          %s198 = int_to_ptr.hbm [resolvable:$true] %s197
          %s199 = sshll.u32 %s191, 4
          %s200 = int_to_ptr.vmem [resolvable:$true] %s199
          %205 = dma.hbm_to_vmem [thread:$0]  %s198, 4096, %s200, %s188, 128, 128, 8
        $region36: #{tpu_custom_call.1} parent=31 // pred_fallthru
          _
      $region32: #{tpu_custom_call.1} parent=5 // pred_fallthru
        _
      %p206 = scmp.le.s32.totalorder 1, %s17
      %p207 = scmp.lt.s32.totalorder %s17, 3
      %p208 = pnand %p206, %p207
      %p209 = pneg %p208
      // Predicated region
      $region37: #{tpu_custom_call.1} parent=5 // pred_check
        _
      $region38: #{tpu_custom_call.1} parent=5 // pred_check_branch
        %211 = sbr.rel (%p208) target = $region40
      $region39: #{tpu_custom_call.1} parent=5 // pred_region
        %s212 = ssub.s32 %s17, 1
        %s213 = sand.u32 %s30, 1
        %s214 = scalar_lea.sflag [#allocation4], %s213
        %s215 = sand.u32 %s30, 1
        %s216 = smul.addr %s215, 256
        %s217 = scalar_lea.vmem [#allocation3], %s216
        // Predicated region
        $region41: #{tpu_custom_call.1} parent=39 // pred_check
          %p218 = pneg %p43
        $region42: #{tpu_custom_call.1} parent=39 // pred_check_branch
          %220 = sbr.rel (%p218) target = $region44
        $region43: #{tpu_custom_call.1} parent=39 // pred_region
          %222 = dma.done %s214, 4096
        $region44: #{tpu_custom_call.1} parent=39 // pred_fallthru
          _
        %s223 = sand.u32 %s30, 1
        %s224 = scalar_lea.sflag [#allocation4], %s223
        %s225 = sand.u32 %s30, 1
        %s226 = smul.addr %s225, 256
        %s227 = scalar_lea.vmem [#allocation3], %s226
        %p228 = pneg %p43
        %p229 = pneg %p40
        %p230 = pneg %p64
        %p231 = pneg %p61
        %p232 = pneg %p85
        %p233 = pneg %p82
        %p234 = pneg %p106
        %p235 = pneg %p103
        %p236 = pneg %p127
        %p237 = pneg %p124
        %p238 = pneg %p153
        %p239 = pneg %p150
        %s240 = sand.u32 %s140, 1
        %s241 = scalar_lea.sflag [#allocation5], %s240
        %s242 = sand.u32 %s140, 1
        %s243 = smul.addr %s242, 256
        %s244 = scalar_lea.vmem [#allocation6], %s243
        %v246 = vld [vmem:[%s217] sm:$0xff]
        %v247 = vld [vmem:[%s217 + $0x8] sm:$0xff]
        %v248 = vld [vmem:[%s217 + $0x10] sm:$0xff]
        %v249 = vld [vmem:[%s217 + $0x18] sm:$0xff]
        %v250 = vld [vmem:[%s217 + $0x20] sm:$0xff]
        %v251 = vld [vmem:[%s217 + $0x28] sm:$0xff]
        %v252 = vld [vmem:[%s217 + $0x30] sm:$0xff]
        %v253 = vld [vmem:[%s217 + $0x38] sm:$0xff]
        %v254 = vld [vmem:[%s217 + $0x40] sm:$0xff]
        %v255 = vld [vmem:[%s217 + $0x48] sm:$0xff]
        %v256 = vld [vmem:[%s217 + $0x50] sm:$0xff]
        %v257 = vld [vmem:[%s217 + $0x58] sm:$0xff]
        %v258 = vld [vmem:[%s217 + $0x60] sm:$0xff]
        %v259 = vld [vmem:[%s217 + $0x68] sm:$0xff]
        %v260 = vld [vmem:[%s217 + $0x70] sm:$0xff]
        %v261 = vld [vmem:[%s217 + $0x78] sm:$0xff]
        %v262 = vld [vmem:[%s217 + $0x80] sm:$0xff]
        %v263 = vld [vmem:[%s217 + $0x88] sm:$0xff]
        %v264 = vld [vmem:[%s217 + $0x90] sm:$0xff]
        %v265 = vld [vmem:[%s217 + $0x98] sm:$0xff]
        %v266 = vld [vmem:[%s217 + $0xa0] sm:$0xff]
        %v267 = vld [vmem:[%s217 + $0xa8] sm:$0xff]
        %v268 = vld [vmem:[%s217 + $0xb0] sm:$0xff]
        %v269 = vld [vmem:[%s217 + $0xb8] sm:$0xff]
        %v270 = vld [vmem:[%s217 + $0xc0] sm:$0xff]
        %v271 = vld [vmem:[%s217 + $0xc8] sm:$0xff]
        %v272 = vld [vmem:[%s217 + $0xd0] sm:$0xff]
        %v273 = vld [vmem:[%s217 + $0xd8] sm:$0xff]
        %v274 = vld [vmem:[%s217 + $0xe0] sm:$0xff]
        %v275 = vld [vmem:[%s217 + $0xe8] sm:$0xff]
        %v276 = vld [vmem:[%s217 + $0xf0] sm:$0xff]
        %v277 = vld [vmem:[%s217 + $0xf8] sm:$0xff]
        %v278 = vpack.c.bf16 %v247, %v246
        %v279 = vpack.c.bf16 %v249, %v248
        %v280 = vpack.c.bf16 %v251, %v250
        %v281 = vpack.c.bf16 %v253, %v252
        %v282 = vpack.c.bf16 %v255, %v254
        %v283 = vpack.c.bf16 %v257, %v256
        %v284 = vpack.c.bf16 %v259, %v258
        %v285 = vpack.c.bf16 %v261, %v260
        %v286 = vpack.c.bf16 %v263, %v262
        %v287 = vpack.c.bf16 %v265, %v264
        %v288 = vpack.c.bf16 %v267, %v266
        %v289 = vpack.c.bf16 %v269, %v268
        %v290 = vpack.c.bf16 %v271, %v270
        %v291 = vpack.c.bf16 %v273, %v272
        %v292 = vpack.c.bf16 %v275, %v274
        %v293 = vpack.c.bf16 %v277, %v276
        %v294 = vld [vmem:[%s1] sm:$0xf]
        %v295 = vld [vmem:[%s1 + $0x4] sm:$0xf]
        %v296 = vld [vmem:[%s1 + $0x8] sm:$0xf]
        %v297 = vld [vmem:[%s1 + $0xc] sm:$0xf]
        %v298 = vld [vmem:[%s1 + $0x10] sm:$0xf]
        %v299 = vld [vmem:[%s1 + $0x14] sm:$0xf]
        %v300 = vld [vmem:[%s1 + $0x18] sm:$0xf]
        %v301 = vld [vmem:[%s1 + $0x1c] sm:$0xf]
        %v302 = vld [vmem:[%s2] sm:$0x1]
        %v304 = vperm.slane %v302, 0
        %v314 = vunpack.c.l.b16 %v294
        %v315 = vunpack.c.l.b16 %v295
        %v316 = vunpack.c.l.b16 %v296
        %v317 = vunpack.c.l.b16 %v297
        %v318 = vunpack.c.l.b16 %v298
        %v319 = vunpack.c.l.b16 %v299
        %v320 = vunpack.c.l.b16 %v300
        %v321 = vunpack.c.l.b16 %v301
        %v322 = vpack.c.b16 %v315, %v314
        %v323 = vpack.c.b16 %v317, %v316
        %v324 = vpack.c.b16 %v319, %v318
        %v325 = vpack.c.b16 %v321, %v320
        %vm330 = vcmask 523264
        %v332 = vsel %vm330, %v278, 0
        %v335 = vsel %vm330, %v279, 0
        %v338 = vsel %vm330, %v280, 0
        %v341 = vsel %vm330, %v281, 0
        %v344 = vsel %vm330, %v282, 0
        %v347 = vsel %vm330, %v283, 0
        %v350 = vsel %vm330, %v284, 0
        %v353 = vsel %vm330, %v285, 0
        %v356 = vsel %vm330, %v286, 0
        %v359 = vsel %vm330, %v287, 0
        %v362 = vsel %vm330, %v288, 0
        %v365 = vsel %vm330, %v289, 0
        %v368 = vsel %vm330, %v290, 0
        %v371 = vsel %vm330, %v291, 0
        %v374 = vsel %vm330, %v292, 0
        %v377 = vsel %vm330, %v293, 0
        %379 = vmatpush.bf16.msra.mxu0 0
        %380 = vmatpush.bf16.msra.mxu0 0
        %381 = vmatpush.bf16.msra.mxu0 0
        %382 = vmatpush.bf16.msra.mxu0 0
        %383 = vmatpush.bf16.msra.mxu0 %v325
        %384 = vmatpush.bf16.msra.mxu0 %v324
        %385 = vmatpush.bf16.msra.mxu0 %v323
        %386 = vmatpush.bf16.msra.mxu0 %v322
        %387 = vmatmul.bf16.gmra.mxu0 %v332
        %v388 = vpop.f32.mrf.mxu0
        %v389 = vadd.f32 %v304, %v388
        %v390 = vpop.f32.mrf.mxu0
        %v391 = vadd.f32 %v304, %v390
        %392 = vmatmul.bf16.gmra.mxu0 %v335
        %v393 = vpop.f32.mrf.mxu0
        %v394 = vadd.f32 %v304, %v393
        %v395 = vpop.f32.mrf.mxu0
        %v396 = vadd.f32 %v304, %v395
        %397 = vmatmul.bf16.gmra.mxu0 %v338
        %v398 = vpop.f32.mrf.mxu0
        %v399 = vadd.f32 %v304, %v398
        %v400 = vpop.f32.mrf.mxu0
        %v401 = vadd.f32 %v304, %v400
        %402 = vmatmul.bf16.gmra.mxu0 %v341
        %v403 = vpop.f32.mrf.mxu0
        %v404 = vadd.f32 %v304, %v403
        %v405 = vpop.f32.mrf.mxu0
        %v406 = vadd.f32 %v304, %v405
        %407 = vmatmul.bf16.gmra.mxu0 %v344
        %v408 = vpop.f32.mrf.mxu0
        %v409 = vadd.f32 %v304, %v408
        %v410 = vpop.f32.mrf.mxu0
        %v411 = vadd.f32 %v304, %v410
        %412 = vmatmul.bf16.gmra.mxu0 %v347
        %v413 = vpop.f32.mrf.mxu0
        %v414 = vadd.f32 %v304, %v413
        %v415 = vpop.f32.mrf.mxu0
        %v416 = vadd.f32 %v304, %v415
        %417 = vmatmul.bf16.gmra.mxu0 %v350
        %v418 = vpop.f32.mrf.mxu0
        %v419 = vadd.f32 %v304, %v418
        %v420 = vpop.f32.mrf.mxu0
        %v421 = vadd.f32 %v304, %v420
        %422 = vmatmul.bf16.gmra.mxu0 %v353
        %v423 = vpop.f32.mrf.mxu0
        %v424 = vadd.f32 %v304, %v423
        %v425 = vpop.f32.mrf.mxu0
        %v426 = vadd.f32 %v304, %v425
        %427 = vmatmul.bf16.gmra.mxu0 %v356
        %v428 = vpop.f32.mrf.mxu0
        %v429 = vadd.f32 %v304, %v428
        %v430 = vpop.f32.mrf.mxu0
        %v431 = vadd.f32 %v304, %v430
        %432 = vmatmul.bf16.gmra.mxu0 %v359
        %v433 = vpop.f32.mrf.mxu0
        %v434 = vadd.f32 %v304, %v433
        %v435 = vpop.f32.mrf.mxu0
        %v436 = vadd.f32 %v304, %v435
        %437 = vmatmul.bf16.gmra.mxu0 %v362
        %v438 = vpop.f32.mrf.mxu0
        %v439 = vadd.f32 %v304, %v438
        %v440 = vpop.f32.mrf.mxu0
        %v441 = vadd.f32 %v304, %v440
        %442 = vmatmul.bf16.gmra.mxu0 %v365
        %v443 = vpop.f32.mrf.mxu0
        %v444 = vadd.f32 %v304, %v443
        %v445 = vpop.f32.mrf.mxu0
        %v446 = vadd.f32 %v304, %v445
        %447 = vmatmul.bf16.gmra.mxu0 %v368
        %v448 = vpop.f32.mrf.mxu0
        %v449 = vadd.f32 %v304, %v448
        %v450 = vpop.f32.mrf.mxu0
        %v451 = vadd.f32 %v304, %v450
        %452 = vmatmul.bf16.gmra.mxu0 %v371
        %v453 = vpop.f32.mrf.mxu0
        %v454 = vadd.f32 %v304, %v453
        %v455 = vpop.f32.mrf.mxu0
        %v456 = vadd.f32 %v304, %v455
        %457 = vmatmul.bf16.gmra.mxu0 %v374
        %v458 = vpop.f32.mrf.mxu0
        %v459 = vadd.f32 %v304, %v458
        %v460 = vpop.f32.mrf.mxu0
        %v461 = vadd.f32 %v304, %v460
        %462 = vmatmul.bf16.gmra.mxu0 %v377
        %v463 = vpop.f32.mrf.mxu0
        %v464 = vadd.f32 %v304, %v463
        %v465 = vpop.f32.mrf.mxu0
        %v466 = vadd.f32 %v304, %v465
        %467 = vdwg.mxu0
        %v468 = vsub.f32 0.0, %v389
        %v469 = vsub.f32 0.0, %v391
        %v470 = vsub.f32 0.0, %v394
        %v471 = vsub.f32 0.0, %v396
        %v472 = vsub.f32 0.0, %v399
        %v473 = vsub.f32 0.0, %v401
        %v474 = vsub.f32 0.0, %v404
        %v475 = vsub.f32 0.0, %v406
        %v476 = vsub.f32 0.0, %v409
        %v477 = vsub.f32 0.0, %v411
        %v478 = vsub.f32 0.0, %v414
        %v479 = vsub.f32 0.0, %v416
        %v480 = vsub.f32 0.0, %v419
        %v481 = vsub.f32 0.0, %v421
        %v482 = vsub.f32 0.0, %v424
        %v483 = vsub.f32 0.0, %v426
        %v484 = vsub.f32 0.0, %v429
        %v485 = vsub.f32 0.0, %v431
        %v486 = vsub.f32 0.0, %v434
        %v487 = vsub.f32 0.0, %v436
        %v488 = vsub.f32 0.0, %v439
        %v489 = vsub.f32 0.0, %v441
        %v490 = vsub.f32 0.0, %v444
        %v491 = vsub.f32 0.0, %v446
        %v492 = vsub.f32 0.0, %v449
        %v493 = vsub.f32 0.0, %v451
        %v494 = vsub.f32 0.0, %v454
        %v495 = vsub.f32 0.0, %v456
        %v496 = vsub.f32 0.0, %v459
        %v497 = vsub.f32 0.0, %v461
        %v498 = vsub.f32 0.0, %v464
        %v499 = vsub.f32 0.0, %v466
        %v500 = vmul.f32 %v468, 1.442695
        %v501 = vpow.pop %v500
        %v502 = vmul.f32 %v469, 1.442695
        %v503 = vpow.pop %v502
        %v504 = vmul.f32 %v470, 1.442695
        %v505 = vpow.pop %v504
        %v506 = vmul.f32 %v471, 1.442695
        %v507 = vpow.pop %v506
        %v508 = vmul.f32 %v472, 1.442695
        %v509 = vpow.pop %v508
        %v510 = vmul.f32 %v473, 1.442695
        %v511 = vpow.pop %v510
        %v512 = vmul.f32 %v474, 1.442695
        %v513 = vpow.pop %v512
        %v514 = vmul.f32 %v475, 1.442695
        %v515 = vpow.pop %v514
        %v516 = vmul.f32 %v476, 1.442695
        %v517 = vpow.pop %v516
        %v518 = vmul.f32 %v477, 1.442695
        %v519 = vpow.pop %v518
        %v520 = vmul.f32 %v478, 1.442695
        %v521 = vpow.pop %v520
        %v522 = vmul.f32 %v479, 1.442695
        %v523 = vpow.pop %v522
        %v524 = vmul.f32 %v480, 1.442695
        %v525 = vpow.pop %v524
        %v526 = vmul.f32 %v481, 1.442695
        %v527 = vpow.pop %v526
        %v528 = vmul.f32 %v482, 1.442695
        %v529 = vpow.pop %v528
        %v530 = vmul.f32 %v483, 1.442695
        %v531 = vpow.pop %v530
        %v532 = vmul.f32 %v484, 1.442695
        %v533 = vpow.pop %v532
        %v534 = vmul.f32 %v485, 1.442695
        %v535 = vpow.pop %v534
        %v536 = vmul.f32 %v486, 1.442695
        %v537 = vpow.pop %v536
        %v538 = vmul.f32 %v487, 1.442695
        %v539 = vpow.pop %v538
        %v540 = vmul.f32 %v488, 1.442695
        %v541 = vpow.pop %v540
        %v542 = vmul.f32 %v489, 1.442695
        %v543 = vpow.pop %v542
        %v544 = vmul.f32 %v490, 1.442695
        %v545 = vpow.pop %v544
        %v546 = vmul.f32 %v491, 1.442695
        %v547 = vpow.pop %v546
        %v548 = vmul.f32 %v492, 1.442695
        %v549 = vpow.pop %v548
        %v550 = vmul.f32 %v493, 1.442695
        %v551 = vpow.pop %v550
        %v552 = vmul.f32 %v494, 1.442695
        %v553 = vpow.pop %v552
        %v554 = vmul.f32 %v495, 1.442695
        %v555 = vpow.pop %v554
        %v556 = vmul.f32 %v496, 1.442695
        %v557 = vpow.pop %v556
        %v558 = vmul.f32 %v497, 1.442695
        %v559 = vpow.pop %v558
        %v560 = vmul.f32 %v498, 1.442695
        %v561 = vpow.pop %v560
        %v562 = vmul.f32 %v499, 1.442695
        %v563 = vpow.pop %v562
        %v564 = vadd.f32 %v501, 1.0
        %v565 = vadd.f32 %v503, 1.0
        %v566 = vadd.f32 %v505, 1.0
        %v567 = vadd.f32 %v507, 1.0
        %v568 = vadd.f32 %v509, 1.0
        %v569 = vadd.f32 %v511, 1.0
        %v570 = vadd.f32 %v513, 1.0
        %v571 = vadd.f32 %v515, 1.0
        %v572 = vadd.f32 %v517, 1.0
        %v573 = vadd.f32 %v519, 1.0
        %v574 = vadd.f32 %v521, 1.0
        %v575 = vadd.f32 %v523, 1.0
        %v576 = vadd.f32 %v525, 1.0
        %v577 = vadd.f32 %v527, 1.0
        %v578 = vadd.f32 %v529, 1.0
        %v579 = vadd.f32 %v531, 1.0
        %v580 = vadd.f32 %v533, 1.0
        %v581 = vadd.f32 %v535, 1.0
        %v582 = vadd.f32 %v537, 1.0
        %v583 = vadd.f32 %v539, 1.0
        %v584 = vadd.f32 %v541, 1.0
        %v585 = vadd.f32 %v543, 1.0
        %v586 = vadd.f32 %v545, 1.0
        %v587 = vadd.f32 %v547, 1.0
        %v588 = vadd.f32 %v549, 1.0
        %v589 = vadd.f32 %v551, 1.0
        %v590 = vadd.f32 %v553, 1.0
        %v591 = vadd.f32 %v555, 1.0
        %v592 = vadd.f32 %v557, 1.0
        %v593 = vadd.f32 %v559, 1.0
        %v594 = vadd.f32 %v561, 1.0
        %v595 = vadd.f32 %v563, 1.0
        %v596 = vrcp.pop %v564
        %v597 = vmul.f32 %v564, %v596
        %v598 = vsub.f32 1.0, %v597
        %v599 = vmul.f32 %v596, %v598
        %v600 = vadd.f32 %v596, %v599
        %vm601 = vweird.f32 %v564
        %vm602 = vweird.f32 %v596
        %vm603 = vmor %vm601, %vm602
        %v604 = vsel %vm603, %v596, %v600
        %v605 = vand.u32 2147483647, %v564
        %vm606 = vcmp.eq.f32.partialorder %v605, 8.507059e+37
        %v607 = vand.u32 %v564, 2147483648
        %v608 = vor.u32 1.1754944e-38, %v607
        %v609 = vsel %vm606, %v608, %v604
        %v610 = vmul.f32 1.0, %v609
        %v611 = vrcp.pop %v565
        %v612 = vmul.f32 %v565, %v611
        %v613 = vsub.f32 1.0, %v612
        %v614 = vmul.f32 %v611, %v613
        %v615 = vadd.f32 %v611, %v614
        %vm616 = vweird.f32 %v565
        %vm617 = vweird.f32 %v611
        %vm618 = vmor %vm616, %vm617
        %v619 = vsel %vm618, %v611, %v615
        %v620 = vand.u32 2147483647, %v565
        %vm621 = vcmp.eq.f32.partialorder %v620, 8.507059e+37
        %v622 = vand.u32 %v565, 2147483648
        %v623 = vor.u32 1.1754944e-38, %v622
        %v624 = vsel %vm621, %v623, %v619
        %v625 = vmul.f32 1.0, %v624
        %v626 = vrcp.pop %v566
        %v627 = vmul.f32 %v566, %v626
        %v628 = vsub.f32 1.0, %v627
        %v629 = vmul.f32 %v626, %v628
        %v630 = vadd.f32 %v626, %v629
        %vm631 = vweird.f32 %v566
        %vm632 = vweird.f32 %v626
        %vm633 = vmor %vm631, %vm632
        %v634 = vsel %vm633, %v626, %v630
        %v635 = vand.u32 2147483647, %v566
        %vm636 = vcmp.eq.f32.partialorder %v635, 8.507059e+37
        %v637 = vand.u32 %v566, 2147483648
        %v638 = vor.u32 1.1754944e-38, %v637
        %v639 = vsel %vm636, %v638, %v634
        %v640 = vmul.f32 1.0, %v639
        %v641 = vrcp.pop %v567
        %v642 = vmul.f32 %v567, %v641
        %v643 = vsub.f32 1.0, %v642
        %v644 = vmul.f32 %v641, %v643
        %v645 = vadd.f32 %v641, %v644
        %vm646 = vweird.f32 %v567
        %vm647 = vweird.f32 %v641
        %vm648 = vmor %vm646, %vm647
        %v649 = vsel %vm648, %v641, %v645
        %v650 = vand.u32 2147483647, %v567
        %vm651 = vcmp.eq.f32.partialorder %v650, 8.507059e+37
        %v652 = vand.u32 %v567, 2147483648
        %v653 = vor.u32 1.1754944e-38, %v652
        %v654 = vsel %vm651, %v653, %v649
        %v655 = vmul.f32 1.0, %v654
        %v656 = vrcp.pop %v568
        %v657 = vmul.f32 %v568, %v656
        %v658 = vsub.f32 1.0, %v657
        %v659 = vmul.f32 %v656, %v658
        %v660 = vadd.f32 %v656, %v659
        %vm661 = vweird.f32 %v568
        %vm662 = vweird.f32 %v656
        %vm663 = vmor %vm661, %vm662
        %v664 = vsel %vm663, %v656, %v660
        %v665 = vand.u32 2147483647, %v568
        %vm666 = vcmp.eq.f32.partialorder %v665, 8.507059e+37
        %v667 = vand.u32 %v568, 2147483648
        %v668 = vor.u32 1.1754944e-38, %v667
        %v669 = vsel %vm666, %v668, %v664
        %v670 = vmul.f32 1.0, %v669
        %v671 = vrcp.pop %v569
        %v672 = vmul.f32 %v569, %v671
        %v673 = vsub.f32 1.0, %v672
        %v674 = vmul.f32 %v671, %v673
        %v675 = vadd.f32 %v671, %v674
        %vm676 = vweird.f32 %v569
        %vm677 = vweird.f32 %v671
        %vm678 = vmor %vm676, %vm677
        %v679 = vsel %vm678, %v671, %v675
        %v680 = vand.u32 2147483647, %v569
        %vm681 = vcmp.eq.f32.partialorder %v680, 8.507059e+37
        %v682 = vand.u32 %v569, 2147483648
        %v683 = vor.u32 1.1754944e-38, %v682
        %v684 = vsel %vm681, %v683, %v679
        %v685 = vmul.f32 1.0, %v684
        %v686 = vrcp.pop %v570
        %v687 = vmul.f32 %v570, %v686
        %v688 = vsub.f32 1.0, %v687
        %v689 = vmul.f32 %v686, %v688
        %v690 = vadd.f32 %v686, %v689
        %vm691 = vweird.f32 %v570
        %vm692 = vweird.f32 %v686
        %vm693 = vmor %vm691, %vm692
        %v694 = vsel %vm693, %v686, %v690
        %v695 = vand.u32 2147483647, %v570
        %vm696 = vcmp.eq.f32.partialorder %v695, 8.507059e+37
        %v697 = vand.u32 %v570, 2147483648
        %v698 = vor.u32 1.1754944e-38, %v697
        %v699 = vsel %vm696, %v698, %v694
        %v700 = vmul.f32 1.0, %v699
        %v701 = vrcp.pop %v571
        %v702 = vmul.f32 %v571, %v701
        %v703 = vsub.f32 1.0, %v702
        %v704 = vmul.f32 %v701, %v703
        %v705 = vadd.f32 %v701, %v704
        %vm706 = vweird.f32 %v571
        %vm707 = vweird.f32 %v701
        %vm708 = vmor %vm706, %vm707
        %v709 = vsel %vm708, %v701, %v705
        %v710 = vand.u32 2147483647, %v571
        %vm711 = vcmp.eq.f32.partialorder %v710, 8.507059e+37
        %v712 = vand.u32 %v571, 2147483648
        %v713 = vor.u32 1.1754944e-38, %v712
        %v714 = vsel %vm711, %v713, %v709
        %v715 = vmul.f32 1.0, %v714
        %v716 = vrcp.pop %v572
        %v717 = vmul.f32 %v572, %v716
        %v718 = vsub.f32 1.0, %v717
        %v719 = vmul.f32 %v716, %v718
        %v720 = vadd.f32 %v716, %v719
        %vm721 = vweird.f32 %v572
        %vm722 = vweird.f32 %v716
        %vm723 = vmor %vm721, %vm722
        %v724 = vsel %vm723, %v716, %v720
        %v725 = vand.u32 2147483647, %v572
        %vm726 = vcmp.eq.f32.partialorder %v725, 8.507059e+37
        %v727 = vand.u32 %v572, 2147483648
        %v728 = vor.u32 1.1754944e-38, %v727
        %v729 = vsel %vm726, %v728, %v724
        %v730 = vmul.f32 1.0, %v729
        %v731 = vrcp.pop %v573
        %v732 = vmul.f32 %v573, %v731
        %v733 = vsub.f32 1.0, %v732
        %v734 = vmul.f32 %v731, %v733
        %v735 = vadd.f32 %v731, %v734
        %vm736 = vweird.f32 %v573
        %vm737 = vweird.f32 %v731
        %vm738 = vmor %vm736, %vm737
        %v739 = vsel %vm738, %v731, %v735
        %v740 = vand.u32 2147483647, %v573
        %vm741 = vcmp.eq.f32.partialorder %v740, 8.507059e+37
        %v742 = vand.u32 %v573, 2147483648
        %v743 = vor.u32 1.1754944e-38, %v742
        %v744 = vsel %vm741, %v743, %v739
        %v745 = vmul.f32 1.0, %v744
        %v746 = vrcp.pop %v574
        %v747 = vmul.f32 %v574, %v746
        %v748 = vsub.f32 1.0, %v747
        %v749 = vmul.f32 %v746, %v748
        %v750 = vadd.f32 %v746, %v749
        %vm751 = vweird.f32 %v574
        %vm752 = vweird.f32 %v746
        %vm753 = vmor %vm751, %vm752
        %v754 = vsel %vm753, %v746, %v750
        %v755 = vand.u32 2147483647, %v574
        %vm756 = vcmp.eq.f32.partialorder %v755, 8.507059e+37
        %v757 = vand.u32 %v574, 2147483648
        %v758 = vor.u32 1.1754944e-38, %v757
        %v759 = vsel %vm756, %v758, %v754
        %v760 = vmul.f32 1.0, %v759
        %v761 = vrcp.pop %v575
        %v762 = vmul.f32 %v575, %v761
        %v763 = vsub.f32 1.0, %v762
        %v764 = vmul.f32 %v761, %v763
        %v765 = vadd.f32 %v761, %v764
        %vm766 = vweird.f32 %v575
        %vm767 = vweird.f32 %v761
        %vm768 = vmor %vm766, %vm767
        %v769 = vsel %vm768, %v761, %v765
        %v770 = vand.u32 2147483647, %v575
        %vm771 = vcmp.eq.f32.partialorder %v770, 8.507059e+37
        %v772 = vand.u32 %v575, 2147483648
        %v773 = vor.u32 1.1754944e-38, %v772
        %v774 = vsel %vm771, %v773, %v769
        %v775 = vmul.f32 1.0, %v774
        %v776 = vrcp.pop %v576
        %v777 = vmul.f32 %v576, %v776
        %v778 = vsub.f32 1.0, %v777
        %v779 = vmul.f32 %v776, %v778
        %v780 = vadd.f32 %v776, %v779
        %vm781 = vweird.f32 %v576
        %vm782 = vweird.f32 %v776
        %vm783 = vmor %vm781, %vm782
        %v784 = vsel %vm783, %v776, %v780
        %v785 = vand.u32 2147483647, %v576
        %vm786 = vcmp.eq.f32.partialorder %v785, 8.507059e+37
        %v787 = vand.u32 %v576, 2147483648
        %v788 = vor.u32 1.1754944e-38, %v787
        %v789 = vsel %vm786, %v788, %v784
        %v790 = vmul.f32 1.0, %v789
        %v791 = vrcp.pop %v577
        %v792 = vmul.f32 %v577, %v791
        %v793 = vsub.f32 1.0, %v792
        %v794 = vmul.f32 %v791, %v793
        %v795 = vadd.f32 %v791, %v794
        %vm796 = vweird.f32 %v577
        %vm797 = vweird.f32 %v791
        %vm798 = vmor %vm796, %vm797
        %v799 = vsel %vm798, %v791, %v795
        %v800 = vand.u32 2147483647, %v577
        %vm801 = vcmp.eq.f32.partialorder %v800, 8.507059e+37
        %v802 = vand.u32 %v577, 2147483648
        %v803 = vor.u32 1.1754944e-38, %v802
        %v804 = vsel %vm801, %v803, %v799
        %v805 = vmul.f32 1.0, %v804
        %v806 = vrcp.pop %v578
        %v807 = vmul.f32 %v578, %v806
        %v808 = vsub.f32 1.0, %v807
        %v809 = vmul.f32 %v806, %v808
        %v810 = vadd.f32 %v806, %v809
        %vm811 = vweird.f32 %v578
        %vm812 = vweird.f32 %v806
        %vm813 = vmor %vm811, %vm812
        %v814 = vsel %vm813, %v806, %v810
        %v815 = vand.u32 2147483647, %v578
        %vm816 = vcmp.eq.f32.partialorder %v815, 8.507059e+37
        %v817 = vand.u32 %v578, 2147483648
        %v818 = vor.u32 1.1754944e-38, %v817
        %v819 = vsel %vm816, %v818, %v814
        %v820 = vmul.f32 1.0, %v819
        %v821 = vrcp.pop %v579
        %v822 = vmul.f32 %v579, %v821
        %v823 = vsub.f32 1.0, %v822
        %v824 = vmul.f32 %v821, %v823
        %v825 = vadd.f32 %v821, %v824
        %vm826 = vweird.f32 %v579
        %vm827 = vweird.f32 %v821
        %vm828 = vmor %vm826, %vm827
        %v829 = vsel %vm828, %v821, %v825
        %v830 = vand.u32 2147483647, %v579
        %vm831 = vcmp.eq.f32.partialorder %v830, 8.507059e+37
        %v832 = vand.u32 %v579, 2147483648
        %v833 = vor.u32 1.1754944e-38, %v832
        %v834 = vsel %vm831, %v833, %v829
        %v835 = vmul.f32 1.0, %v834
        %v836 = vrcp.pop %v580
        %v837 = vmul.f32 %v580, %v836
        %v838 = vsub.f32 1.0, %v837
        %v839 = vmul.f32 %v836, %v838
        %v840 = vadd.f32 %v836, %v839
        %vm841 = vweird.f32 %v580
        %vm842 = vweird.f32 %v836
        %vm843 = vmor %vm841, %vm842
        %v844 = vsel %vm843, %v836, %v840
        %v845 = vand.u32 2147483647, %v580
        %vm846 = vcmp.eq.f32.partialorder %v845, 8.507059e+37
        %v847 = vand.u32 %v580, 2147483648
        %v848 = vor.u32 1.1754944e-38, %v847
        %v849 = vsel %vm846, %v848, %v844
        %v850 = vmul.f32 1.0, %v849
        %v851 = vrcp.pop %v581
        %v852 = vmul.f32 %v581, %v851
        %v853 = vsub.f32 1.0, %v852
        %v854 = vmul.f32 %v851, %v853
        %v855 = vadd.f32 %v851, %v854
        %vm856 = vweird.f32 %v581
        %vm857 = vweird.f32 %v851
        %vm858 = vmor %vm856, %vm857
        %v859 = vsel %vm858, %v851, %v855
        %v860 = vand.u32 2147483647, %v581
        %vm861 = vcmp.eq.f32.partialorder %v860, 8.507059e+37
        %v862 = vand.u32 %v581, 2147483648
        %v863 = vor.u32 1.1754944e-38, %v862
        %v864 = vsel %vm861, %v863, %v859
        %v865 = vmul.f32 1.0, %v864
        %v866 = vrcp.pop %v582
        %v867 = vmul.f32 %v582, %v866
        %v868 = vsub.f32 1.0, %v867
        %v869 = vmul.f32 %v866, %v868
        %v870 = vadd.f32 %v866, %v869
        %vm871 = vweird.f32 %v582
        %vm872 = vweird.f32 %v866
        %vm873 = vmor %vm871, %vm872
        %v874 = vsel %vm873, %v866, %v870
        %v875 = vand.u32 2147483647, %v582
        %vm876 = vcmp.eq.f32.partialorder %v875, 8.507059e+37
        %v877 = vand.u32 %v582, 2147483648
        %v878 = vor.u32 1.1754944e-38, %v877
        %v879 = vsel %vm876, %v878, %v874
        %v880 = vmul.f32 1.0, %v879
        %v881 = vrcp.pop %v583
        %v882 = vmul.f32 %v583, %v881
        %v883 = vsub.f32 1.0, %v882
        %v884 = vmul.f32 %v881, %v883
        %v885 = vadd.f32 %v881, %v884
        %vm886 = vweird.f32 %v583
        %vm887 = vweird.f32 %v881
        %vm888 = vmor %vm886, %vm887
        %v889 = vsel %vm888, %v881, %v885
        %v890 = vand.u32 2147483647, %v583
        %vm891 = vcmp.eq.f32.partialorder %v890, 8.507059e+37
        %v892 = vand.u32 %v583, 2147483648
        %v893 = vor.u32 1.1754944e-38, %v892
        %v894 = vsel %vm891, %v893, %v889
        %v895 = vmul.f32 1.0, %v894
        %v896 = vrcp.pop %v584
        %v897 = vmul.f32 %v584, %v896
        %v898 = vsub.f32 1.0, %v897
        %v899 = vmul.f32 %v896, %v898
        %v900 = vadd.f32 %v896, %v899
        %vm901 = vweird.f32 %v584
        %vm902 = vweird.f32 %v896
        %vm903 = vmor %vm901, %vm902
        %v904 = vsel %vm903, %v896, %v900
        %v905 = vand.u32 2147483647, %v584
        %vm906 = vcmp.eq.f32.partialorder %v905, 8.507059e+37
        %v907 = vand.u32 %v584, 2147483648
        %v908 = vor.u32 1.1754944e-38, %v907
        %v909 = vsel %vm906, %v908, %v904
        %v910 = vmul.f32 1.0, %v909
        %v911 = vrcp.pop %v585
        %v912 = vmul.f32 %v585, %v911
        %v913 = vsub.f32 1.0, %v912
        %v914 = vmul.f32 %v911, %v913
        %v915 = vadd.f32 %v911, %v914
        %vm916 = vweird.f32 %v585
        %vm917 = vweird.f32 %v911
        %vm918 = vmor %vm916, %vm917
        %v919 = vsel %vm918, %v911, %v915
        %v920 = vand.u32 2147483647, %v585
        %vm921 = vcmp.eq.f32.partialorder %v920, 8.507059e+37
        %v922 = vand.u32 %v585, 2147483648
        %v923 = vor.u32 1.1754944e-38, %v922
        %v924 = vsel %vm921, %v923, %v919
        %v925 = vmul.f32 1.0, %v924
        %v926 = vrcp.pop %v586
        %v927 = vmul.f32 %v586, %v926
        %v928 = vsub.f32 1.0, %v927
        %v929 = vmul.f32 %v926, %v928
        %v930 = vadd.f32 %v926, %v929
        %vm931 = vweird.f32 %v586
        %vm932 = vweird.f32 %v926
        %vm933 = vmor %vm931, %vm932
        %v934 = vsel %vm933, %v926, %v930
        %v935 = vand.u32 2147483647, %v586
        %vm936 = vcmp.eq.f32.partialorder %v935, 8.507059e+37
        %v937 = vand.u32 %v586, 2147483648
        %v938 = vor.u32 1.1754944e-38, %v937
        %v939 = vsel %vm936, %v938, %v934
        %v940 = vmul.f32 1.0, %v939
        %v941 = vrcp.pop %v587
        %v942 = vmul.f32 %v587, %v941
        %v943 = vsub.f32 1.0, %v942
        %v944 = vmul.f32 %v941, %v943
        %v945 = vadd.f32 %v941, %v944
        %vm946 = vweird.f32 %v587
        %vm947 = vweird.f32 %v941
        %vm948 = vmor %vm946, %vm947
        %v949 = vsel %vm948, %v941, %v945
        %v950 = vand.u32 2147483647, %v587
        %vm951 = vcmp.eq.f32.partialorder %v950, 8.507059e+37
        %v952 = vand.u32 %v587, 2147483648
        %v953 = vor.u32 1.1754944e-38, %v952
        %v954 = vsel %vm951, %v953, %v949
        %v955 = vmul.f32 1.0, %v954
        %v956 = vrcp.pop %v588
        %v957 = vmul.f32 %v588, %v956
        %v958 = vsub.f32 1.0, %v957
        %v959 = vmul.f32 %v956, %v958
        %v960 = vadd.f32 %v956, %v959
        %vm961 = vweird.f32 %v588
        %vm962 = vweird.f32 %v956
        %vm963 = vmor %vm961, %vm962
        %v964 = vsel %vm963, %v956, %v960
        %v965 = vand.u32 2147483647, %v588
        %vm966 = vcmp.eq.f32.partialorder %v965, 8.507059e+37
        %v967 = vand.u32 %v588, 2147483648
        %v968 = vor.u32 1.1754944e-38, %v967
        %v969 = vsel %vm966, %v968, %v964
        %v970 = vmul.f32 1.0, %v969
        %v971 = vrcp.pop %v589
        %v972 = vmul.f32 %v589, %v971
        %v973 = vsub.f32 1.0, %v972
        %v974 = vmul.f32 %v971, %v973
        %v975 = vadd.f32 %v971, %v974
        %vm976 = vweird.f32 %v589
        %vm977 = vweird.f32 %v971
        %vm978 = vmor %vm976, %vm977
        %v979 = vsel %vm978, %v971, %v975
        %v980 = vand.u32 2147483647, %v589
        %vm981 = vcmp.eq.f32.partialorder %v980, 8.507059e+37
        %v982 = vand.u32 %v589, 2147483648
        %v983 = vor.u32 1.1754944e-38, %v982
        %v984 = vsel %vm981, %v983, %v979
        %v985 = vmul.f32 1.0, %v984
        %v986 = vrcp.pop %v590
        %v987 = vmul.f32 %v590, %v986
        %v988 = vsub.f32 1.0, %v987
        %v989 = vmul.f32 %v986, %v988
        %v990 = vadd.f32 %v986, %v989
        %vm991 = vweird.f32 %v590
        %vm992 = vweird.f32 %v986
        %vm993 = vmor %vm991, %vm992
        %v994 = vsel %vm993, %v986, %v990
        %v995 = vand.u32 2147483647, %v590
        %vm996 = vcmp.eq.f32.partialorder %v995, 8.507059e+37
        %v997 = vand.u32 %v590, 2147483648
        %v998 = vor.u32 1.1754944e-38, %v997
        %v999 = vsel %vm996, %v998, %v994
        %v1000 = vmul.f32 1.0, %v999
        %v1001 = vrcp.pop %v591
        %v1002 = vmul.f32 %v591, %v1001
        %v1003 = vsub.f32 1.0, %v1002
        %v1004 = vmul.f32 %v1001, %v1003
        %v1005 = vadd.f32 %v1001, %v1004
        %vm1006 = vweird.f32 %v591
        %vm1007 = vweird.f32 %v1001
        %vm1008 = vmor %vm1006, %vm1007
        %v1009 = vsel %vm1008, %v1001, %v1005
        %v1010 = vand.u32 2147483647, %v591
        %vm1011 = vcmp.eq.f32.partialorder %v1010, 8.507059e+37
        %v1012 = vand.u32 %v591, 2147483648
        %v1013 = vor.u32 1.1754944e-38, %v1012
        %v1014 = vsel %vm1011, %v1013, %v1009
        %v1015 = vmul.f32 1.0, %v1014
        %v1016 = vrcp.pop %v592
        %v1017 = vmul.f32 %v592, %v1016
        %v1018 = vsub.f32 1.0, %v1017
        %v1019 = vmul.f32 %v1016, %v1018
        %v1020 = vadd.f32 %v1016, %v1019
        %vm1021 = vweird.f32 %v592
        %vm1022 = vweird.f32 %v1016
        %vm1023 = vmor %vm1021, %vm1022
        %v1024 = vsel %vm1023, %v1016, %v1020
        %v1025 = vand.u32 2147483647, %v592
        %vm1026 = vcmp.eq.f32.partialorder %v1025, 8.507059e+37
        %v1027 = vand.u32 %v592, 2147483648
        %v1028 = vor.u32 1.1754944e-38, %v1027
        %v1029 = vsel %vm1026, %v1028, %v1024
        %v1030 = vmul.f32 1.0, %v1029
        %v1031 = vrcp.pop %v593
        %v1032 = vmul.f32 %v593, %v1031
        %v1033 = vsub.f32 1.0, %v1032
        %v1034 = vmul.f32 %v1031, %v1033
        %v1035 = vadd.f32 %v1031, %v1034
        %vm1036 = vweird.f32 %v593
        %vm1037 = vweird.f32 %v1031
        %vm1038 = vmor %vm1036, %vm1037
        %v1039 = vsel %vm1038, %v1031, %v1035
        %v1040 = vand.u32 2147483647, %v593
        %vm1041 = vcmp.eq.f32.partialorder %v1040, 8.507059e+37
        %v1042 = vand.u32 %v593, 2147483648
        %v1043 = vor.u32 1.1754944e-38, %v1042
        %v1044 = vsel %vm1041, %v1043, %v1039
        %v1045 = vmul.f32 1.0, %v1044
        %v1046 = vrcp.pop %v594
        %v1047 = vmul.f32 %v594, %v1046
        %v1048 = vsub.f32 1.0, %v1047
        %v1049 = vmul.f32 %v1046, %v1048
        %v1050 = vadd.f32 %v1046, %v1049
        %vm1051 = vweird.f32 %v594
        %vm1052 = vweird.f32 %v1046
        %vm1053 = vmor %vm1051, %vm1052
        %v1054 = vsel %vm1053, %v1046, %v1050
        %v1055 = vand.u32 2147483647, %v594
        %vm1056 = vcmp.eq.f32.partialorder %v1055, 8.507059e+37
        %v1057 = vand.u32 %v594, 2147483648
        %v1058 = vor.u32 1.1754944e-38, %v1057
        %v1059 = vsel %vm1056, %v1058, %v1054
        %v1060 = vmul.f32 1.0, %v1059
        %v1061 = vrcp.pop %v595
        %v1062 = vmul.f32 %v595, %v1061
        %v1063 = vsub.f32 1.0, %v1062
        %v1064 = vmul.f32 %v1061, %v1063
        %v1065 = vadd.f32 %v1061, %v1064
        %vm1066 = vweird.f32 %v595
        %vm1067 = vweird.f32 %v1061
        %vm1068 = vmor %vm1066, %vm1067
        %v1069 = vsel %vm1068, %v1061, %v1065
        %v1070 = vand.u32 2147483647, %v595
        %vm1071 = vcmp.eq.f32.partialorder %v1070, 8.507059e+37
        %v1072 = vand.u32 %v595, 2147483648
        %v1073 = vor.u32 1.1754944e-38, %v1072
        %v1074 = vsel %vm1071, %v1073, %v1069
        %v1075 = vmul.f32 1.0, %v1074
        %v1076 = vmul.f32 %v389, %v610
        %v1077 = vmul.f32 %v391, %v625
        %v1078 = vmul.f32 %v394, %v640
        %v1079 = vmul.f32 %v396, %v655
        %v1080 = vmul.f32 %v399, %v670
        %v1081 = vmul.f32 %v401, %v685
        %v1082 = vmul.f32 %v404, %v700
        %v1083 = vmul.f32 %v406, %v715
        %v1084 = vmul.f32 %v409, %v730
        %v1085 = vmul.f32 %v411, %v745
        %v1086 = vmul.f32 %v414, %v760
        %v1087 = vmul.f32 %v416, %v775
        %v1088 = vmul.f32 %v419, %v790
        %v1089 = vmul.f32 %v421, %v805
        %v1090 = vmul.f32 %v424, %v820
        %v1091 = vmul.f32 %v426, %v835
        %v1092 = vmul.f32 %v429, %v850
        %v1093 = vmul.f32 %v431, %v865
        %v1094 = vmul.f32 %v434, %v880
        %v1095 = vmul.f32 %v436, %v895
        %v1096 = vmul.f32 %v439, %v910
        %v1097 = vmul.f32 %v441, %v925
        %v1098 = vmul.f32 %v444, %v940
        %v1099 = vmul.f32 %v446, %v955
        %v1100 = vmul.f32 %v449, %v970
        %v1101 = vmul.f32 %v451, %v985
        %v1102 = vmul.f32 %v454, %v1000
        %v1103 = vmul.f32 %v456, %v1015
        %v1104 = vmul.f32 %v459, %v1030
        %v1105 = vmul.f32 %v461, %v1045
        %v1106 = vmul.f32 %v464, %v1060
        %v1107 = vmul.f32 %v466, %v1075
        %vm1108 = vcmask 261120
        %1109 = vst.msk [vmem:[#allocation2] sm:$0xff] %vm1108, 0.0
        %1110 = vst.msk [vmem:[#allocation2 + $0x8] sm:$0xff] %vm1108, 0.0
        %vm1111 = vcmask 254976
        %1112 = vst.msk [vmem:[#allocation2 + $0x10] sm:$0x3] %vm1111, 0.0
        %1113 = vst.msk [vmem:[#allocation2 + $0x18] sm:$0xff] %vm1108, 0.0
        %1114 = vst.msk [vmem:[#allocation2 + $0x20] sm:$0xff] %vm1108, 0.0
        %1115 = vst.msk [vmem:[#allocation2 + $0x28] sm:$0x3] %vm1111, 0.0
        %1116 = vst.msk [vmem:[#allocation2 + $0x30] sm:$0xff] %vm1108, 0.0
        %1117 = vst.msk [vmem:[#allocation2 + $0x38] sm:$0xff] %vm1108, 0.0
        %1118 = vst.msk [vmem:[#allocation2 + $0x40] sm:$0x3] %vm1111, 0.0
        %1119 = vst.msk [vmem:[#allocation2 + $0x48] sm:$0xff] %vm1108, 0.0
        %1120 = vst.msk [vmem:[#allocation2 + $0x50] sm:$0xff] %vm1108, 0.0
        %1121 = vst.msk [vmem:[#allocation2 + $0x58] sm:$0x3] %vm1111, 0.0
        %1122 = vst.msk [vmem:[#allocation2 + $0x60] sm:$0xff] %vm1108, 0.0
        %1123 = vst.msk [vmem:[#allocation2 + $0x68] sm:$0xff] %vm1108, 0.0
        %1124 = vst.msk [vmem:[#allocation2 + $0x70] sm:$0x3] %vm1111, 0.0
        %1125 = vst.msk [vmem:[#allocation2 + $0x78] sm:$0xff] %vm1108, 0.0
        %1126 = vst.msk [vmem:[#allocation2 + $0x80] sm:$0xff] %vm1108, 0.0
        %1127 = vst.msk [vmem:[#allocation2 + $0x88] sm:$0x3] %vm1111, 0.0
        %1128 = vst.msk [vmem:[#allocation2 + $0x90] sm:$0xff] %vm1108, 0.0
        %1129 = vst.msk [vmem:[#allocation2 + $0x98] sm:$0xff] %vm1108, 0.0
        %1130 = vst.msk [vmem:[#allocation2 + $0xa0] sm:$0x3] %vm1111, 0.0
        %1131 = vst.msk [vmem:[#allocation2 + $0xa8] sm:$0xff] %vm1108, 0.0
        %1132 = vst.msk [vmem:[#allocation2 + $0xb0] sm:$0xff] %vm1108, 0.0
        %1133 = vst.msk [vmem:[#allocation2 + $0xb8] sm:$0x3] %vm1111, 0.0
        %1134 = vst.msk [vmem:[#allocation2 + $0xc0] sm:$0xff] %vm1108, 0.0
        %1135 = vst.msk [vmem:[#allocation2 + $0xc8] sm:$0xff] %vm1108, 0.0
        %1136 = vst.msk [vmem:[#allocation2 + $0xd0] sm:$0x3] %vm1111, 0.0
        %1137 = vst.msk [vmem:[#allocation2 + $0xd8] sm:$0xff] %vm1108, 0.0
        %1138 = vst.msk [vmem:[#allocation2 + $0xe0] sm:$0xff] %vm1108, 0.0
        %1139 = vst.msk [vmem:[#allocation2 + $0xe8] sm:$0x3] %vm1111, 0.0
        %1140 = vst.msk [vmem:[#allocation2 + $0xf0] sm:$0xff] %vm1108, 0.0
        %1141 = vst.msk [vmem:[#allocation2 + $0xf8] sm:$0xff] %vm1108, 0.0
        %1142 = vst.msk [vmem:[#allocation2 + $0x100] sm:$0x3] %vm1111, 0.0
        %1143 = vst.msk [vmem:[#allocation2 + $0x108] sm:$0xff] %vm1108, 0.0
        %1144 = vst.msk [vmem:[#allocation2 + $0x110] sm:$0xff] %vm1108, 0.0
        %1145 = vst.msk [vmem:[#allocation2 + $0x118] sm:$0x3] %vm1111, 0.0
        %1146 = vst.msk [vmem:[#allocation2 + $0x120] sm:$0xff] %vm1108, 0.0
        %1147 = vst.msk [vmem:[#allocation2 + $0x128] sm:$0xff] %vm1108, 0.0
        %1148 = vst.msk [vmem:[#allocation2 + $0x130] sm:$0x3] %vm1111, 0.0
        %1149 = vst.msk [vmem:[#allocation2 + $0x138] sm:$0xff] %vm1108, 0.0
        %1150 = vst.msk [vmem:[#allocation2 + $0x140] sm:$0xff] %vm1108, 0.0
        %1151 = vst.msk [vmem:[#allocation2 + $0x148] sm:$0x3] %vm1111, 0.0
        %1152 = vst.msk [vmem:[#allocation2 + $0x150] sm:$0xff] %vm1108, 0.0
        %1153 = vst.msk [vmem:[#allocation2 + $0x158] sm:$0xff] %vm1108, 0.0
        %1154 = vst.msk [vmem:[#allocation2 + $0x160] sm:$0x3] %vm1111, 0.0
        %1155 = vst.msk [vmem:[#allocation2 + $0x168] sm:$0xff] %vm1108, 0.0
        %1156 = vst.msk [vmem:[#allocation2 + $0x170] sm:$0xff] %vm1108, 0.0
        %1157 = vst.msk [vmem:[#allocation2 + $0x178] sm:$0x3] %vm1111, 0.0
        %1158 = vst.msk [vmem:[#allocation2 + $0x180] sm:$0xff] %vm1108, 0.0
        %1159 = vst.msk [vmem:[#allocation2 + $0x188] sm:$0xff] %vm1108, 0.0
        %1160 = vst.msk [vmem:[#allocation2 + $0x190] sm:$0x3] %vm1111, 0.0
        %1161 = vst.msk [vmem:[#allocation2 + $0x198] sm:$0xff] %vm1108, 0.0
        %1162 = vst.msk [vmem:[#allocation2 + $0x1a0] sm:$0xff] %vm1108, 0.0
        %1163 = vst.msk [vmem:[#allocation2 + $0x1a8] sm:$0x3] %vm1111, 0.0
        %s1164 = scalar_lea.vmem [#allocation2], 24
        %1165 = vst.msk [vmem:[%s1164 + $0x1] sm:$0xff] %vm1108, %v1076
        %1166 = vst.msk [vmem:[%s1164 + $0x9] sm:$0xff] %vm1108, %v1077
        %1167 = vst.msk [vmem:[%s1164 + $0x19] sm:$0xff] %vm1108, %v1078
        %1168 = vst.msk [vmem:[%s1164 + $0x21] sm:$0xff] %vm1108, %v1079
        %1169 = vst.msk [vmem:[%s1164 + $0x31] sm:$0xff] %vm1108, %v1080
        %1170 = vst.msk [vmem:[%s1164 + $0x39] sm:$0xff] %vm1108, %v1081
        %1171 = vst.msk [vmem:[%s1164 + $0x49] sm:$0xff] %vm1108, %v1082
        %1172 = vst.msk [vmem:[%s1164 + $0x51] sm:$0xff] %vm1108, %v1083
        %1173 = vst.msk [vmem:[%s1164 + $0x61] sm:$0xff] %vm1108, %v1084
        %1174 = vst.msk [vmem:[%s1164 + $0x69] sm:$0xff] %vm1108, %v1085
        %1175 = vst.msk [vmem:[%s1164 + $0x79] sm:$0xff] %vm1108, %v1086
        %1176 = vst.msk [vmem:[%s1164 + $0x81] sm:$0xff] %vm1108, %v1087
        %1177 = vst.msk [vmem:[%s1164 + $0x91] sm:$0xff] %vm1108, %v1088
        %1178 = vst.msk [vmem:[%s1164 + $0x99] sm:$0xff] %vm1108, %v1089
        %1179 = vst.msk [vmem:[%s1164 + $0xa9] sm:$0xff] %vm1108, %v1090
        %1180 = vst.msk [vmem:[%s1164 + $0xb1] sm:$0xff] %vm1108, %v1091
        %1181 = vst.msk [vmem:[%s1164 + $0xc1] sm:$0xff] %vm1108, %v1092
        %1182 = vst.msk [vmem:[%s1164 + $0xc9] sm:$0xff] %vm1108, %v1093
        %1183 = vst.msk [vmem:[%s1164 + $0xd9] sm:$0xff] %vm1108, %v1094
        %1184 = vst.msk [vmem:[%s1164 + $0xe1] sm:$0xff] %vm1108, %v1095
        %1185 = vst.msk [vmem:[%s1164 + $0xf1] sm:$0xff] %vm1108, %v1096
        %1186 = vst.msk [vmem:[%s1164 + $0xf9] sm:$0xff] %vm1108, %v1097
        %1187 = vst.msk [vmem:[%s1164 + $0x109] sm:$0xff] %vm1108, %v1098
        %1188 = vst.msk [vmem:[%s1164 + $0x111] sm:$0xff] %vm1108, %v1099
        %1189 = vst.msk [vmem:[%s1164 + $0x121] sm:$0xff] %vm1108, %v1100
        %1190 = vst.msk [vmem:[%s1164 + $0x129] sm:$0xff] %vm1108, %v1101
        %1191 = vst.msk [vmem:[%s1164 + $0x139] sm:$0xff] %vm1108, %v1102
        %1192 = vst.msk [vmem:[%s1164 + $0x141] sm:$0xff] %vm1108, %v1103
        %1193 = vst.msk [vmem:[%s1164 + $0x151] sm:$0xff] %vm1108, %v1104
        %1194 = vst.msk [vmem:[%s1164 + $0x159] sm:$0xff] %vm1108, %v1105
        %1195 = vst.msk [vmem:[%s1164 + $0x169] sm:$0xff] %vm1108, %v1106
        %1196 = vst.msk [vmem:[%s1164 + $0x171] sm:$0xff] %vm1108, %v1107
        %v1197 = vld [vmem:[#allocation2] sm:$0xff]
        %v1198 = vld [vmem:[#allocation2 + $0x8] sm:$0xff]
        %v1199 = vld [vmem:[#allocation2 + $0x18] sm:$0xff]
        %v1200 = vld [vmem:[#allocation2 + $0x20] sm:$0xff]
        %v1201 = vld [vmem:[#allocation2 + $0x30] sm:$0xff]
        %v1202 = vld [vmem:[#allocation2 + $0x38] sm:$0xff]
        %v1203 = vld [vmem:[#allocation2 + $0x48] sm:$0xff]
        %v1204 = vld [vmem:[#allocation2 + $0x50] sm:$0xff]
        %v1205 = vld [vmem:[#allocation2 + $0x60] sm:$0xff]
        %v1206 = vld [vmem:[#allocation2 + $0x68] sm:$0xff]
        %v1207 = vld [vmem:[#allocation2 + $0x78] sm:$0xff]
        %v1208 = vld [vmem:[#allocation2 + $0x80] sm:$0xff]
        %v1209 = vld [vmem:[#allocation2 + $0x90] sm:$0xff]
        %v1210 = vld [vmem:[#allocation2 + $0x98] sm:$0xff]
        %v1211 = vld [vmem:[#allocation2 + $0xa8] sm:$0xff]
        %v1212 = vld [vmem:[#allocation2 + $0xb0] sm:$0xff]
        %v1213 = vld [vmem:[#allocation2 + $0xc0] sm:$0xff]
        %v1214 = vld [vmem:[#allocation2 + $0xc8] sm:$0xff]
        %v1215 = vld [vmem:[#allocation2 + $0xd8] sm:$0xff]
        %v1216 = vld [vmem:[#allocation2 + $0xe0] sm:$0xff]
        %v1217 = vld [vmem:[#allocation2 + $0xf0] sm:$0xff]
        %v1218 = vld [vmem:[#allocation2 + $0xf8] sm:$0xff]
        %v1219 = vld [vmem:[#allocation2 + $0x108] sm:$0xff]
        %v1220 = vld [vmem:[#allocation2 + $0x110] sm:$0xff]
        %v1221 = vld [vmem:[#allocation2 + $0x120] sm:$0xff]
        %v1222 = vld [vmem:[#allocation2 + $0x128] sm:$0xff]
        %v1223 = vld [vmem:[#allocation2 + $0x138] sm:$0xff]
        %v1224 = vld [vmem:[#allocation2 + $0x140] sm:$0xff]
        %v1225 = vld [vmem:[#allocation2 + $0x150] sm:$0xff]
        %v1226 = vld [vmem:[#allocation2 + $0x158] sm:$0xff]
        %v1227 = vld [vmem:[#allocation2 + $0x168] sm:$0xff]
        %v1228 = vld [vmem:[#allocation2 + $0x170] sm:$0xff]
        %v1229 = vld [vmem:[%s3] sm:$0xf]
        %v1230 = vld [vmem:[%s3 + $0x4] sm:$0xf]
        %v1231 = vld [vmem:[%s3 + $0x8] sm:$0xf]
        %v1232 = vld [vmem:[%s3 + $0xc] sm:$0xf]
        %v1233 = vpack.c.bf16 %v1198, %v1197
        %v1234 = vpack.c.bf16 %v1200, %v1199
        %v1235 = vpack.c.bf16 %v1202, %v1201
        %v1236 = vpack.c.bf16 %v1204, %v1203
        %v1237 = vpack.c.bf16 %v1206, %v1205
        %v1238 = vpack.c.bf16 %v1208, %v1207
        %v1239 = vpack.c.bf16 %v1210, %v1209
        %v1240 = vpack.c.bf16 %v1212, %v1211
        %v1241 = vpack.c.bf16 %v1214, %v1213
        %v1242 = vpack.c.bf16 %v1216, %v1215
        %v1243 = vpack.c.bf16 %v1218, %v1217
        %v1244 = vpack.c.bf16 %v1220, %v1219
        %v1245 = vpack.c.bf16 %v1222, %v1221
        %v1246 = vpack.c.bf16 %v1224, %v1223
        %v1247 = vpack.c.bf16 %v1226, %v1225
        %v1248 = vpack.c.bf16 %v1228, %v1227
        %v1249 = vld [vmem:[#allocation2 + $0x1] sm:$0xff]
        %v1250 = vld [vmem:[#allocation2 + $0x9] sm:$0xff]
        %v1251 = vld [vmem:[#allocation2 + $0x19] sm:$0xff]
        %v1252 = vld [vmem:[#allocation2 + $0x21] sm:$0xff]
        %v1253 = vld [vmem:[#allocation2 + $0x31] sm:$0xff]
        %v1254 = vld [vmem:[#allocation2 + $0x39] sm:$0xff]
        %v1255 = vld [vmem:[#allocation2 + $0x49] sm:$0xff]
        %v1256 = vld [vmem:[#allocation2 + $0x51] sm:$0xff]
        %v1257 = vld [vmem:[#allocation2 + $0x61] sm:$0xff]
        %v1258 = vld [vmem:[#allocation2 + $0x69] sm:$0xff]
        %v1259 = vld [vmem:[#allocation2 + $0x79] sm:$0xff]
        %v1260 = vld [vmem:[#allocation2 + $0x81] sm:$0xff]
        %v1261 = vld [vmem:[#allocation2 + $0x91] sm:$0xff]
        %v1262 = vld [vmem:[#allocation2 + $0x99] sm:$0xff]
        %v1263 = vld [vmem:[#allocation2 + $0xa9] sm:$0xff]
        %v1264 = vld [vmem:[#allocation2 + $0xb1] sm:$0xff]
        %v1265 = vld [vmem:[#allocation2 + $0xc1] sm:$0xff]
        %v1266 = vld [vmem:[#allocation2 + $0xc9] sm:$0xff]
        %v1267 = vld [vmem:[#allocation2 + $0xd9] sm:$0xff]
        %v1268 = vld [vmem:[#allocation2 + $0xe1] sm:$0xff]
        %v1269 = vld [vmem:[#allocation2 + $0xf1] sm:$0xff]
        %v1270 = vld [vmem:[#allocation2 + $0xf9] sm:$0xff]
        %v1271 = vld [vmem:[#allocation2 + $0x109] sm:$0xff]
        %v1272 = vld [vmem:[#allocation2 + $0x111] sm:$0xff]
        %v1273 = vld [vmem:[#allocation2 + $0x121] sm:$0xff]
        %v1274 = vld [vmem:[#allocation2 + $0x129] sm:$0xff]
        %v1275 = vld [vmem:[#allocation2 + $0x139] sm:$0xff]
        %v1276 = vld [vmem:[#allocation2 + $0x141] sm:$0xff]
        %v1277 = vld [vmem:[#allocation2 + $0x151] sm:$0xff]
        %v1278 = vld [vmem:[#allocation2 + $0x159] sm:$0xff]
        %v1279 = vld [vmem:[#allocation2 + $0x169] sm:$0xff]
        %v1280 = vld [vmem:[#allocation2 + $0x171] sm:$0xff]
        %v1281 = vld [vmem:[%s3 + $0x10] sm:$0xf]
        %v1282 = vld [vmem:[%s3 + $0x14] sm:$0xf]
        %v1283 = vld [vmem:[%s3 + $0x18] sm:$0xf]
        %v1284 = vld [vmem:[%s3 + $0x1c] sm:$0xf]
        %v1285 = vpack.c.bf16 %v1250, %v1249
        %v1286 = vpack.c.bf16 %v1252, %v1251
        %v1287 = vpack.c.bf16 %v1254, %v1253
        %v1288 = vpack.c.bf16 %v1256, %v1255
        %v1289 = vpack.c.bf16 %v1258, %v1257
        %v1290 = vpack.c.bf16 %v1260, %v1259
        %v1291 = vpack.c.bf16 %v1262, %v1261
        %v1292 = vpack.c.bf16 %v1264, %v1263
        %v1293 = vpack.c.bf16 %v1266, %v1265
        %v1294 = vpack.c.bf16 %v1268, %v1267
        %v1295 = vpack.c.bf16 %v1270, %v1269
        %v1296 = vpack.c.bf16 %v1272, %v1271
        %v1297 = vpack.c.bf16 %v1274, %v1273
        %v1298 = vpack.c.bf16 %v1276, %v1275
        %v1299 = vpack.c.bf16 %v1278, %v1277
        %v1300 = vpack.c.bf16 %v1280, %v1279
        %v1305 = vunpack.c.l.b16 %v1281
        %v1306 = vunpack.c.l.b16 %v1282
        %v1307 = vunpack.c.l.b16 %v1283
        %v1308 = vunpack.c.l.b16 %v1284
        %v1309 = vpack.c.b16 %v1306, %v1305
        %v1310 = vpack.c.b16 %v1308, %v1307
        %v1314 = vsel %vm1108, %v1285, 0
        %v1317 = vsel %vm1108, %v1286, 0
        %v1320 = vsel %vm1108, %v1287, 0
        %v1323 = vsel %vm1108, %v1288, 0
        %v1326 = vsel %vm1108, %v1289, 0
        %v1329 = vsel %vm1108, %v1290, 0
        %v1332 = vsel %vm1108, %v1291, 0
        %v1335 = vsel %vm1108, %v1292, 0
        %v1338 = vsel %vm1108, %v1293, 0
        %v1341 = vsel %vm1108, %v1294, 0
        %v1344 = vsel %vm1108, %v1295, 0
        %v1347 = vsel %vm1108, %v1296, 0
        %v1350 = vsel %vm1108, %v1297, 0
        %v1353 = vsel %vm1108, %v1298, 0
        %v1356 = vsel %vm1108, %v1299, 0
        %v1359 = vsel %vm1108, %v1300, 0
        %1361 = vmatpush.bf16.msra.mxu0 0
        %1362 = vmatpush.bf16.msra.mxu0 0
        %1363 = vmatpush.bf16.msra.mxu0 0
        %1364 = vmatpush.bf16.msra.mxu0 0
        %1365 = vmatpush.bf16.msra.mxu0 0
        %1366 = vmatpush.bf16.msra.mxu0 0
        %1367 = vmatpush.bf16.msra.mxu0 %v1310
        %1368 = vmatpush.bf16.msra.mxu0 %v1309
        %1369 = vmatmul.bf16.gmra.mxu0 %v1314
        %v1370 = vpop.f32.mrf.mxu0
        %v1371 = vadd.f32 0.0, %v1370
        %v1372 = vpop.f32.mrf.mxu0
        %v1373 = vadd.f32 0.0, %v1372
        %1374 = vmatmul.bf16.gmra.mxu0 %v1317
        %v1375 = vpop.f32.mrf.mxu0
        %v1376 = vadd.f32 0.0, %v1375
        %v1377 = vpop.f32.mrf.mxu0
        %v1378 = vadd.f32 0.0, %v1377
        %1379 = vmatmul.bf16.gmra.mxu0 %v1320
        %v1380 = vpop.f32.mrf.mxu0
        %v1381 = vadd.f32 0.0, %v1380
        %v1382 = vpop.f32.mrf.mxu0
        %v1383 = vadd.f32 0.0, %v1382
        %1384 = vmatmul.bf16.gmra.mxu0 %v1323
        %v1385 = vpop.f32.mrf.mxu0
        %v1386 = vadd.f32 0.0, %v1385
        %v1387 = vpop.f32.mrf.mxu0
        %v1388 = vadd.f32 0.0, %v1387
        %1389 = vmatmul.bf16.gmra.mxu0 %v1326
        %v1390 = vpop.f32.mrf.mxu0
        %v1391 = vadd.f32 0.0, %v1390
        %v1392 = vpop.f32.mrf.mxu0
        %v1393 = vadd.f32 0.0, %v1392
        %1394 = vmatmul.bf16.gmra.mxu0 %v1329
        %v1395 = vpop.f32.mrf.mxu0
        %v1396 = vadd.f32 0.0, %v1395
        %v1397 = vpop.f32.mrf.mxu0
        %v1398 = vadd.f32 0.0, %v1397
        %1399 = vmatmul.bf16.gmra.mxu0 %v1332
        %v1400 = vpop.f32.mrf.mxu0
        %v1401 = vadd.f32 0.0, %v1400
        %v1402 = vpop.f32.mrf.mxu0
        %v1403 = vadd.f32 0.0, %v1402
        %1404 = vmatmul.bf16.gmra.mxu0 %v1335
        %v1405 = vpop.f32.mrf.mxu0
        %v1406 = vadd.f32 0.0, %v1405
        %v1407 = vpop.f32.mrf.mxu0
        %v1408 = vadd.f32 0.0, %v1407
        %1409 = vmatmul.bf16.gmra.mxu0 %v1338
        %v1410 = vpop.f32.mrf.mxu0
        %v1411 = vadd.f32 0.0, %v1410
        %v1412 = vpop.f32.mrf.mxu0
        %v1413 = vadd.f32 0.0, %v1412
        %1414 = vmatmul.bf16.gmra.mxu0 %v1341
        %v1415 = vpop.f32.mrf.mxu0
        %v1416 = vadd.f32 0.0, %v1415
        %v1417 = vpop.f32.mrf.mxu0
        %v1418 = vadd.f32 0.0, %v1417
        %1419 = vmatmul.bf16.gmra.mxu0 %v1344
        %v1420 = vpop.f32.mrf.mxu0
        %v1421 = vadd.f32 0.0, %v1420
        %v1422 = vpop.f32.mrf.mxu0
        %v1423 = vadd.f32 0.0, %v1422
        %1424 = vmatmul.bf16.gmra.mxu0 %v1347
        %v1425 = vpop.f32.mrf.mxu0
        %v1426 = vadd.f32 0.0, %v1425
        %v1427 = vpop.f32.mrf.mxu0
        %v1428 = vadd.f32 0.0, %v1427
        %1429 = vmatmul.bf16.gmra.mxu0 %v1350
        %v1430 = vpop.f32.mrf.mxu0
        %v1431 = vadd.f32 0.0, %v1430
        %v1432 = vpop.f32.mrf.mxu0
        %v1433 = vadd.f32 0.0, %v1432
        %1434 = vmatmul.bf16.gmra.mxu0 %v1353
        %v1435 = vpop.f32.mrf.mxu0
        %v1436 = vadd.f32 0.0, %v1435
        %v1437 = vpop.f32.mrf.mxu0
        %v1438 = vadd.f32 0.0, %v1437
        %1439 = vmatmul.bf16.gmra.mxu0 %v1356
        %v1440 = vpop.f32.mrf.mxu0
        %v1441 = vadd.f32 0.0, %v1440
        %v1442 = vpop.f32.mrf.mxu0
        %v1443 = vadd.f32 0.0, %v1442
        %1444 = vmatmul.bf16.gmra.mxu0 %v1359
        %v1445 = vpop.f32.mrf.mxu0
        %v1446 = vadd.f32 0.0, %v1445
        %v1447 = vpop.f32.mrf.mxu0
        %v1448 = vadd.f32 0.0, %v1447
        %1449 = vdwg.mxu0
        %v1454 = vunpack.c.l.b16 %v1229
        %v1455 = vunpack.c.l.b16 %v1230
        %v1456 = vunpack.c.l.b16 %v1231
        %v1457 = vunpack.c.l.b16 %v1232
        %v1458 = vpack.c.b16 %v1455, %v1454
        %v1459 = vpack.c.b16 %v1457, %v1456
        %v1463 = vsel %vm1108, %v1233, 0
        %v1466 = vsel %vm1108, %v1234, 0
        %v1469 = vsel %vm1108, %v1235, 0
        %v1472 = vsel %vm1108, %v1236, 0
        %v1475 = vsel %vm1108, %v1237, 0
        %v1478 = vsel %vm1108, %v1238, 0
        %v1481 = vsel %vm1108, %v1239, 0
        %v1484 = vsel %vm1108, %v1240, 0
        %v1487 = vsel %vm1108, %v1241, 0
        %v1490 = vsel %vm1108, %v1242, 0
        %v1493 = vsel %vm1108, %v1243, 0
        %v1496 = vsel %vm1108, %v1244, 0
        %v1499 = vsel %vm1108, %v1245, 0
        %v1502 = vsel %vm1108, %v1246, 0
        %v1505 = vsel %vm1108, %v1247, 0
        %v1508 = vsel %vm1108, %v1248, 0
        %1510 = vmatpush.bf16.msra.mxu0 0
        %1511 = vmatpush.bf16.msra.mxu0 0
        %1512 = vmatpush.bf16.msra.mxu0 0
        %1513 = vmatpush.bf16.msra.mxu0 0
        %1514 = vmatpush.bf16.msra.mxu0 0
        %1515 = vmatpush.bf16.msra.mxu0 0
        %1516 = vmatpush.bf16.msra.mxu0 %v1459
        %1517 = vmatpush.bf16.msra.mxu0 %v1458
        %1518 = vmatmul.bf16.gmra.mxu0 %v1463
        %v1519 = vpop.f32.mrf.mxu0
        %v1520 = vadd.f32 %v1371, %v1519
        %v1521 = vpop.f32.mrf.mxu0
        %v1522 = vadd.f32 %v1373, %v1521
        %1523 = vmatmul.bf16.gmra.mxu0 %v1466
        %v1524 = vpop.f32.mrf.mxu0
        %v1525 = vadd.f32 %v1376, %v1524
        %v1526 = vpop.f32.mrf.mxu0
        %v1527 = vadd.f32 %v1378, %v1526
        %1528 = vmatmul.bf16.gmra.mxu0 %v1469
        %v1529 = vpop.f32.mrf.mxu0
        %v1530 = vadd.f32 %v1381, %v1529
        %v1531 = vpop.f32.mrf.mxu0
        %v1532 = vadd.f32 %v1383, %v1531
        %1533 = vmatmul.bf16.gmra.mxu0 %v1472
        %v1534 = vpop.f32.mrf.mxu0
        %v1535 = vadd.f32 %v1386, %v1534
        %v1536 = vpop.f32.mrf.mxu0
        %v1537 = vadd.f32 %v1388, %v1536
        %1538 = vmatmul.bf16.gmra.mxu0 %v1475
        %v1539 = vpop.f32.mrf.mxu0
        %v1540 = vadd.f32 %v1391, %v1539
        %v1541 = vpop.f32.mrf.mxu0
        %v1542 = vadd.f32 %v1393, %v1541
        %1543 = vmatmul.bf16.gmra.mxu0 %v1478
        %v1544 = vpop.f32.mrf.mxu0
        %v1545 = vadd.f32 %v1396, %v1544
        %v1546 = vpop.f32.mrf.mxu0
        %v1547 = vadd.f32 %v1398, %v1546
        %1548 = vmatmul.bf16.gmra.mxu0 %v1481
        %v1549 = vpop.f32.mrf.mxu0
        %v1550 = vadd.f32 %v1401, %v1549
        %v1551 = vpop.f32.mrf.mxu0
        %v1552 = vadd.f32 %v1403, %v1551
        %1553 = vmatmul.bf16.gmra.mxu0 %v1484
        %v1554 = vpop.f32.mrf.mxu0
        %v1555 = vadd.f32 %v1406, %v1554
        %v1556 = vpop.f32.mrf.mxu0
        %v1557 = vadd.f32 %v1408, %v1556
        %1558 = vmatmul.bf16.gmra.mxu0 %v1487
        %v1559 = vpop.f32.mrf.mxu0
        %v1560 = vadd.f32 %v1411, %v1559
        %v1561 = vpop.f32.mrf.mxu0
        %v1562 = vadd.f32 %v1413, %v1561
        %1563 = vmatmul.bf16.gmra.mxu0 %v1490
        %v1564 = vpop.f32.mrf.mxu0
        %v1565 = vadd.f32 %v1416, %v1564
        %v1566 = vpop.f32.mrf.mxu0
        %v1567 = vadd.f32 %v1418, %v1566
        %1568 = vmatmul.bf16.gmra.mxu0 %v1493
        %v1569 = vpop.f32.mrf.mxu0
        %v1570 = vadd.f32 %v1421, %v1569
        %v1571 = vpop.f32.mrf.mxu0
        %v1572 = vadd.f32 %v1423, %v1571
        %1573 = vmatmul.bf16.gmra.mxu0 %v1496
        %v1574 = vpop.f32.mrf.mxu0
        %v1575 = vadd.f32 %v1426, %v1574
        %v1576 = vpop.f32.mrf.mxu0
        %v1577 = vadd.f32 %v1428, %v1576
        %1578 = vmatmul.bf16.gmra.mxu0 %v1499
        %v1579 = vpop.f32.mrf.mxu0
        %v1580 = vadd.f32 %v1431, %v1579
        %v1581 = vpop.f32.mrf.mxu0
        %v1582 = vadd.f32 %v1433, %v1581
        %1583 = vmatmul.bf16.gmra.mxu0 %v1502
        %v1584 = vpop.f32.mrf.mxu0
        %v1585 = vadd.f32 %v1436, %v1584
        %v1586 = vpop.f32.mrf.mxu0
        %v1587 = vadd.f32 %v1438, %v1586
        %1588 = vmatmul.bf16.gmra.mxu0 %v1505
        %v1589 = vpop.f32.mrf.mxu0
        %v1590 = vadd.f32 %v1441, %v1589
        %v1591 = vpop.f32.mrf.mxu0
        %v1592 = vadd.f32 %v1443, %v1591
        %1593 = vmatmul.bf16.gmra.mxu0 %v1508
        %v1594 = vpop.f32.mrf.mxu0
        %v1595 = vadd.f32 %v1446, %v1594
        %v1596 = vpop.f32.mrf.mxu0
        %v1597 = vadd.f32 %v1448, %v1596
        %1598 = vdwg.mxu0
        %v1599 = vld [vmem:[#allocation2 + $0x2] sm:$0xff]
        %v1600 = vld [vmem:[#allocation2 + $0xa] sm:$0xff]
        %v1601 = vld [vmem:[#allocation2 + $0x1a] sm:$0xff]
        %v1602 = vld [vmem:[#allocation2 + $0x22] sm:$0xff]
        %v1603 = vld [vmem:[#allocation2 + $0x32] sm:$0xff]
        %v1604 = vld [vmem:[#allocation2 + $0x3a] sm:$0xff]
        %v1605 = vld [vmem:[#allocation2 + $0x4a] sm:$0xff]
        %v1606 = vld [vmem:[#allocation2 + $0x52] sm:$0xff]
        %v1607 = vld [vmem:[#allocation2 + $0x62] sm:$0xff]
        %v1608 = vld [vmem:[#allocation2 + $0x6a] sm:$0xff]
        %v1609 = vld [vmem:[#allocation2 + $0x7a] sm:$0xff]
        %v1610 = vld [vmem:[#allocation2 + $0x82] sm:$0xff]
        %v1611 = vld [vmem:[#allocation2 + $0x92] sm:$0xff]
        %v1612 = vld [vmem:[#allocation2 + $0x9a] sm:$0xff]
        %v1613 = vld [vmem:[#allocation2 + $0xaa] sm:$0xff]
        %v1614 = vld [vmem:[#allocation2 + $0xb2] sm:$0xff]
        %v1615 = vld [vmem:[#allocation2 + $0xc2] sm:$0xff]
        %v1616 = vld [vmem:[#allocation2 + $0xca] sm:$0xff]
        %v1617 = vld [vmem:[#allocation2 + $0xda] sm:$0xff]
        %v1618 = vld [vmem:[#allocation2 + $0xe2] sm:$0xff]
        %v1619 = vld [vmem:[#allocation2 + $0xf2] sm:$0xff]
        %v1620 = vld [vmem:[#allocation2 + $0xfa] sm:$0xff]
        %v1621 = vld [vmem:[#allocation2 + $0x10a] sm:$0xff]
        %v1622 = vld [vmem:[#allocation2 + $0x112] sm:$0xff]
        %v1623 = vld [vmem:[#allocation2 + $0x122] sm:$0xff]
        %v1624 = vld [vmem:[#allocation2 + $0x12a] sm:$0xff]
        %v1625 = vld [vmem:[#allocation2 + $0x13a] sm:$0xff]
        %v1626 = vld [vmem:[#allocation2 + $0x142] sm:$0xff]
        %v1627 = vld [vmem:[#allocation2 + $0x152] sm:$0xff]
        %v1628 = vld [vmem:[#allocation2 + $0x15a] sm:$0xff]
        %v1629 = vld [vmem:[#allocation2 + $0x16a] sm:$0xff]
        %v1630 = vld [vmem:[#allocation2 + $0x172] sm:$0xff]
        %v1631 = vld [vmem:[%s3 + $0x20] sm:$0xf]
        %v1632 = vld [vmem:[%s3 + $0x24] sm:$0xf]
        %v1633 = vld [vmem:[%s3 + $0x28] sm:$0xf]
        %v1634 = vld [vmem:[%s3 + $0x2c] sm:$0xf]
        %v1635 = vpack.c.bf16 %v1600, %v1599
        %v1636 = vpack.c.bf16 %v1602, %v1601
        %v1637 = vpack.c.bf16 %v1604, %v1603
        %v1638 = vpack.c.bf16 %v1606, %v1605
        %v1639 = vpack.c.bf16 %v1608, %v1607
        %v1640 = vpack.c.bf16 %v1610, %v1609
        %v1641 = vpack.c.bf16 %v1612, %v1611
        %v1642 = vpack.c.bf16 %v1614, %v1613
        %v1643 = vpack.c.bf16 %v1616, %v1615
        %v1644 = vpack.c.bf16 %v1618, %v1617
        %v1645 = vpack.c.bf16 %v1620, %v1619
        %v1646 = vpack.c.bf16 %v1622, %v1621
        %v1647 = vpack.c.bf16 %v1624, %v1623
        %v1648 = vpack.c.bf16 %v1626, %v1625
        %v1649 = vpack.c.bf16 %v1628, %v1627
        %v1650 = vpack.c.bf16 %v1630, %v1629
        %v1655 = vunpack.c.l.b16 %v1631
        %v1656 = vunpack.c.l.b16 %v1632
        %v1657 = vunpack.c.l.b16 %v1633
        %v1658 = vunpack.c.l.b16 %v1634
        %v1659 = vpack.c.b16 %v1656, %v1655
        %v1660 = vpack.c.b16 %v1658, %v1657
        %v1664 = vsel %vm1108, %v1635, 0
        %v1667 = vsel %vm1108, %v1636, 0
        %v1670 = vsel %vm1108, %v1637, 0
        %v1673 = vsel %vm1108, %v1638, 0
        %v1676 = vsel %vm1108, %v1639, 0
        %v1679 = vsel %vm1108, %v1640, 0
        %v1682 = vsel %vm1108, %v1641, 0
        %v1685 = vsel %vm1108, %v1642, 0
        %v1688 = vsel %vm1108, %v1643, 0
        %v1691 = vsel %vm1108, %v1644, 0
        %v1694 = vsel %vm1108, %v1645, 0
        %v1697 = vsel %vm1108, %v1646, 0
        %v1700 = vsel %vm1108, %v1647, 0
        %v1703 = vsel %vm1108, %v1648, 0
        %v1706 = vsel %vm1108, %v1649, 0
        %v1709 = vsel %vm1108, %v1650, 0
        %1711 = vmatpush.bf16.msra.mxu0 0
        %1712 = vmatpush.bf16.msra.mxu0 0
        %1713 = vmatpush.bf16.msra.mxu0 0
        %1714 = vmatpush.bf16.msra.mxu0 0
        %1715 = vmatpush.bf16.msra.mxu0 0
        %1716 = vmatpush.bf16.msra.mxu0 0
        %1717 = vmatpush.bf16.msra.mxu0 %v1660
        %1718 = vmatpush.bf16.msra.mxu0 %v1659
        %1719 = vmatmul.bf16.gmra.mxu0 %v1664
        %v1720 = vpop.f32.mrf.mxu0
        %v1721 = vadd.f32 0.0, %v1720
        %v1722 = vpop.f32.mrf.mxu0
        %v1723 = vadd.f32 0.0, %v1722
        %1724 = vmatmul.bf16.gmra.mxu0 %v1667
        %v1725 = vpop.f32.mrf.mxu0
        %v1726 = vadd.f32 0.0, %v1725
        %v1727 = vpop.f32.mrf.mxu0
        %v1728 = vadd.f32 0.0, %v1727
        %1729 = vmatmul.bf16.gmra.mxu0 %v1670
        %v1730 = vpop.f32.mrf.mxu0
        %v1731 = vadd.f32 0.0, %v1730
        %v1732 = vpop.f32.mrf.mxu0
        %v1733 = vadd.f32 0.0, %v1732
        %1734 = vmatmul.bf16.gmra.mxu0 %v1673
        %v1735 = vpop.f32.mrf.mxu0
        %v1736 = vadd.f32 0.0, %v1735
        %v1737 = vpop.f32.mrf.mxu0
        %v1738 = vadd.f32 0.0, %v1737
        %1739 = vmatmul.bf16.gmra.mxu0 %v1676
        %v1740 = vpop.f32.mrf.mxu0
        %v1741 = vadd.f32 0.0, %v1740
        %v1742 = vpop.f32.mrf.mxu0
        %v1743 = vadd.f32 0.0, %v1742
        %1744 = vmatmul.bf16.gmra.mxu0 %v1679
        %v1745 = vpop.f32.mrf.mxu0
        %v1746 = vadd.f32 0.0, %v1745
        %v1747 = vpop.f32.mrf.mxu0
        %v1748 = vadd.f32 0.0, %v1747
        %1749 = vmatmul.bf16.gmra.mxu0 %v1682
        %v1750 = vpop.f32.mrf.mxu0
        %v1751 = vadd.f32 0.0, %v1750
        %v1752 = vpop.f32.mrf.mxu0
        %v1753 = vadd.f32 0.0, %v1752
        %1754 = vmatmul.bf16.gmra.mxu0 %v1685
        %v1755 = vpop.f32.mrf.mxu0
        %v1756 = vadd.f32 0.0, %v1755
        %v1757 = vpop.f32.mrf.mxu0
        %v1758 = vadd.f32 0.0, %v1757
        %1759 = vmatmul.bf16.gmra.mxu0 %v1688
        %v1760 = vpop.f32.mrf.mxu0
        %v1761 = vadd.f32 0.0, %v1760
        %v1762 = vpop.f32.mrf.mxu0
        %v1763 = vadd.f32 0.0, %v1762
        %1764 = vmatmul.bf16.gmra.mxu0 %v1691
        %v1765 = vpop.f32.mrf.mxu0
        %v1766 = vadd.f32 0.0, %v1765
        %v1767 = vpop.f32.mrf.mxu0
        %v1768 = vadd.f32 0.0, %v1767
        %1769 = vmatmul.bf16.gmra.mxu0 %v1694
        %v1770 = vpop.f32.mrf.mxu0
        %v1771 = vadd.f32 0.0, %v1770
        %v1772 = vpop.f32.mrf.mxu0
        %v1773 = vadd.f32 0.0, %v1772
        %1774 = vmatmul.bf16.gmra.mxu0 %v1697
        %v1775 = vpop.f32.mrf.mxu0
        %v1776 = vadd.f32 0.0, %v1775
        %v1777 = vpop.f32.mrf.mxu0
        %v1778 = vadd.f32 0.0, %v1777
        %1779 = vmatmul.bf16.gmra.mxu0 %v1700
        %v1780 = vpop.f32.mrf.mxu0
        %v1781 = vadd.f32 0.0, %v1780
        %v1782 = vpop.f32.mrf.mxu0
        %v1783 = vadd.f32 0.0, %v1782
        %1784 = vmatmul.bf16.gmra.mxu0 %v1703
        %v1785 = vpop.f32.mrf.mxu0
        %v1786 = vadd.f32 0.0, %v1785
        %v1787 = vpop.f32.mrf.mxu0
        %v1788 = vadd.f32 0.0, %v1787
        %1789 = vmatmul.bf16.gmra.mxu0 %v1706
        %v1790 = vpop.f32.mrf.mxu0
        %v1791 = vadd.f32 0.0, %v1790
        %v1792 = vpop.f32.mrf.mxu0
        %v1793 = vadd.f32 0.0, %v1792
        %1794 = vmatmul.bf16.gmra.mxu0 %v1709
        %v1795 = vpop.f32.mrf.mxu0
        %v1796 = vadd.f32 0.0, %v1795
        %v1797 = vpop.f32.mrf.mxu0
        %v1798 = vadd.f32 0.0, %v1797
        %1799 = vdwg.mxu0
        %v1800 = vadd.f32 %v1520, %v1721
        %v1801 = vadd.f32 %v1522, %v1723
        %v1802 = vadd.f32 %v1525, %v1726
        %v1803 = vadd.f32 %v1527, %v1728
        %v1804 = vadd.f32 %v1530, %v1731
        %v1805 = vadd.f32 %v1532, %v1733
        %v1806 = vadd.f32 %v1535, %v1736
        %v1807 = vadd.f32 %v1537, %v1738
        %v1808 = vadd.f32 %v1540, %v1741
        %v1809 = vadd.f32 %v1542, %v1743
        %v1810 = vadd.f32 %v1545, %v1746
        %v1811 = vadd.f32 %v1547, %v1748
        %v1812 = vadd.f32 %v1550, %v1751
        %v1813 = vadd.f32 %v1552, %v1753
        %v1814 = vadd.f32 %v1555, %v1756
        %v1815 = vadd.f32 %v1557, %v1758
        %v1816 = vadd.f32 %v1560, %v1761
        %v1817 = vadd.f32 %v1562, %v1763
        %v1818 = vadd.f32 %v1565, %v1766
        %v1819 = vadd.f32 %v1567, %v1768
        %v1820 = vadd.f32 %v1570, %v1771
        %v1821 = vadd.f32 %v1572, %v1773
        %v1822 = vadd.f32 %v1575, %v1776
        %v1823 = vadd.f32 %v1577, %v1778
        %v1824 = vadd.f32 %v1580, %v1781
        %v1825 = vadd.f32 %v1582, %v1783
        %v1826 = vadd.f32 %v1585, %v1786
        %v1827 = vadd.f32 %v1587, %v1788
        %v1828 = vadd.f32 %v1590, %v1791
        %v1829 = vadd.f32 %v1592, %v1793
        %v1830 = vadd.f32 %v1595, %v1796
        %v1831 = vadd.f32 %v1597, %v1798
        %v1832 = vld [vmem:[%s1164] sm:$0xff]
        %v1833 = vld [vmem:[%s1164 + $0x8] sm:$0xff]
        %v1834 = vld [vmem:[%s1164 + $0x18] sm:$0xff]
        %v1835 = vld [vmem:[%s1164 + $0x20] sm:$0xff]
        %v1836 = vld [vmem:[%s1164 + $0x30] sm:$0xff]
        %v1837 = vld [vmem:[%s1164 + $0x38] sm:$0xff]
        %v1838 = vld [vmem:[%s1164 + $0x48] sm:$0xff]
        %v1839 = vld [vmem:[%s1164 + $0x50] sm:$0xff]
        %v1840 = vld [vmem:[%s1164 + $0x60] sm:$0xff]
        %v1841 = vld [vmem:[%s1164 + $0x68] sm:$0xff]
        %v1842 = vld [vmem:[%s1164 + $0x78] sm:$0xff]
        %v1843 = vld [vmem:[%s1164 + $0x80] sm:$0xff]
        %v1844 = vld [vmem:[%s1164 + $0x90] sm:$0xff]
        %v1845 = vld [vmem:[%s1164 + $0x98] sm:$0xff]
        %v1846 = vld [vmem:[%s1164 + $0xa8] sm:$0xff]
        %v1847 = vld [vmem:[%s1164 + $0xb0] sm:$0xff]
        %v1848 = vld [vmem:[%s1164 + $0xc0] sm:$0xff]
        %v1849 = vld [vmem:[%s1164 + $0xc8] sm:$0xff]
        %v1850 = vld [vmem:[%s1164 + $0xd8] sm:$0xff]
        %v1851 = vld [vmem:[%s1164 + $0xe0] sm:$0xff]
        %v1852 = vld [vmem:[%s1164 + $0xf0] sm:$0xff]
        %v1853 = vld [vmem:[%s1164 + $0xf8] sm:$0xff]
        %v1854 = vld [vmem:[%s1164 + $0x108] sm:$0xff]
        %v1855 = vld [vmem:[%s1164 + $0x110] sm:$0xff]
        %v1856 = vld [vmem:[%s1164 + $0x120] sm:$0xff]
        %v1857 = vld [vmem:[%s1164 + $0x128] sm:$0xff]
        %v1858 = vld [vmem:[%s1164 + $0x138] sm:$0xff]
        %v1859 = vld [vmem:[%s1164 + $0x140] sm:$0xff]
        %v1860 = vld [vmem:[%s1164 + $0x150] sm:$0xff]
        %v1861 = vld [vmem:[%s1164 + $0x158] sm:$0xff]
        %v1862 = vld [vmem:[%s1164 + $0x168] sm:$0xff]
        %v1863 = vld [vmem:[%s1164 + $0x170] sm:$0xff]
        %v1864 = vld [vmem:[%s3 + $0x30] sm:$0xf]
        %v1865 = vld [vmem:[%s3 + $0x34] sm:$0xf]
        %v1866 = vld [vmem:[%s3 + $0x38] sm:$0xf]
        %v1867 = vld [vmem:[%s3 + $0x3c] sm:$0xf]
        %v1868 = vpack.c.bf16 %v1833, %v1832
        %v1869 = vpack.c.bf16 %v1835, %v1834
        %v1870 = vpack.c.bf16 %v1837, %v1836
        %v1871 = vpack.c.bf16 %v1839, %v1838
        %v1872 = vpack.c.bf16 %v1841, %v1840
        %v1873 = vpack.c.bf16 %v1843, %v1842
        %v1874 = vpack.c.bf16 %v1845, %v1844
        %v1875 = vpack.c.bf16 %v1847, %v1846
        %v1876 = vpack.c.bf16 %v1849, %v1848
        %v1877 = vpack.c.bf16 %v1851, %v1850
        %v1878 = vpack.c.bf16 %v1853, %v1852
        %v1879 = vpack.c.bf16 %v1855, %v1854
        %v1880 = vpack.c.bf16 %v1857, %v1856
        %v1881 = vpack.c.bf16 %v1859, %v1858
        %v1882 = vpack.c.bf16 %v1861, %v1860
        %v1883 = vpack.c.bf16 %v1863, %v1862
        %v1888 = vunpack.c.l.b16 %v1864
        %v1889 = vunpack.c.l.b16 %v1865
        %v1890 = vunpack.c.l.b16 %v1866
        %v1891 = vunpack.c.l.b16 %v1867
        %v1892 = vpack.c.b16 %v1889, %v1888
        %v1893 = vpack.c.b16 %v1891, %v1890
        %v1897 = vsel %vm1108, %v1868, 0
        %v1900 = vsel %vm1108, %v1869, 0
        %v1903 = vsel %vm1108, %v1870, 0
        %v1906 = vsel %vm1108, %v1871, 0
        %v1909 = vsel %vm1108, %v1872, 0
        %v1912 = vsel %vm1108, %v1873, 0
        %v1915 = vsel %vm1108, %v1874, 0
        %v1918 = vsel %vm1108, %v1875, 0
        %v1921 = vsel %vm1108, %v1876, 0
        %v1924 = vsel %vm1108, %v1877, 0
        %v1927 = vsel %vm1108, %v1878, 0
        %v1930 = vsel %vm1108, %v1879, 0
        %v1933 = vsel %vm1108, %v1880, 0
        %v1936 = vsel %vm1108, %v1881, 0
        %v1939 = vsel %vm1108, %v1882, 0
        %v1942 = vsel %vm1108, %v1883, 0
        %1944 = vmatpush.bf16.msra.mxu0 0
        %1945 = vmatpush.bf16.msra.mxu0 0
        %1946 = vmatpush.bf16.msra.mxu0 0
        %1947 = vmatpush.bf16.msra.mxu0 0
        %1948 = vmatpush.bf16.msra.mxu0 0
        %1949 = vmatpush.bf16.msra.mxu0 0
        %1950 = vmatpush.bf16.msra.mxu0 %v1893
        %1951 = vmatpush.bf16.msra.mxu0 %v1892
        %1952 = vmatmul.bf16.gmra.mxu0 %v1897
        %v1953 = vpop.f32.mrf.mxu0
        %v1954 = vadd.f32 0.0, %v1953
        %v1955 = vpop.f32.mrf.mxu0
        %v1956 = vadd.f32 0.0, %v1955
        %1957 = vmatmul.bf16.gmra.mxu0 %v1900
        %v1958 = vpop.f32.mrf.mxu0
        %v1959 = vadd.f32 0.0, %v1958
        %v1960 = vpop.f32.mrf.mxu0
        %v1961 = vadd.f32 0.0, %v1960
        %1962 = vmatmul.bf16.gmra.mxu0 %v1903
        %v1963 = vpop.f32.mrf.mxu0
        %v1964 = vadd.f32 0.0, %v1963
        %v1965 = vpop.f32.mrf.mxu0
        %v1966 = vadd.f32 0.0, %v1965
        %1967 = vmatmul.bf16.gmra.mxu0 %v1906
        %v1968 = vpop.f32.mrf.mxu0
        %v1969 = vadd.f32 0.0, %v1968
        %v1970 = vpop.f32.mrf.mxu0
        %v1971 = vadd.f32 0.0, %v1970
        %1972 = vmatmul.bf16.gmra.mxu0 %v1909
        %v1973 = vpop.f32.mrf.mxu0
        %v1974 = vadd.f32 0.0, %v1973
        %v1975 = vpop.f32.mrf.mxu0
        %v1976 = vadd.f32 0.0, %v1975
        %1977 = vmatmul.bf16.gmra.mxu0 %v1912
        %v1978 = vpop.f32.mrf.mxu0
        %v1979 = vadd.f32 0.0, %v1978
        %v1980 = vpop.f32.mrf.mxu0
        %v1981 = vadd.f32 0.0, %v1980
        %1982 = vmatmul.bf16.gmra.mxu0 %v1915
        %v1983 = vpop.f32.mrf.mxu0
        %v1984 = vadd.f32 0.0, %v1983
        %v1985 = vpop.f32.mrf.mxu0
        %v1986 = vadd.f32 0.0, %v1985
        %1987 = vmatmul.bf16.gmra.mxu0 %v1918
        %v1988 = vpop.f32.mrf.mxu0
        %v1989 = vadd.f32 0.0, %v1988
        %v1990 = vpop.f32.mrf.mxu0
        %v1991 = vadd.f32 0.0, %v1990
        %1992 = vmatmul.bf16.gmra.mxu0 %v1921
        %v1993 = vpop.f32.mrf.mxu0
        %v1994 = vadd.f32 0.0, %v1993
        %v1995 = vpop.f32.mrf.mxu0
        %v1996 = vadd.f32 0.0, %v1995
        %1997 = vmatmul.bf16.gmra.mxu0 %v1924
        %v1998 = vpop.f32.mrf.mxu0
        %v1999 = vadd.f32 0.0, %v1998
        %v2000 = vpop.f32.mrf.mxu0
        %v2001 = vadd.f32 0.0, %v2000
        %2002 = vmatmul.bf16.gmra.mxu0 %v1927
        %v2003 = vpop.f32.mrf.mxu0
        %v2004 = vadd.f32 0.0, %v2003
        %v2005 = vpop.f32.mrf.mxu0
        %v2006 = vadd.f32 0.0, %v2005
        %2007 = vmatmul.bf16.gmra.mxu0 %v1930
        %v2008 = vpop.f32.mrf.mxu0
        %v2009 = vadd.f32 0.0, %v2008
        %v2010 = vpop.f32.mrf.mxu0
        %v2011 = vadd.f32 0.0, %v2010
        %2012 = vmatmul.bf16.gmra.mxu0 %v1933
        %v2013 = vpop.f32.mrf.mxu0
        %v2014 = vadd.f32 0.0, %v2013
        %v2015 = vpop.f32.mrf.mxu0
        %v2016 = vadd.f32 0.0, %v2015
        %2017 = vmatmul.bf16.gmra.mxu0 %v1936
        %v2018 = vpop.f32.mrf.mxu0
        %v2019 = vadd.f32 0.0, %v2018
        %v2020 = vpop.f32.mrf.mxu0
        %v2021 = vadd.f32 0.0, %v2020
        %2022 = vmatmul.bf16.gmra.mxu0 %v1939
        %v2023 = vpop.f32.mrf.mxu0
        %v2024 = vadd.f32 0.0, %v2023
        %v2025 = vpop.f32.mrf.mxu0
        %v2026 = vadd.f32 0.0, %v2025
        %2027 = vmatmul.bf16.gmra.mxu0 %v1942
        %v2028 = vpop.f32.mrf.mxu0
        %v2029 = vadd.f32 0.0, %v2028
        %v2030 = vpop.f32.mrf.mxu0
        %v2031 = vadd.f32 0.0, %v2030
        %2032 = vdwg.mxu0
        %v2033 = vadd.f32 %v1800, %v1954
        %v2034 = vadd.f32 %v1801, %v1956
        %v2035 = vadd.f32 %v1802, %v1959
        %v2036 = vadd.f32 %v1803, %v1961
        %v2037 = vadd.f32 %v1804, %v1964
        %v2038 = vadd.f32 %v1805, %v1966
        %v2039 = vadd.f32 %v1806, %v1969
        %v2040 = vadd.f32 %v1807, %v1971
        %v2041 = vadd.f32 %v1808, %v1974
        %v2042 = vadd.f32 %v1809, %v1976
        %v2043 = vadd.f32 %v1810, %v1979
        %v2044 = vadd.f32 %v1811, %v1981
        %v2045 = vadd.f32 %v1812, %v1984
        %v2046 = vadd.f32 %v1813, %v1986
        %v2047 = vadd.f32 %v1814, %v1989
        %v2048 = vadd.f32 %v1815, %v1991
        %v2049 = vadd.f32 %v1816, %v1994
        %v2050 = vadd.f32 %v1817, %v1996
        %v2051 = vadd.f32 %v1818, %v1999
        %v2052 = vadd.f32 %v1819, %v2001
        %v2053 = vadd.f32 %v1820, %v2004
        %v2054 = vadd.f32 %v1821, %v2006
        %v2055 = vadd.f32 %v1822, %v2009
        %v2056 = vadd.f32 %v1823, %v2011
        %v2057 = vadd.f32 %v1824, %v2014
        %v2058 = vadd.f32 %v1825, %v2016
        %v2059 = vadd.f32 %v1826, %v2019
        %v2060 = vadd.f32 %v1827, %v2021
        %v2061 = vadd.f32 %v1828, %v2024
        %v2062 = vadd.f32 %v1829, %v2026
        %v2063 = vadd.f32 %v1830, %v2029
        %v2064 = vadd.f32 %v1831, %v2031
        %v2065 = vld [vmem:[%s1164 + $0x1] sm:$0xff]
        %v2066 = vld [vmem:[%s1164 + $0x9] sm:$0xff]
        %v2067 = vld [vmem:[%s1164 + $0x19] sm:$0xff]
        %v2068 = vld [vmem:[%s1164 + $0x21] sm:$0xff]
        %v2069 = vld [vmem:[%s1164 + $0x31] sm:$0xff]
        %v2070 = vld [vmem:[%s1164 + $0x39] sm:$0xff]
        %v2071 = vld [vmem:[%s1164 + $0x49] sm:$0xff]
        %v2072 = vld [vmem:[%s1164 + $0x51] sm:$0xff]
        %v2073 = vld [vmem:[%s1164 + $0x61] sm:$0xff]
        %v2074 = vld [vmem:[%s1164 + $0x69] sm:$0xff]
        %v2075 = vld [vmem:[%s1164 + $0x79] sm:$0xff]
        %v2076 = vld [vmem:[%s1164 + $0x81] sm:$0xff]
        %v2077 = vld [vmem:[%s1164 + $0x91] sm:$0xff]
        %v2078 = vld [vmem:[%s1164 + $0x99] sm:$0xff]
        %v2079 = vld [vmem:[%s1164 + $0xa9] sm:$0xff]
        %v2080 = vld [vmem:[%s1164 + $0xb1] sm:$0xff]
        %v2081 = vld [vmem:[%s1164 + $0xc1] sm:$0xff]
        %v2082 = vld [vmem:[%s1164 + $0xc9] sm:$0xff]
        %v2083 = vld [vmem:[%s1164 + $0xd9] sm:$0xff]
        %v2084 = vld [vmem:[%s1164 + $0xe1] sm:$0xff]
        %v2085 = vld [vmem:[%s1164 + $0xf1] sm:$0xff]
        %v2086 = vld [vmem:[%s1164 + $0xf9] sm:$0xff]
        %v2087 = vld [vmem:[%s1164 + $0x109] sm:$0xff]
        %v2088 = vld [vmem:[%s1164 + $0x111] sm:$0xff]
        %v2089 = vld [vmem:[%s1164 + $0x121] sm:$0xff]
        %v2090 = vld [vmem:[%s1164 + $0x129] sm:$0xff]
        %v2091 = vld [vmem:[%s1164 + $0x139] sm:$0xff]
        %v2092 = vld [vmem:[%s1164 + $0x141] sm:$0xff]
        %v2093 = vld [vmem:[%s1164 + $0x151] sm:$0xff]
        %v2094 = vld [vmem:[%s1164 + $0x159] sm:$0xff]
        %v2095 = vld [vmem:[%s1164 + $0x169] sm:$0xff]
        %v2096 = vld [vmem:[%s1164 + $0x171] sm:$0xff]
        %v2097 = vld [vmem:[%s3 + $0x40] sm:$0xf]
        %v2098 = vld [vmem:[%s3 + $0x44] sm:$0xf]
        %v2099 = vld [vmem:[%s3 + $0x48] sm:$0xf]
        %v2100 = vld [vmem:[%s3 + $0x4c] sm:$0xf]
        %v2101 = vpack.c.bf16 %v2066, %v2065
        %v2102 = vpack.c.bf16 %v2068, %v2067
        %v2103 = vpack.c.bf16 %v2070, %v2069
        %v2104 = vpack.c.bf16 %v2072, %v2071
        %v2105 = vpack.c.bf16 %v2074, %v2073
        %v2106 = vpack.c.bf16 %v2076, %v2075
        %v2107 = vpack.c.bf16 %v2078, %v2077
        %v2108 = vpack.c.bf16 %v2080, %v2079
        %v2109 = vpack.c.bf16 %v2082, %v2081
        %v2110 = vpack.c.bf16 %v2084, %v2083
        %v2111 = vpack.c.bf16 %v2086, %v2085
        %v2112 = vpack.c.bf16 %v2088, %v2087
        %v2113 = vpack.c.bf16 %v2090, %v2089
        %v2114 = vpack.c.bf16 %v2092, %v2091
        %v2115 = vpack.c.bf16 %v2094, %v2093
        %v2116 = vpack.c.bf16 %v2096, %v2095
        %v2121 = vunpack.c.l.b16 %v2097
        %v2122 = vunpack.c.l.b16 %v2098
        %v2123 = vunpack.c.l.b16 %v2099
        %v2124 = vunpack.c.l.b16 %v2100
        %v2125 = vpack.c.b16 %v2122, %v2121
        %v2126 = vpack.c.b16 %v2124, %v2123
        %v2130 = vsel %vm1108, %v2101, 0
        %v2133 = vsel %vm1108, %v2102, 0
        %v2136 = vsel %vm1108, %v2103, 0
        %v2139 = vsel %vm1108, %v2104, 0
        %v2142 = vsel %vm1108, %v2105, 0
        %v2145 = vsel %vm1108, %v2106, 0
        %v2148 = vsel %vm1108, %v2107, 0
        %v2151 = vsel %vm1108, %v2108, 0
        %v2154 = vsel %vm1108, %v2109, 0
        %v2157 = vsel %vm1108, %v2110, 0
        %v2160 = vsel %vm1108, %v2111, 0
        %v2163 = vsel %vm1108, %v2112, 0
        %v2166 = vsel %vm1108, %v2113, 0
        %v2169 = vsel %vm1108, %v2114, 0
        %v2172 = vsel %vm1108, %v2115, 0
        %v2175 = vsel %vm1108, %v2116, 0
        %2177 = vmatpush.bf16.msra.mxu0 0
        %2178 = vmatpush.bf16.msra.mxu0 0
        %2179 = vmatpush.bf16.msra.mxu0 0
        %2180 = vmatpush.bf16.msra.mxu0 0
        %2181 = vmatpush.bf16.msra.mxu0 0
        %2182 = vmatpush.bf16.msra.mxu0 0
        %2183 = vmatpush.bf16.msra.mxu0 %v2126
        %2184 = vmatpush.bf16.msra.mxu0 %v2125
        %2185 = vmatmul.bf16.gmra.mxu0 %v2130
        %v2186 = vpop.f32.mrf.mxu0
        %v2187 = vadd.f32 0.0, %v2186
        %v2188 = vpop.f32.mrf.mxu0
        %v2189 = vadd.f32 0.0, %v2188
        %2190 = vmatmul.bf16.gmra.mxu0 %v2133
        %v2191 = vpop.f32.mrf.mxu0
        %v2192 = vadd.f32 0.0, %v2191
        %v2193 = vpop.f32.mrf.mxu0
        %v2194 = vadd.f32 0.0, %v2193
        %2195 = vmatmul.bf16.gmra.mxu0 %v2136
        %v2196 = vpop.f32.mrf.mxu0
        %v2197 = vadd.f32 0.0, %v2196
        %v2198 = vpop.f32.mrf.mxu0
        %v2199 = vadd.f32 0.0, %v2198
        %2200 = vmatmul.bf16.gmra.mxu0 %v2139
        %v2201 = vpop.f32.mrf.mxu0
        %v2202 = vadd.f32 0.0, %v2201
        %v2203 = vpop.f32.mrf.mxu0
        %v2204 = vadd.f32 0.0, %v2203
        %2205 = vmatmul.bf16.gmra.mxu0 %v2142
        %v2206 = vpop.f32.mrf.mxu0
        %v2207 = vadd.f32 0.0, %v2206
        %v2208 = vpop.f32.mrf.mxu0
        %v2209 = vadd.f32 0.0, %v2208
        %2210 = vmatmul.bf16.gmra.mxu0 %v2145
        %v2211 = vpop.f32.mrf.mxu0
        %v2212 = vadd.f32 0.0, %v2211
        %v2213 = vpop.f32.mrf.mxu0
        %v2214 = vadd.f32 0.0, %v2213
        %2215 = vmatmul.bf16.gmra.mxu0 %v2148
        %v2216 = vpop.f32.mrf.mxu0
        %v2217 = vadd.f32 0.0, %v2216
        %v2218 = vpop.f32.mrf.mxu0
        %v2219 = vadd.f32 0.0, %v2218
        %2220 = vmatmul.bf16.gmra.mxu0 %v2151
        %v2221 = vpop.f32.mrf.mxu0
        %v2222 = vadd.f32 0.0, %v2221
        %v2223 = vpop.f32.mrf.mxu0
        %v2224 = vadd.f32 0.0, %v2223
        %2225 = vmatmul.bf16.gmra.mxu0 %v2154
        %v2226 = vpop.f32.mrf.mxu0
        %v2227 = vadd.f32 0.0, %v2226
        %v2228 = vpop.f32.mrf.mxu0
        %v2229 = vadd.f32 0.0, %v2228
        %2230 = vmatmul.bf16.gmra.mxu0 %v2157
        %v2231 = vpop.f32.mrf.mxu0
        %v2232 = vadd.f32 0.0, %v2231
        %v2233 = vpop.f32.mrf.mxu0
        %v2234 = vadd.f32 0.0, %v2233
        %2235 = vmatmul.bf16.gmra.mxu0 %v2160
        %v2236 = vpop.f32.mrf.mxu0
        %v2237 = vadd.f32 0.0, %v2236
        %v2238 = vpop.f32.mrf.mxu0
        %v2239 = vadd.f32 0.0, %v2238
        %2240 = vmatmul.bf16.gmra.mxu0 %v2163
        %v2241 = vpop.f32.mrf.mxu0
        %v2242 = vadd.f32 0.0, %v2241
        %v2243 = vpop.f32.mrf.mxu0
        %v2244 = vadd.f32 0.0, %v2243
        %2245 = vmatmul.bf16.gmra.mxu0 %v2166
        %v2246 = vpop.f32.mrf.mxu0
        %v2247 = vadd.f32 0.0, %v2246
        %v2248 = vpop.f32.mrf.mxu0
        %v2249 = vadd.f32 0.0, %v2248
        %2250 = vmatmul.bf16.gmra.mxu0 %v2169
        %v2251 = vpop.f32.mrf.mxu0
        %v2252 = vadd.f32 0.0, %v2251
        %v2253 = vpop.f32.mrf.mxu0
        %v2254 = vadd.f32 0.0, %v2253
        %2255 = vmatmul.bf16.gmra.mxu0 %v2172
        %v2256 = vpop.f32.mrf.mxu0
        %v2257 = vadd.f32 0.0, %v2256
        %v2258 = vpop.f32.mrf.mxu0
        %v2259 = vadd.f32 0.0, %v2258
        %2260 = vmatmul.bf16.gmra.mxu0 %v2175
        %v2261 = vpop.f32.mrf.mxu0
        %v2262 = vadd.f32 0.0, %v2261
        %v2263 = vpop.f32.mrf.mxu0
        %v2264 = vadd.f32 0.0, %v2263
        %2265 = vdwg.mxu0
        %v2266 = vadd.f32 %v2033, %v2187
        %v2267 = vadd.f32 %v2034, %v2189
        %v2268 = vadd.f32 %v2035, %v2192
        %v2269 = vadd.f32 %v2036, %v2194
        %v2270 = vadd.f32 %v2037, %v2197
        %v2271 = vadd.f32 %v2038, %v2199
        %v2272 = vadd.f32 %v2039, %v2202
        %v2273 = vadd.f32 %v2040, %v2204
        %v2274 = vadd.f32 %v2041, %v2207
        %v2275 = vadd.f32 %v2042, %v2209
        %v2276 = vadd.f32 %v2043, %v2212
        %v2277 = vadd.f32 %v2044, %v2214
        %v2278 = vadd.f32 %v2045, %v2217
        %v2279 = vadd.f32 %v2046, %v2219
        %v2280 = vadd.f32 %v2047, %v2222
        %v2281 = vadd.f32 %v2048, %v2224
        %v2282 = vadd.f32 %v2049, %v2227
        %v2283 = vadd.f32 %v2050, %v2229
        %v2284 = vadd.f32 %v2051, %v2232
        %v2285 = vadd.f32 %v2052, %v2234
        %v2286 = vadd.f32 %v2053, %v2237
        %v2287 = vadd.f32 %v2054, %v2239
        %v2288 = vadd.f32 %v2055, %v2242
        %v2289 = vadd.f32 %v2056, %v2244
        %v2290 = vadd.f32 %v2057, %v2247
        %v2291 = vadd.f32 %v2058, %v2249
        %v2292 = vadd.f32 %v2059, %v2252
        %v2293 = vadd.f32 %v2060, %v2254
        %v2294 = vadd.f32 %v2061, %v2257
        %v2295 = vadd.f32 %v2062, %v2259
        %v2296 = vadd.f32 %v2063, %v2262
        %v2297 = vadd.f32 %v2064, %v2264
        %v2298 = vld [vmem:[%s1164 + $0x2] sm:$0xff]
        %v2299 = vld [vmem:[%s1164 + $0xa] sm:$0xff]
        %v2300 = vld [vmem:[%s1164 + $0x1a] sm:$0xff]
        %v2301 = vld [vmem:[%s1164 + $0x22] sm:$0xff]
        %v2302 = vld [vmem:[%s1164 + $0x32] sm:$0xff]
        %v2303 = vld [vmem:[%s1164 + $0x3a] sm:$0xff]
        %v2304 = vld [vmem:[%s1164 + $0x4a] sm:$0xff]
        %v2305 = vld [vmem:[%s1164 + $0x52] sm:$0xff]
        %v2306 = vld [vmem:[%s1164 + $0x62] sm:$0xff]
        %v2307 = vld [vmem:[%s1164 + $0x6a] sm:$0xff]
        %v2308 = vld [vmem:[%s1164 + $0x7a] sm:$0xff]
        %v2309 = vld [vmem:[%s1164 + $0x82] sm:$0xff]
        %v2310 = vld [vmem:[%s1164 + $0x92] sm:$0xff]
        %v2311 = vld [vmem:[%s1164 + $0x9a] sm:$0xff]
        %v2312 = vld [vmem:[%s1164 + $0xaa] sm:$0xff]
        %v2313 = vld [vmem:[%s1164 + $0xb2] sm:$0xff]
        %v2314 = vld [vmem:[%s1164 + $0xc2] sm:$0xff]
        %v2315 = vld [vmem:[%s1164 + $0xca] sm:$0xff]
        %v2316 = vld [vmem:[%s1164 + $0xda] sm:$0xff]
        %v2317 = vld [vmem:[%s1164 + $0xe2] sm:$0xff]
        %v2318 = vld [vmem:[%s1164 + $0xf2] sm:$0xff]
        %v2319 = vld [vmem:[%s1164 + $0xfa] sm:$0xff]
        %v2320 = vld [vmem:[%s1164 + $0x10a] sm:$0xff]
        %v2321 = vld [vmem:[%s1164 + $0x112] sm:$0xff]
        %v2322 = vld [vmem:[%s1164 + $0x122] sm:$0xff]
        %v2323 = vld [vmem:[%s1164 + $0x12a] sm:$0xff]
        %v2324 = vld [vmem:[%s1164 + $0x13a] sm:$0xff]
        %v2325 = vld [vmem:[%s1164 + $0x142] sm:$0xff]
        %v2326 = vld [vmem:[%s1164 + $0x152] sm:$0xff]
        %v2327 = vld [vmem:[%s1164 + $0x15a] sm:$0xff]
        %v2328 = vld [vmem:[%s1164 + $0x16a] sm:$0xff]
        %v2329 = vld [vmem:[%s1164 + $0x172] sm:$0xff]
        %v2330 = vld [vmem:[%s3 + $0x50] sm:$0xf]
        %v2331 = vld [vmem:[%s3 + $0x54] sm:$0xf]
        %v2332 = vld [vmem:[%s3 + $0x58] sm:$0xf]
        %v2333 = vld [vmem:[%s3 + $0x5c] sm:$0xf]
        %v2334 = vpack.c.bf16 %v2299, %v2298
        %v2335 = vpack.c.bf16 %v2301, %v2300
        %v2336 = vpack.c.bf16 %v2303, %v2302
        %v2337 = vpack.c.bf16 %v2305, %v2304
        %v2338 = vpack.c.bf16 %v2307, %v2306
        %v2339 = vpack.c.bf16 %v2309, %v2308
        %v2340 = vpack.c.bf16 %v2311, %v2310
        %v2341 = vpack.c.bf16 %v2313, %v2312
        %v2342 = vpack.c.bf16 %v2315, %v2314
        %v2343 = vpack.c.bf16 %v2317, %v2316
        %v2344 = vpack.c.bf16 %v2319, %v2318
        %v2345 = vpack.c.bf16 %v2321, %v2320
        %v2346 = vpack.c.bf16 %v2323, %v2322
        %v2347 = vpack.c.bf16 %v2325, %v2324
        %v2348 = vpack.c.bf16 %v2327, %v2326
        %v2349 = vpack.c.bf16 %v2329, %v2328
        %v2354 = vunpack.c.l.b16 %v2330
        %v2355 = vunpack.c.l.b16 %v2331
        %v2356 = vunpack.c.l.b16 %v2332
        %v2357 = vunpack.c.l.b16 %v2333
        %v2358 = vpack.c.b16 %v2355, %v2354
        %v2359 = vpack.c.b16 %v2357, %v2356
        %v2363 = vsel %vm1108, %v2334, 0
        %v2366 = vsel %vm1108, %v2335, 0
        %v2369 = vsel %vm1108, %v2336, 0
        %v2372 = vsel %vm1108, %v2337, 0
        %v2375 = vsel %vm1108, %v2338, 0
        %v2378 = vsel %vm1108, %v2339, 0
        %v2381 = vsel %vm1108, %v2340, 0
        %v2384 = vsel %vm1108, %v2341, 0
        %v2387 = vsel %vm1108, %v2342, 0
        %v2390 = vsel %vm1108, %v2343, 0
        %v2393 = vsel %vm1108, %v2344, 0
        %v2396 = vsel %vm1108, %v2345, 0
        %v2399 = vsel %vm1108, %v2346, 0
        %v2402 = vsel %vm1108, %v2347, 0
        %v2405 = vsel %vm1108, %v2348, 0
        %v2408 = vsel %vm1108, %v2349, 0
        %2410 = vmatpush.bf16.msra.mxu0 0
        %2411 = vmatpush.bf16.msra.mxu0 0
        %2412 = vmatpush.bf16.msra.mxu0 0
        %2413 = vmatpush.bf16.msra.mxu0 0
        %2414 = vmatpush.bf16.msra.mxu0 0
        %2415 = vmatpush.bf16.msra.mxu0 0
        %2416 = vmatpush.bf16.msra.mxu0 %v2359
        %2417 = vmatpush.bf16.msra.mxu0 %v2358
        %2418 = vmatmul.bf16.gmra.mxu0 %v2363
        %v2419 = vpop.f32.mrf.mxu0
        %v2420 = vadd.f32 0.0, %v2419
        %v2421 = vpop.f32.mrf.mxu0
        %v2422 = vadd.f32 0.0, %v2421
        %2423 = vmatmul.bf16.gmra.mxu0 %v2366
        %v2424 = vpop.f32.mrf.mxu0
        %v2425 = vadd.f32 0.0, %v2424
        %v2426 = vpop.f32.mrf.mxu0
        %v2427 = vadd.f32 0.0, %v2426
        %2428 = vmatmul.bf16.gmra.mxu0 %v2369
        %v2429 = vpop.f32.mrf.mxu0
        %v2430 = vadd.f32 0.0, %v2429
        %v2431 = vpop.f32.mrf.mxu0
        %v2432 = vadd.f32 0.0, %v2431
        %2433 = vmatmul.bf16.gmra.mxu0 %v2372
        %v2434 = vpop.f32.mrf.mxu0
        %v2435 = vadd.f32 0.0, %v2434
        %v2436 = vpop.f32.mrf.mxu0
        %v2437 = vadd.f32 0.0, %v2436
        %2438 = vmatmul.bf16.gmra.mxu0 %v2375
        %v2439 = vpop.f32.mrf.mxu0
        %v2440 = vadd.f32 0.0, %v2439
        %v2441 = vpop.f32.mrf.mxu0
        %v2442 = vadd.f32 0.0, %v2441
        %2443 = vmatmul.bf16.gmra.mxu0 %v2378
        %v2444 = vpop.f32.mrf.mxu0
        %v2445 = vadd.f32 0.0, %v2444
        %v2446 = vpop.f32.mrf.mxu0
        %v2447 = vadd.f32 0.0, %v2446
        %2448 = vmatmul.bf16.gmra.mxu0 %v2381
        %v2449 = vpop.f32.mrf.mxu0
        %v2450 = vadd.f32 0.0, %v2449
        %v2451 = vpop.f32.mrf.mxu0
        %v2452 = vadd.f32 0.0, %v2451
        %2453 = vmatmul.bf16.gmra.mxu0 %v2384
        %v2454 = vpop.f32.mrf.mxu0
        %v2455 = vadd.f32 0.0, %v2454
        %v2456 = vpop.f32.mrf.mxu0
        %v2457 = vadd.f32 0.0, %v2456
        %2458 = vmatmul.bf16.gmra.mxu0 %v2387
        %v2459 = vpop.f32.mrf.mxu0
        %v2460 = vadd.f32 0.0, %v2459
        %v2461 = vpop.f32.mrf.mxu0
        %v2462 = vadd.f32 0.0, %v2461
        %2463 = vmatmul.bf16.gmra.mxu0 %v2390
        %v2464 = vpop.f32.mrf.mxu0
        %v2465 = vadd.f32 0.0, %v2464
        %v2466 = vpop.f32.mrf.mxu0
        %v2467 = vadd.f32 0.0, %v2466
        %2468 = vmatmul.bf16.gmra.mxu0 %v2393
        %v2469 = vpop.f32.mrf.mxu0
        %v2470 = vadd.f32 0.0, %v2469
        %v2471 = vpop.f32.mrf.mxu0
        %v2472 = vadd.f32 0.0, %v2471
        %2473 = vmatmul.bf16.gmra.mxu0 %v2396
        %v2474 = vpop.f32.mrf.mxu0
        %v2475 = vadd.f32 0.0, %v2474
        %v2476 = vpop.f32.mrf.mxu0
        %v2477 = vadd.f32 0.0, %v2476
        %2478 = vmatmul.bf16.gmra.mxu0 %v2399
        %v2479 = vpop.f32.mrf.mxu0
        %v2480 = vadd.f32 0.0, %v2479
        %v2481 = vpop.f32.mrf.mxu0
        %v2482 = vadd.f32 0.0, %v2481
        %2483 = vmatmul.bf16.gmra.mxu0 %v2402
        %v2484 = vpop.f32.mrf.mxu0
        %v2485 = vadd.f32 0.0, %v2484
        %v2486 = vpop.f32.mrf.mxu0
        %v2487 = vadd.f32 0.0, %v2486
        %2488 = vmatmul.bf16.gmra.mxu0 %v2405
        %v2489 = vpop.f32.mrf.mxu0
        %v2490 = vadd.f32 0.0, %v2489
        %v2491 = vpop.f32.mrf.mxu0
        %v2492 = vadd.f32 0.0, %v2491
        %2493 = vmatmul.bf16.gmra.mxu0 %v2408
        %v2494 = vpop.f32.mrf.mxu0
        %v2495 = vadd.f32 0.0, %v2494
        %v2496 = vpop.f32.mrf.mxu0
        %v2497 = vadd.f32 0.0, %v2496
        %2498 = vdwg.mxu0
        %v2499 = vadd.f32 %v2266, %v2420
        %v2500 = vadd.f32 %v2267, %v2422
        %v2501 = vadd.f32 %v2268, %v2425
        %v2502 = vadd.f32 %v2269, %v2427
        %v2503 = vadd.f32 %v2270, %v2430
        %v2504 = vadd.f32 %v2271, %v2432
        %v2505 = vadd.f32 %v2272, %v2435
        %v2506 = vadd.f32 %v2273, %v2437
        %v2507 = vadd.f32 %v2274, %v2440
        %v2508 = vadd.f32 %v2275, %v2442
        %v2509 = vadd.f32 %v2276, %v2445
        %v2510 = vadd.f32 %v2277, %v2447
        %v2511 = vadd.f32 %v2278, %v2450
        %v2512 = vadd.f32 %v2279, %v2452
        %v2513 = vadd.f32 %v2280, %v2455
        %v2514 = vadd.f32 %v2281, %v2457
        %v2515 = vadd.f32 %v2282, %v2460
        %v2516 = vadd.f32 %v2283, %v2462
        %v2517 = vadd.f32 %v2284, %v2465
        %v2518 = vadd.f32 %v2285, %v2467
        %v2519 = vadd.f32 %v2286, %v2470
        %v2520 = vadd.f32 %v2287, %v2472
        %v2521 = vadd.f32 %v2288, %v2475
        %v2522 = vadd.f32 %v2289, %v2477
        %v2523 = vadd.f32 %v2290, %v2480
        %v2524 = vadd.f32 %v2291, %v2482
        %v2525 = vadd.f32 %v2292, %v2485
        %v2526 = vadd.f32 %v2293, %v2487
        %v2527 = vadd.f32 %v2294, %v2490
        %v2528 = vadd.f32 %v2295, %v2492
        %v2529 = vadd.f32 %v2296, %v2495
        %v2530 = vadd.f32 %v2297, %v2497
        %s2531 = scalar_lea.vmem [#allocation2], 48
        %v2532 = vld [vmem:[%s2531] sm:$0xff]
        %v2533 = vld [vmem:[%s2531 + $0x8] sm:$0xff]
        %v2534 = vld [vmem:[%s2531 + $0x18] sm:$0xff]
        %v2535 = vld [vmem:[%s2531 + $0x20] sm:$0xff]
        %v2536 = vld [vmem:[%s2531 + $0x30] sm:$0xff]
        %v2537 = vld [vmem:[%s2531 + $0x38] sm:$0xff]
        %v2538 = vld [vmem:[%s2531 + $0x48] sm:$0xff]
        %v2539 = vld [vmem:[%s2531 + $0x50] sm:$0xff]
        %v2540 = vld [vmem:[%s2531 + $0x60] sm:$0xff]
        %v2541 = vld [vmem:[%s2531 + $0x68] sm:$0xff]
        %v2542 = vld [vmem:[%s2531 + $0x78] sm:$0xff]
        %v2543 = vld [vmem:[%s2531 + $0x80] sm:$0xff]
        %v2544 = vld [vmem:[%s2531 + $0x90] sm:$0xff]
        %v2545 = vld [vmem:[%s2531 + $0x98] sm:$0xff]
        %v2546 = vld [vmem:[%s2531 + $0xa8] sm:$0xff]
        %v2547 = vld [vmem:[%s2531 + $0xb0] sm:$0xff]
        %v2548 = vld [vmem:[%s2531 + $0xc0] sm:$0xff]
        %v2549 = vld [vmem:[%s2531 + $0xc8] sm:$0xff]
        %v2550 = vld [vmem:[%s2531 + $0xd8] sm:$0xff]
        %v2551 = vld [vmem:[%s2531 + $0xe0] sm:$0xff]
        %v2552 = vld [vmem:[%s2531 + $0xf0] sm:$0xff]
        %v2553 = vld [vmem:[%s2531 + $0xf8] sm:$0xff]
        %v2554 = vld [vmem:[%s2531 + $0x108] sm:$0xff]
        %v2555 = vld [vmem:[%s2531 + $0x110] sm:$0xff]
        %v2556 = vld [vmem:[%s2531 + $0x120] sm:$0xff]
        %v2557 = vld [vmem:[%s2531 + $0x128] sm:$0xff]
        %v2558 = vld [vmem:[%s2531 + $0x138] sm:$0xff]
        %v2559 = vld [vmem:[%s2531 + $0x140] sm:$0xff]
        %v2560 = vld [vmem:[%s2531 + $0x150] sm:$0xff]
        %v2561 = vld [vmem:[%s2531 + $0x158] sm:$0xff]
        %v2562 = vld [vmem:[%s2531 + $0x168] sm:$0xff]
        %v2563 = vld [vmem:[%s2531 + $0x170] sm:$0xff]
        %v2564 = vld [vmem:[%s3 + $0x60] sm:$0xf]
        %v2565 = vld [vmem:[%s3 + $0x64] sm:$0xf]
        %v2566 = vld [vmem:[%s3 + $0x68] sm:$0xf]
        %v2567 = vld [vmem:[%s3 + $0x6c] sm:$0xf]
        %v2568 = vpack.c.bf16 %v2533, %v2532
        %v2569 = vpack.c.bf16 %v2535, %v2534
        %v2570 = vpack.c.bf16 %v2537, %v2536
        %v2571 = vpack.c.bf16 %v2539, %v2538
        %v2572 = vpack.c.bf16 %v2541, %v2540
        %v2573 = vpack.c.bf16 %v2543, %v2542
        %v2574 = vpack.c.bf16 %v2545, %v2544
        %v2575 = vpack.c.bf16 %v2547, %v2546
        %v2576 = vpack.c.bf16 %v2549, %v2548
        %v2577 = vpack.c.bf16 %v2551, %v2550
        %v2578 = vpack.c.bf16 %v2553, %v2552
        %v2579 = vpack.c.bf16 %v2555, %v2554
        %v2580 = vpack.c.bf16 %v2557, %v2556
        %v2581 = vpack.c.bf16 %v2559, %v2558
        %v2582 = vpack.c.bf16 %v2561, %v2560
        %v2583 = vpack.c.bf16 %v2563, %v2562
        %v2588 = vunpack.c.l.b16 %v2564
        %v2589 = vunpack.c.l.b16 %v2565
        %v2590 = vunpack.c.l.b16 %v2566
        %v2591 = vunpack.c.l.b16 %v2567
        %v2592 = vpack.c.b16 %v2589, %v2588
        %v2593 = vpack.c.b16 %v2591, %v2590
        %v2597 = vsel %vm1108, %v2568, 0
        %v2600 = vsel %vm1108, %v2569, 0
        %v2603 = vsel %vm1108, %v2570, 0
        %v2606 = vsel %vm1108, %v2571, 0
        %v2609 = vsel %vm1108, %v2572, 0
        %v2612 = vsel %vm1108, %v2573, 0
        %v2615 = vsel %vm1108, %v2574, 0
        %v2618 = vsel %vm1108, %v2575, 0
        %v2621 = vsel %vm1108, %v2576, 0
        %v2624 = vsel %vm1108, %v2577, 0
        %v2627 = vsel %vm1108, %v2578, 0
        %v2630 = vsel %vm1108, %v2579, 0
        %v2633 = vsel %vm1108, %v2580, 0
        %v2636 = vsel %vm1108, %v2581, 0
        %v2639 = vsel %vm1108, %v2582, 0
        %v2642 = vsel %vm1108, %v2583, 0
        %2644 = vmatpush.bf16.msra.mxu0 0
        %2645 = vmatpush.bf16.msra.mxu0 0
        %2646 = vmatpush.bf16.msra.mxu0 0
        %2647 = vmatpush.bf16.msra.mxu0 0
        %2648 = vmatpush.bf16.msra.mxu0 0
        %2649 = vmatpush.bf16.msra.mxu0 0
        %2650 = vmatpush.bf16.msra.mxu0 %v2593
        %2651 = vmatpush.bf16.msra.mxu0 %v2592
        %2652 = vmatmul.bf16.gmra.mxu0 %v2597
        %v2653 = vpop.f32.mrf.mxu0
        %v2654 = vadd.f32 0.0, %v2653
        %v2655 = vpop.f32.mrf.mxu0
        %v2656 = vadd.f32 0.0, %v2655
        %2657 = vmatmul.bf16.gmra.mxu0 %v2600
        %v2658 = vpop.f32.mrf.mxu0
        %v2659 = vadd.f32 0.0, %v2658
        %v2660 = vpop.f32.mrf.mxu0
        %v2661 = vadd.f32 0.0, %v2660
        %2662 = vmatmul.bf16.gmra.mxu0 %v2603
        %v2663 = vpop.f32.mrf.mxu0
        %v2664 = vadd.f32 0.0, %v2663
        %v2665 = vpop.f32.mrf.mxu0
        %v2666 = vadd.f32 0.0, %v2665
        %2667 = vmatmul.bf16.gmra.mxu0 %v2606
        %v2668 = vpop.f32.mrf.mxu0
        %v2669 = vadd.f32 0.0, %v2668
        %v2670 = vpop.f32.mrf.mxu0
        %v2671 = vadd.f32 0.0, %v2670
        %2672 = vmatmul.bf16.gmra.mxu0 %v2609
        %v2673 = vpop.f32.mrf.mxu0
        %v2674 = vadd.f32 0.0, %v2673
        %v2675 = vpop.f32.mrf.mxu0
        %v2676 = vadd.f32 0.0, %v2675
        %2677 = vmatmul.bf16.gmra.mxu0 %v2612
        %v2678 = vpop.f32.mrf.mxu0
        %v2679 = vadd.f32 0.0, %v2678
        %v2680 = vpop.f32.mrf.mxu0
        %v2681 = vadd.f32 0.0, %v2680
        %2682 = vmatmul.bf16.gmra.mxu0 %v2615
        %v2683 = vpop.f32.mrf.mxu0
        %v2684 = vadd.f32 0.0, %v2683
        %v2685 = vpop.f32.mrf.mxu0
        %v2686 = vadd.f32 0.0, %v2685
        %2687 = vmatmul.bf16.gmra.mxu0 %v2618
        %v2688 = vpop.f32.mrf.mxu0
        %v2689 = vadd.f32 0.0, %v2688
        %v2690 = vpop.f32.mrf.mxu0
        %v2691 = vadd.f32 0.0, %v2690
        %2692 = vmatmul.bf16.gmra.mxu0 %v2621
        %v2693 = vpop.f32.mrf.mxu0
        %v2694 = vadd.f32 0.0, %v2693
        %v2695 = vpop.f32.mrf.mxu0
        %v2696 = vadd.f32 0.0, %v2695
        %2697 = vmatmul.bf16.gmra.mxu0 %v2624
        %v2698 = vpop.f32.mrf.mxu0
        %v2699 = vadd.f32 0.0, %v2698
        %v2700 = vpop.f32.mrf.mxu0
        %v2701 = vadd.f32 0.0, %v2700
        %2702 = vmatmul.bf16.gmra.mxu0 %v2627
        %v2703 = vpop.f32.mrf.mxu0
        %v2704 = vadd.f32 0.0, %v2703
        %v2705 = vpop.f32.mrf.mxu0
        %v2706 = vadd.f32 0.0, %v2705
        %2707 = vmatmul.bf16.gmra.mxu0 %v2630
        %v2708 = vpop.f32.mrf.mxu0
        %v2709 = vadd.f32 0.0, %v2708
        %v2710 = vpop.f32.mrf.mxu0
        %v2711 = vadd.f32 0.0, %v2710
        %2712 = vmatmul.bf16.gmra.mxu0 %v2633
        %v2713 = vpop.f32.mrf.mxu0
        %v2714 = vadd.f32 0.0, %v2713
        %v2715 = vpop.f32.mrf.mxu0
        %v2716 = vadd.f32 0.0, %v2715
        %2717 = vmatmul.bf16.gmra.mxu0 %v2636
        %v2718 = vpop.f32.mrf.mxu0
        %v2719 = vadd.f32 0.0, %v2718
        %v2720 = vpop.f32.mrf.mxu0
        %v2721 = vadd.f32 0.0, %v2720
        %2722 = vmatmul.bf16.gmra.mxu0 %v2639
        %v2723 = vpop.f32.mrf.mxu0
        %v2724 = vadd.f32 0.0, %v2723
        %v2725 = vpop.f32.mrf.mxu0
        %v2726 = vadd.f32 0.0, %v2725
        %2727 = vmatmul.bf16.gmra.mxu0 %v2642
        %v2728 = vpop.f32.mrf.mxu0
        %v2729 = vadd.f32 0.0, %v2728
        %v2730 = vpop.f32.mrf.mxu0
        %v2731 = vadd.f32 0.0, %v2730
        %2732 = vdwg.mxu0
        %v2733 = vadd.f32 %v2499, %v2654
        %v2734 = vadd.f32 %v2500, %v2656
        %v2735 = vadd.f32 %v2501, %v2659
        %v2736 = vadd.f32 %v2502, %v2661
        %v2737 = vadd.f32 %v2503, %v2664
        %v2738 = vadd.f32 %v2504, %v2666
        %v2739 = vadd.f32 %v2505, %v2669
        %v2740 = vadd.f32 %v2506, %v2671
        %v2741 = vadd.f32 %v2507, %v2674
        %v2742 = vadd.f32 %v2508, %v2676
        %v2743 = vadd.f32 %v2509, %v2679
        %v2744 = vadd.f32 %v2510, %v2681
        %v2745 = vadd.f32 %v2511, %v2684
        %v2746 = vadd.f32 %v2512, %v2686
        %v2747 = vadd.f32 %v2513, %v2689
        %v2748 = vadd.f32 %v2514, %v2691
        %v2749 = vadd.f32 %v2515, %v2694
        %v2750 = vadd.f32 %v2516, %v2696
        %v2751 = vadd.f32 %v2517, %v2699
        %v2752 = vadd.f32 %v2518, %v2701
        %v2753 = vadd.f32 %v2519, %v2704
        %v2754 = vadd.f32 %v2520, %v2706
        %v2755 = vadd.f32 %v2521, %v2709
        %v2756 = vadd.f32 %v2522, %v2711
        %v2757 = vadd.f32 %v2523, %v2714
        %v2758 = vadd.f32 %v2524, %v2716
        %v2759 = vadd.f32 %v2525, %v2719
        %v2760 = vadd.f32 %v2526, %v2721
        %v2761 = vadd.f32 %v2527, %v2724
        %v2762 = vadd.f32 %v2528, %v2726
        %v2763 = vadd.f32 %v2529, %v2729
        %v2764 = vadd.f32 %v2530, %v2731
        %v2765 = vld [vmem:[%s2531 + $0x1] sm:$0xff]
        %v2766 = vld [vmem:[%s2531 + $0x9] sm:$0xff]
        %v2767 = vld [vmem:[%s2531 + $0x19] sm:$0xff]
        %v2768 = vld [vmem:[%s2531 + $0x21] sm:$0xff]
        %v2769 = vld [vmem:[%s2531 + $0x31] sm:$0xff]
        %v2770 = vld [vmem:[%s2531 + $0x39] sm:$0xff]
        %v2771 = vld [vmem:[%s2531 + $0x49] sm:$0xff]
        %v2772 = vld [vmem:[%s2531 + $0x51] sm:$0xff]
        %v2773 = vld [vmem:[%s2531 + $0x61] sm:$0xff]
        %v2774 = vld [vmem:[%s2531 + $0x69] sm:$0xff]
        %v2775 = vld [vmem:[%s2531 + $0x79] sm:$0xff]
        %v2776 = vld [vmem:[%s2531 + $0x81] sm:$0xff]
        %v2777 = vld [vmem:[%s2531 + $0x91] sm:$0xff]
        %v2778 = vld [vmem:[%s2531 + $0x99] sm:$0xff]
        %v2779 = vld [vmem:[%s2531 + $0xa9] sm:$0xff]
        %v2780 = vld [vmem:[%s2531 + $0xb1] sm:$0xff]
        %v2781 = vld [vmem:[%s2531 + $0xc1] sm:$0xff]
        %v2782 = vld [vmem:[%s2531 + $0xc9] sm:$0xff]
        %v2783 = vld [vmem:[%s2531 + $0xd9] sm:$0xff]
        %v2784 = vld [vmem:[%s2531 + $0xe1] sm:$0xff]
        %v2785 = vld [vmem:[%s2531 + $0xf1] sm:$0xff]
        %v2786 = vld [vmem:[%s2531 + $0xf9] sm:$0xff]
        %v2787 = vld [vmem:[%s2531 + $0x109] sm:$0xff]
        %v2788 = vld [vmem:[%s2531 + $0x111] sm:$0xff]
        %v2789 = vld [vmem:[%s2531 + $0x121] sm:$0xff]
        %v2790 = vld [vmem:[%s2531 + $0x129] sm:$0xff]
        %v2791 = vld [vmem:[%s2531 + $0x139] sm:$0xff]
        %v2792 = vld [vmem:[%s2531 + $0x141] sm:$0xff]
        %v2793 = vld [vmem:[%s2531 + $0x151] sm:$0xff]
        %v2794 = vld [vmem:[%s2531 + $0x159] sm:$0xff]
        %v2795 = vld [vmem:[%s2531 + $0x169] sm:$0xff]
        %v2796 = vld [vmem:[%s2531 + $0x171] sm:$0xff]
        %v2797 = vld [vmem:[%s3 + $0x70] sm:$0xf]
        %v2798 = vld [vmem:[%s3 + $0x74] sm:$0xf]
        %v2799 = vld [vmem:[%s3 + $0x78] sm:$0xf]
        %v2800 = vld [vmem:[%s3 + $0x7c] sm:$0xf]
        %v2801 = vpack.c.bf16 %v2766, %v2765
        %v2802 = vpack.c.bf16 %v2768, %v2767
        %v2803 = vpack.c.bf16 %v2770, %v2769
        %v2804 = vpack.c.bf16 %v2772, %v2771
        %v2805 = vpack.c.bf16 %v2774, %v2773
        %v2806 = vpack.c.bf16 %v2776, %v2775
        %v2807 = vpack.c.bf16 %v2778, %v2777
        %v2808 = vpack.c.bf16 %v2780, %v2779
        %v2809 = vpack.c.bf16 %v2782, %v2781
        %v2810 = vpack.c.bf16 %v2784, %v2783
        %v2811 = vpack.c.bf16 %v2786, %v2785
        %v2812 = vpack.c.bf16 %v2788, %v2787
        %v2813 = vpack.c.bf16 %v2790, %v2789
        %v2814 = vpack.c.bf16 %v2792, %v2791
        %v2815 = vpack.c.bf16 %v2794, %v2793
        %v2816 = vpack.c.bf16 %v2796, %v2795
        %v2821 = vunpack.c.l.b16 %v2797
        %v2822 = vunpack.c.l.b16 %v2798
        %v2823 = vunpack.c.l.b16 %v2799
        %v2824 = vunpack.c.l.b16 %v2800
        %v2825 = vpack.c.b16 %v2822, %v2821
        %v2826 = vpack.c.b16 %v2824, %v2823
        %v2830 = vsel %vm1108, %v2801, 0
        %v2833 = vsel %vm1108, %v2802, 0
        %v2836 = vsel %vm1108, %v2803, 0
        %v2839 = vsel %vm1108, %v2804, 0
        %v2842 = vsel %vm1108, %v2805, 0
        %v2845 = vsel %vm1108, %v2806, 0
        %v2848 = vsel %vm1108, %v2807, 0
        %v2851 = vsel %vm1108, %v2808, 0
        %v2854 = vsel %vm1108, %v2809, 0
        %v2857 = vsel %vm1108, %v2810, 0
        %v2860 = vsel %vm1108, %v2811, 0
        %v2863 = vsel %vm1108, %v2812, 0
        %v2866 = vsel %vm1108, %v2813, 0
        %v2869 = vsel %vm1108, %v2814, 0
        %v2872 = vsel %vm1108, %v2815, 0
        %v2875 = vsel %vm1108, %v2816, 0
        %2877 = vmatpush.bf16.msra.mxu0 0
        %2878 = vmatpush.bf16.msra.mxu0 0
        %2879 = vmatpush.bf16.msra.mxu0 0
        %2880 = vmatpush.bf16.msra.mxu0 0
        %2881 = vmatpush.bf16.msra.mxu0 0
        %2882 = vmatpush.bf16.msra.mxu0 0
        %2883 = vmatpush.bf16.msra.mxu0 %v2826
        %2884 = vmatpush.bf16.msra.mxu0 %v2825
        %2885 = vmatmul.bf16.gmra.mxu0 %v2830
        %v2886 = vpop.f32.mrf.mxu0
        %v2887 = vadd.f32 0.0, %v2886
        %v2888 = vpop.f32.mrf.mxu0
        %v2889 = vadd.f32 0.0, %v2888
        %2890 = vmatmul.bf16.gmra.mxu0 %v2833
        %v2891 = vpop.f32.mrf.mxu0
        %v2892 = vadd.f32 0.0, %v2891
        %v2893 = vpop.f32.mrf.mxu0
        %v2894 = vadd.f32 0.0, %v2893
        %2895 = vmatmul.bf16.gmra.mxu0 %v2836
        %v2896 = vpop.f32.mrf.mxu0
        %v2897 = vadd.f32 0.0, %v2896
        %v2898 = vpop.f32.mrf.mxu0
        %v2899 = vadd.f32 0.0, %v2898
        %2900 = vmatmul.bf16.gmra.mxu0 %v2839
        %v2901 = vpop.f32.mrf.mxu0
        %v2902 = vadd.f32 0.0, %v2901
        %v2903 = vpop.f32.mrf.mxu0
        %v2904 = vadd.f32 0.0, %v2903
        %2905 = vmatmul.bf16.gmra.mxu0 %v2842
        %v2906 = vpop.f32.mrf.mxu0
        %v2907 = vadd.f32 0.0, %v2906
        %v2908 = vpop.f32.mrf.mxu0
        %v2909 = vadd.f32 0.0, %v2908
        %2910 = vmatmul.bf16.gmra.mxu0 %v2845
        %v2911 = vpop.f32.mrf.mxu0
        %v2912 = vadd.f32 0.0, %v2911
        %v2913 = vpop.f32.mrf.mxu0
        %v2914 = vadd.f32 0.0, %v2913
        %2915 = vmatmul.bf16.gmra.mxu0 %v2848
        %v2916 = vpop.f32.mrf.mxu0
        %v2917 = vadd.f32 0.0, %v2916
        %v2918 = vpop.f32.mrf.mxu0
        %v2919 = vadd.f32 0.0, %v2918
        %2920 = vmatmul.bf16.gmra.mxu0 %v2851
        %v2921 = vpop.f32.mrf.mxu0
        %v2922 = vadd.f32 0.0, %v2921
        %v2923 = vpop.f32.mrf.mxu0
        %v2924 = vadd.f32 0.0, %v2923
        %2925 = vmatmul.bf16.gmra.mxu0 %v2854
        %v2926 = vpop.f32.mrf.mxu0
        %v2927 = vadd.f32 0.0, %v2926
        %v2928 = vpop.f32.mrf.mxu0
        %v2929 = vadd.f32 0.0, %v2928
        %2930 = vmatmul.bf16.gmra.mxu0 %v2857
        %v2931 = vpop.f32.mrf.mxu0
        %v2932 = vadd.f32 0.0, %v2931
        %v2933 = vpop.f32.mrf.mxu0
        %v2934 = vadd.f32 0.0, %v2933
        %2935 = vmatmul.bf16.gmra.mxu0 %v2860
        %v2936 = vpop.f32.mrf.mxu0
        %v2937 = vadd.f32 0.0, %v2936
        %v2938 = vpop.f32.mrf.mxu0
        %v2939 = vadd.f32 0.0, %v2938
        %2940 = vmatmul.bf16.gmra.mxu0 %v2863
        %v2941 = vpop.f32.mrf.mxu0
        %v2942 = vadd.f32 0.0, %v2941
        %v2943 = vpop.f32.mrf.mxu0
        %v2944 = vadd.f32 0.0, %v2943
        %2945 = vmatmul.bf16.gmra.mxu0 %v2866
        %v2946 = vpop.f32.mrf.mxu0
        %v2947 = vadd.f32 0.0, %v2946
        %v2948 = vpop.f32.mrf.mxu0
        %v2949 = vadd.f32 0.0, %v2948
        %2950 = vmatmul.bf16.gmra.mxu0 %v2869
        %v2951 = vpop.f32.mrf.mxu0
        %v2952 = vadd.f32 0.0, %v2951
        %v2953 = vpop.f32.mrf.mxu0
        %v2954 = vadd.f32 0.0, %v2953
        %2955 = vmatmul.bf16.gmra.mxu0 %v2872
        %v2956 = vpop.f32.mrf.mxu0
        %v2957 = vadd.f32 0.0, %v2956
        %v2958 = vpop.f32.mrf.mxu0
        %v2959 = vadd.f32 0.0, %v2958
        %2960 = vmatmul.bf16.gmra.mxu0 %v2875
        %v2961 = vpop.f32.mrf.mxu0
        %v2962 = vadd.f32 0.0, %v2961
        %v2963 = vpop.f32.mrf.mxu0
        %v2964 = vadd.f32 0.0, %v2963
        %2965 = vdwg.mxu0
        %v2966 = vadd.f32 %v2733, %v2887
        %v2967 = vadd.f32 %v2734, %v2889
        %v2968 = vadd.f32 %v2735, %v2892
        %v2969 = vadd.f32 %v2736, %v2894
        %v2970 = vadd.f32 %v2737, %v2897
        %v2971 = vadd.f32 %v2738, %v2899
        %v2972 = vadd.f32 %v2739, %v2902
        %v2973 = vadd.f32 %v2740, %v2904
        %v2974 = vadd.f32 %v2741, %v2907
        %v2975 = vadd.f32 %v2742, %v2909
        %v2976 = vadd.f32 %v2743, %v2912
        %v2977 = vadd.f32 %v2744, %v2914
        %v2978 = vadd.f32 %v2745, %v2917
        %v2979 = vadd.f32 %v2746, %v2919
        %v2980 = vadd.f32 %v2747, %v2922
        %v2981 = vadd.f32 %v2748, %v2924
        %v2982 = vadd.f32 %v2749, %v2927
        %v2983 = vadd.f32 %v2750, %v2929
        %v2984 = vadd.f32 %v2751, %v2932
        %v2985 = vadd.f32 %v2752, %v2934
        %v2986 = vadd.f32 %v2753, %v2937
        %v2987 = vadd.f32 %v2754, %v2939
        %v2988 = vadd.f32 %v2755, %v2942
        %v2989 = vadd.f32 %v2756, %v2944
        %v2990 = vadd.f32 %v2757, %v2947
        %v2991 = vadd.f32 %v2758, %v2949
        %v2992 = vadd.f32 %v2759, %v2952
        %v2993 = vadd.f32 %v2760, %v2954
        %v2994 = vadd.f32 %v2761, %v2957
        %v2995 = vadd.f32 %v2762, %v2959
        %v2996 = vadd.f32 %v2763, %v2962
        %v2997 = vadd.f32 %v2764, %v2964
        %v2998 = vld [vmem:[%s2531 + $0x2] sm:$0xff]
        %v2999 = vld [vmem:[%s2531 + $0xa] sm:$0xff]
        %v3000 = vld [vmem:[%s2531 + $0x1a] sm:$0xff]
        %v3001 = vld [vmem:[%s2531 + $0x22] sm:$0xff]
        %v3002 = vld [vmem:[%s2531 + $0x32] sm:$0xff]
        %v3003 = vld [vmem:[%s2531 + $0x3a] sm:$0xff]
        %v3004 = vld [vmem:[%s2531 + $0x4a] sm:$0xff]
        %v3005 = vld [vmem:[%s2531 + $0x52] sm:$0xff]
        %v3006 = vld [vmem:[%s2531 + $0x62] sm:$0xff]
        %v3007 = vld [vmem:[%s2531 + $0x6a] sm:$0xff]
        %v3008 = vld [vmem:[%s2531 + $0x7a] sm:$0xff]
        %v3009 = vld [vmem:[%s2531 + $0x82] sm:$0xff]
        %v3010 = vld [vmem:[%s2531 + $0x92] sm:$0xff]
        %v3011 = vld [vmem:[%s2531 + $0x9a] sm:$0xff]
        %v3012 = vld [vmem:[%s2531 + $0xaa] sm:$0xff]
        %v3013 = vld [vmem:[%s2531 + $0xb2] sm:$0xff]
        %v3014 = vld [vmem:[%s2531 + $0xc2] sm:$0xff]
        %v3015 = vld [vmem:[%s2531 + $0xca] sm:$0xff]
        %v3016 = vld [vmem:[%s2531 + $0xda] sm:$0xff]
        %v3017 = vld [vmem:[%s2531 + $0xe2] sm:$0xff]
        %v3018 = vld [vmem:[%s2531 + $0xf2] sm:$0xff]
        %v3019 = vld [vmem:[%s2531 + $0xfa] sm:$0xff]
        %v3020 = vld [vmem:[%s2531 + $0x10a] sm:$0xff]
        %v3021 = vld [vmem:[%s2531 + $0x112] sm:$0xff]
        %v3022 = vld [vmem:[%s2531 + $0x122] sm:$0xff]
        %v3023 = vld [vmem:[%s2531 + $0x12a] sm:$0xff]
        %v3024 = vld [vmem:[%s2531 + $0x13a] sm:$0xff]
        %v3025 = vld [vmem:[%s2531 + $0x142] sm:$0xff]
        %v3026 = vld [vmem:[%s2531 + $0x152] sm:$0xff]
        %v3027 = vld [vmem:[%s2531 + $0x15a] sm:$0xff]
        %v3028 = vld [vmem:[%s2531 + $0x16a] sm:$0xff]
        %v3029 = vld [vmem:[%s2531 + $0x172] sm:$0xff]
        %v3030 = vld [vmem:[%s3 + $0x80] sm:$0xf]
        %v3031 = vld [vmem:[%s3 + $0x84] sm:$0xf]
        %v3032 = vld [vmem:[%s3 + $0x88] sm:$0xf]
        %v3033 = vld [vmem:[%s3 + $0x8c] sm:$0xf]
        %v3034 = vpack.c.bf16 %v2999, %v2998
        %v3035 = vpack.c.bf16 %v3001, %v3000
        %v3036 = vpack.c.bf16 %v3003, %v3002
        %v3037 = vpack.c.bf16 %v3005, %v3004
        %v3038 = vpack.c.bf16 %v3007, %v3006
        %v3039 = vpack.c.bf16 %v3009, %v3008
        %v3040 = vpack.c.bf16 %v3011, %v3010
        %v3041 = vpack.c.bf16 %v3013, %v3012
        %v3042 = vpack.c.bf16 %v3015, %v3014
        %v3043 = vpack.c.bf16 %v3017, %v3016
        %v3044 = vpack.c.bf16 %v3019, %v3018
        %v3045 = vpack.c.bf16 %v3021, %v3020
        %v3046 = vpack.c.bf16 %v3023, %v3022
        %v3047 = vpack.c.bf16 %v3025, %v3024
        %v3048 = vpack.c.bf16 %v3027, %v3026
        %v3049 = vpack.c.bf16 %v3029, %v3028
        %v3054 = vunpack.c.l.b16 %v3030
        %v3055 = vunpack.c.l.b16 %v3031
        %v3056 = vunpack.c.l.b16 %v3032
        %v3057 = vunpack.c.l.b16 %v3033
        %v3058 = vpack.c.b16 %v3055, %v3054
        %v3059 = vpack.c.b16 %v3057, %v3056
        %v3063 = vsel %vm1108, %v3034, 0
        %v3066 = vsel %vm1108, %v3035, 0
        %v3069 = vsel %vm1108, %v3036, 0
        %v3072 = vsel %vm1108, %v3037, 0
        %v3075 = vsel %vm1108, %v3038, 0
        %v3078 = vsel %vm1108, %v3039, 0
        %v3081 = vsel %vm1108, %v3040, 0
        %v3084 = vsel %vm1108, %v3041, 0
        %v3087 = vsel %vm1108, %v3042, 0
        %v3090 = vsel %vm1108, %v3043, 0
        %v3093 = vsel %vm1108, %v3044, 0
        %v3096 = vsel %vm1108, %v3045, 0
        %v3099 = vsel %vm1108, %v3046, 0
        %v3102 = vsel %vm1108, %v3047, 0
        %v3105 = vsel %vm1108, %v3048, 0
        %v3108 = vsel %vm1108, %v3049, 0
        %3110 = vmatpush.bf16.msra.mxu0 0
        %3111 = vmatpush.bf16.msra.mxu0 0
        %3112 = vmatpush.bf16.msra.mxu0 0
        %3113 = vmatpush.bf16.msra.mxu0 0
        %3114 = vmatpush.bf16.msra.mxu0 0
        %3115 = vmatpush.bf16.msra.mxu0 0
        %3116 = vmatpush.bf16.msra.mxu0 %v3059
        %3117 = vmatpush.bf16.msra.mxu0 %v3058
        %3118 = vmatmul.bf16.gmra.mxu0 %v3063
        %v3119 = vpop.f32.mrf.mxu0
        %v3120 = vadd.f32 0.0, %v3119
        %v3121 = vpop.f32.mrf.mxu0
        %v3122 = vadd.f32 0.0, %v3121
        %3123 = vmatmul.bf16.gmra.mxu0 %v3066
        %v3124 = vpop.f32.mrf.mxu0
        %v3125 = vadd.f32 0.0, %v3124
        %v3126 = vpop.f32.mrf.mxu0
        %v3127 = vadd.f32 0.0, %v3126
        %3128 = vmatmul.bf16.gmra.mxu0 %v3069
        %v3129 = vpop.f32.mrf.mxu0
        %v3130 = vadd.f32 0.0, %v3129
        %v3131 = vpop.f32.mrf.mxu0
        %v3132 = vadd.f32 0.0, %v3131
        %3133 = vmatmul.bf16.gmra.mxu0 %v3072
        %v3134 = vpop.f32.mrf.mxu0
        %v3135 = vadd.f32 0.0, %v3134
        %v3136 = vpop.f32.mrf.mxu0
        %v3137 = vadd.f32 0.0, %v3136
        %3138 = vmatmul.bf16.gmra.mxu0 %v3075
        %v3139 = vpop.f32.mrf.mxu0
        %v3140 = vadd.f32 0.0, %v3139
        %v3141 = vpop.f32.mrf.mxu0
        %v3142 = vadd.f32 0.0, %v3141
        %3143 = vmatmul.bf16.gmra.mxu0 %v3078
        %v3144 = vpop.f32.mrf.mxu0
        %v3145 = vadd.f32 0.0, %v3144
        %v3146 = vpop.f32.mrf.mxu0
        %v3147 = vadd.f32 0.0, %v3146
        %3148 = vmatmul.bf16.gmra.mxu0 %v3081
        %v3149 = vpop.f32.mrf.mxu0
        %v3150 = vadd.f32 0.0, %v3149
        %v3151 = vpop.f32.mrf.mxu0
        %v3152 = vadd.f32 0.0, %v3151
        %3153 = vmatmul.bf16.gmra.mxu0 %v3084
        %v3154 = vpop.f32.mrf.mxu0
        %v3155 = vadd.f32 0.0, %v3154
        %v3156 = vpop.f32.mrf.mxu0
        %v3157 = vadd.f32 0.0, %v3156
        %3158 = vmatmul.bf16.gmra.mxu0 %v3087
        %v3159 = vpop.f32.mrf.mxu0
        %v3160 = vadd.f32 0.0, %v3159
        %v3161 = vpop.f32.mrf.mxu0
        %v3162 = vadd.f32 0.0, %v3161
        %3163 = vmatmul.bf16.gmra.mxu0 %v3090
        %v3164 = vpop.f32.mrf.mxu0
        %v3165 = vadd.f32 0.0, %v3164
        %v3166 = vpop.f32.mrf.mxu0
        %v3167 = vadd.f32 0.0, %v3166
        %3168 = vmatmul.bf16.gmra.mxu0 %v3093
        %v3169 = vpop.f32.mrf.mxu0
        %v3170 = vadd.f32 0.0, %v3169
        %v3171 = vpop.f32.mrf.mxu0
        %v3172 = vadd.f32 0.0, %v3171
        %3173 = vmatmul.bf16.gmra.mxu0 %v3096
        %v3174 = vpop.f32.mrf.mxu0
        %v3175 = vadd.f32 0.0, %v3174
        %v3176 = vpop.f32.mrf.mxu0
        %v3177 = vadd.f32 0.0, %v3176
        %3178 = vmatmul.bf16.gmra.mxu0 %v3099
        %v3179 = vpop.f32.mrf.mxu0
        %v3180 = vadd.f32 0.0, %v3179
        %v3181 = vpop.f32.mrf.mxu0
        %v3182 = vadd.f32 0.0, %v3181
        %3183 = vmatmul.bf16.gmra.mxu0 %v3102
        %v3184 = vpop.f32.mrf.mxu0
        %v3185 = vadd.f32 0.0, %v3184
        %v3186 = vpop.f32.mrf.mxu0
        %v3187 = vadd.f32 0.0, %v3186
        %3188 = vmatmul.bf16.gmra.mxu0 %v3105
        %v3189 = vpop.f32.mrf.mxu0
        %v3190 = vadd.f32 0.0, %v3189
        %v3191 = vpop.f32.mrf.mxu0
        %v3192 = vadd.f32 0.0, %v3191
        %3193 = vmatmul.bf16.gmra.mxu0 %v3108
        %v3194 = vpop.f32.mrf.mxu0
        %v3195 = vadd.f32 0.0, %v3194
        %v3196 = vpop.f32.mrf.mxu0
        %v3197 = vadd.f32 0.0, %v3196
        %3198 = vdwg.mxu0
        %v3199 = vadd.f32 %v2966, %v3120
        %v3200 = vadd.f32 %v2967, %v3122
        %v3201 = vadd.f32 %v2968, %v3125
        %v3202 = vadd.f32 %v2969, %v3127
        %v3203 = vadd.f32 %v2970, %v3130
        %v3204 = vadd.f32 %v2971, %v3132
        %v3205 = vadd.f32 %v2972, %v3135
        %v3206 = vadd.f32 %v2973, %v3137
        %v3207 = vadd.f32 %v2974, %v3140
        %v3208 = vadd.f32 %v2975, %v3142
        %v3209 = vadd.f32 %v2976, %v3145
        %v3210 = vadd.f32 %v2977, %v3147
        %v3211 = vadd.f32 %v2978, %v3150
        %v3212 = vadd.f32 %v2979, %v3152
        %v3213 = vadd.f32 %v2980, %v3155
        %v3214 = vadd.f32 %v2981, %v3157
        %v3215 = vadd.f32 %v2982, %v3160
        %v3216 = vadd.f32 %v2983, %v3162
        %v3217 = vadd.f32 %v2984, %v3165
        %v3218 = vadd.f32 %v2985, %v3167
        %v3219 = vadd.f32 %v2986, %v3170
        %v3220 = vadd.f32 %v2987, %v3172
        %v3221 = vadd.f32 %v2988, %v3175
        %v3222 = vadd.f32 %v2989, %v3177
        %v3223 = vadd.f32 %v2990, %v3180
        %v3224 = vadd.f32 %v2991, %v3182
        %v3225 = vadd.f32 %v2992, %v3185
        %v3226 = vadd.f32 %v2993, %v3187
        %v3227 = vadd.f32 %v2994, %v3190
        %v3228 = vadd.f32 %v2995, %v3192
        %v3229 = vadd.f32 %v2996, %v3195
        %v3230 = vadd.f32 %v2997, %v3197
        %v3231 = vld [vmem:[%s4] sm:$0x1]
        %v3233 = vperm.slane %v3231, 0
        %v3235 = vadd.f32 %v3199, %v3233
        %v3236 = vadd.f32 %v3200, %v3233
        %v3237 = vadd.f32 %v3201, %v3233
        %v3238 = vadd.f32 %v3202, %v3233
        %v3239 = vadd.f32 %v3203, %v3233
        %v3240 = vadd.f32 %v3204, %v3233
        %v3241 = vadd.f32 %v3205, %v3233
        %v3242 = vadd.f32 %v3206, %v3233
        %v3243 = vadd.f32 %v3207, %v3233
        %v3244 = vadd.f32 %v3208, %v3233
        %v3245 = vadd.f32 %v3209, %v3233
        %v3246 = vadd.f32 %v3210, %v3233
        %v3247 = vadd.f32 %v3211, %v3233
        %v3248 = vadd.f32 %v3212, %v3233
        %v3249 = vadd.f32 %v3213, %v3233
        %v3250 = vadd.f32 %v3214, %v3233
        %v3251 = vadd.f32 %v3215, %v3233
        %v3252 = vadd.f32 %v3216, %v3233
        %v3253 = vadd.f32 %v3217, %v3233
        %v3254 = vadd.f32 %v3218, %v3233
        %v3255 = vadd.f32 %v3219, %v3233
        %v3256 = vadd.f32 %v3220, %v3233
        %v3257 = vadd.f32 %v3221, %v3233
        %v3258 = vadd.f32 %v3222, %v3233
        %v3259 = vadd.f32 %v3223, %v3233
        %v3260 = vadd.f32 %v3224, %v3233
        %v3261 = vadd.f32 %v3225, %v3233
        %v3262 = vadd.f32 %v3226, %v3233
        %v3263 = vadd.f32 %v3227, %v3233
        %v3264 = vadd.f32 %v3228, %v3233
        %v3265 = vadd.f32 %v3229, %v3233
        %v3266 = vadd.f32 %v3230, %v3233
        %v3267 = vsub.f32 0.0, %v3235
        %v3268 = vsub.f32 0.0, %v3236
        %v3269 = vsub.f32 0.0, %v3237
        %v3270 = vsub.f32 0.0, %v3238
        %v3271 = vsub.f32 0.0, %v3239
        %v3272 = vsub.f32 0.0, %v3240
        %v3273 = vsub.f32 0.0, %v3241
        %v3274 = vsub.f32 0.0, %v3242
        %v3275 = vsub.f32 0.0, %v3243
        %v3276 = vsub.f32 0.0, %v3244
        %v3277 = vsub.f32 0.0, %v3245
        %v3278 = vsub.f32 0.0, %v3246
        %v3279 = vsub.f32 0.0, %v3247
        %v3280 = vsub.f32 0.0, %v3248
        %v3281 = vsub.f32 0.0, %v3249
        %v3282 = vsub.f32 0.0, %v3250
        %v3283 = vsub.f32 0.0, %v3251
        %v3284 = vsub.f32 0.0, %v3252
        %v3285 = vsub.f32 0.0, %v3253
        %v3286 = vsub.f32 0.0, %v3254
        %v3287 = vsub.f32 0.0, %v3255
        %v3288 = vsub.f32 0.0, %v3256
        %v3289 = vsub.f32 0.0, %v3257
        %v3290 = vsub.f32 0.0, %v3258
        %v3291 = vsub.f32 0.0, %v3259
        %v3292 = vsub.f32 0.0, %v3260
        %v3293 = vsub.f32 0.0, %v3261
        %v3294 = vsub.f32 0.0, %v3262
        %v3295 = vsub.f32 0.0, %v3263
        %v3296 = vsub.f32 0.0, %v3264
        %v3297 = vsub.f32 0.0, %v3265
        %v3298 = vsub.f32 0.0, %v3266
        %v3299 = vmul.f32 %v3267, 1.442695
        %v3300 = vpow.pop %v3299
        %v3301 = vmul.f32 %v3268, 1.442695
        %v3302 = vpow.pop %v3301
        %v3303 = vmul.f32 %v3269, 1.442695
        %v3304 = vpow.pop %v3303
        %v3305 = vmul.f32 %v3270, 1.442695
        %v3306 = vpow.pop %v3305
        %v3307 = vmul.f32 %v3271, 1.442695
        %v3308 = vpow.pop %v3307
        %v3309 = vmul.f32 %v3272, 1.442695
        %v3310 = vpow.pop %v3309
        %v3311 = vmul.f32 %v3273, 1.442695
        %v3312 = vpow.pop %v3311
        %v3313 = vmul.f32 %v3274, 1.442695
        %v3314 = vpow.pop %v3313
        %v3315 = vmul.f32 %v3275, 1.442695
        %v3316 = vpow.pop %v3315
        %v3317 = vmul.f32 %v3276, 1.442695
        %v3318 = vpow.pop %v3317
        %v3319 = vmul.f32 %v3277, 1.442695
        %v3320 = vpow.pop %v3319
        %v3321 = vmul.f32 %v3278, 1.442695
        %v3322 = vpow.pop %v3321
        %v3323 = vmul.f32 %v3279, 1.442695
        %v3324 = vpow.pop %v3323
        %v3325 = vmul.f32 %v3280, 1.442695
        %v3326 = vpow.pop %v3325
        %v3327 = vmul.f32 %v3281, 1.442695
        %v3328 = vpow.pop %v3327
        %v3329 = vmul.f32 %v3282, 1.442695
        %v3330 = vpow.pop %v3329
        %v3331 = vmul.f32 %v3283, 1.442695
        %v3332 = vpow.pop %v3331
        %v3333 = vmul.f32 %v3284, 1.442695
        %v3334 = vpow.pop %v3333
        %v3335 = vmul.f32 %v3285, 1.442695
        %v3336 = vpow.pop %v3335
        %v3337 = vmul.f32 %v3286, 1.442695
        %v3338 = vpow.pop %v3337
        %v3339 = vmul.f32 %v3287, 1.442695
        %v3340 = vpow.pop %v3339
        %v3341 = vmul.f32 %v3288, 1.442695
        %v3342 = vpow.pop %v3341
        %v3343 = vmul.f32 %v3289, 1.442695
        %v3344 = vpow.pop %v3343
        %v3345 = vmul.f32 %v3290, 1.442695
        %v3346 = vpow.pop %v3345
        %v3347 = vmul.f32 %v3291, 1.442695
        %v3348 = vpow.pop %v3347
        %v3349 = vmul.f32 %v3292, 1.442695
        %v3350 = vpow.pop %v3349
        %v3351 = vmul.f32 %v3293, 1.442695
        %v3352 = vpow.pop %v3351
        %v3353 = vmul.f32 %v3294, 1.442695
        %v3354 = vpow.pop %v3353
        %v3355 = vmul.f32 %v3295, 1.442695
        %v3356 = vpow.pop %v3355
        %v3357 = vmul.f32 %v3296, 1.442695
        %v3358 = vpow.pop %v3357
        %v3359 = vmul.f32 %v3297, 1.442695
        %v3360 = vpow.pop %v3359
        %v3361 = vmul.f32 %v3298, 1.442695
        %v3362 = vpow.pop %v3361
        %v3363 = vadd.f32 %v3300, 1.0
        %v3364 = vadd.f32 %v3302, 1.0
        %v3365 = vadd.f32 %v3304, 1.0
        %v3366 = vadd.f32 %v3306, 1.0
        %v3367 = vadd.f32 %v3308, 1.0
        %v3368 = vadd.f32 %v3310, 1.0
        %v3369 = vadd.f32 %v3312, 1.0
        %v3370 = vadd.f32 %v3314, 1.0
        %v3371 = vadd.f32 %v3316, 1.0
        %v3372 = vadd.f32 %v3318, 1.0
        %v3373 = vadd.f32 %v3320, 1.0
        %v3374 = vadd.f32 %v3322, 1.0
        %v3375 = vadd.f32 %v3324, 1.0
        %v3376 = vadd.f32 %v3326, 1.0
        %v3377 = vadd.f32 %v3328, 1.0
        %v3378 = vadd.f32 %v3330, 1.0
        %v3379 = vadd.f32 %v3332, 1.0
        %v3380 = vadd.f32 %v3334, 1.0
        %v3381 = vadd.f32 %v3336, 1.0
        %v3382 = vadd.f32 %v3338, 1.0
        %v3383 = vadd.f32 %v3340, 1.0
        %v3384 = vadd.f32 %v3342, 1.0
        %v3385 = vadd.f32 %v3344, 1.0
        %v3386 = vadd.f32 %v3346, 1.0
        %v3387 = vadd.f32 %v3348, 1.0
        %v3388 = vadd.f32 %v3350, 1.0
        %v3389 = vadd.f32 %v3352, 1.0
        %v3390 = vadd.f32 %v3354, 1.0
        %v3391 = vadd.f32 %v3356, 1.0
        %v3392 = vadd.f32 %v3358, 1.0
        %v3393 = vadd.f32 %v3360, 1.0
        %v3394 = vadd.f32 %v3362, 1.0
        %v3395 = vrcp.pop %v3363
        %v3396 = vmul.f32 %v3363, %v3395
        %v3397 = vsub.f32 1.0, %v3396
        %v3398 = vmul.f32 %v3395, %v3397
        %v3399 = vadd.f32 %v3395, %v3398
        %vm3400 = vweird.f32 %v3363
        %vm3401 = vweird.f32 %v3395
        %vm3402 = vmor %vm3400, %vm3401
        %v3403 = vsel %vm3402, %v3395, %v3399
        %v3404 = vand.u32 2147483647, %v3363
        %vm3405 = vcmp.eq.f32.partialorder %v3404, 8.507059e+37
        %v3406 = vand.u32 %v3363, 2147483648
        %v3407 = vor.u32 1.1754944e-38, %v3406
        %v3408 = vsel %vm3405, %v3407, %v3403
        %v3409 = vmul.f32 1.0, %v3408
        %v3410 = vrcp.pop %v3364
        %v3411 = vmul.f32 %v3364, %v3410
        %v3412 = vsub.f32 1.0, %v3411
        %v3413 = vmul.f32 %v3410, %v3412
        %v3414 = vadd.f32 %v3410, %v3413
        %vm3415 = vweird.f32 %v3364
        %vm3416 = vweird.f32 %v3410
        %vm3417 = vmor %vm3415, %vm3416
        %v3418 = vsel %vm3417, %v3410, %v3414
        %v3419 = vand.u32 2147483647, %v3364
        %vm3420 = vcmp.eq.f32.partialorder %v3419, 8.507059e+37
        %v3421 = vand.u32 %v3364, 2147483648
        %v3422 = vor.u32 1.1754944e-38, %v3421
        %v3423 = vsel %vm3420, %v3422, %v3418
        %v3424 = vmul.f32 1.0, %v3423
        %v3425 = vrcp.pop %v3365
        %v3426 = vmul.f32 %v3365, %v3425
        %v3427 = vsub.f32 1.0, %v3426
        %v3428 = vmul.f32 %v3425, %v3427
        %v3429 = vadd.f32 %v3425, %v3428
        %vm3430 = vweird.f32 %v3365
        %vm3431 = vweird.f32 %v3425
        %vm3432 = vmor %vm3430, %vm3431
        %v3433 = vsel %vm3432, %v3425, %v3429
        %v3434 = vand.u32 2147483647, %v3365
        %vm3435 = vcmp.eq.f32.partialorder %v3434, 8.507059e+37
        %v3436 = vand.u32 %v3365, 2147483648
        %v3437 = vor.u32 1.1754944e-38, %v3436
        %v3438 = vsel %vm3435, %v3437, %v3433
        %v3439 = vmul.f32 1.0, %v3438
        %v3440 = vrcp.pop %v3366
        %v3441 = vmul.f32 %v3366, %v3440
        %v3442 = vsub.f32 1.0, %v3441
        %v3443 = vmul.f32 %v3440, %v3442
        %v3444 = vadd.f32 %v3440, %v3443
        %vm3445 = vweird.f32 %v3366
        %vm3446 = vweird.f32 %v3440
        %vm3447 = vmor %vm3445, %vm3446
        %v3448 = vsel %vm3447, %v3440, %v3444
        %v3449 = vand.u32 2147483647, %v3366
        %vm3450 = vcmp.eq.f32.partialorder %v3449, 8.507059e+37
        %v3451 = vand.u32 %v3366, 2147483648
        %v3452 = vor.u32 1.1754944e-38, %v3451
        %v3453 = vsel %vm3450, %v3452, %v3448
        %v3454 = vmul.f32 1.0, %v3453
        %v3455 = vrcp.pop %v3367
        %v3456 = vmul.f32 %v3367, %v3455
        %v3457 = vsub.f32 1.0, %v3456
        %v3458 = vmul.f32 %v3455, %v3457
        %v3459 = vadd.f32 %v3455, %v3458
        %vm3460 = vweird.f32 %v3367
        %vm3461 = vweird.f32 %v3455
        %vm3462 = vmor %vm3460, %vm3461
        %v3463 = vsel %vm3462, %v3455, %v3459
        %v3464 = vand.u32 2147483647, %v3367
        %vm3465 = vcmp.eq.f32.partialorder %v3464, 8.507059e+37
        %v3466 = vand.u32 %v3367, 2147483648
        %v3467 = vor.u32 1.1754944e-38, %v3466
        %v3468 = vsel %vm3465, %v3467, %v3463
        %v3469 = vmul.f32 1.0, %v3468
        %v3470 = vrcp.pop %v3368
        %v3471 = vmul.f32 %v3368, %v3470
        %v3472 = vsub.f32 1.0, %v3471
        %v3473 = vmul.f32 %v3470, %v3472
        %v3474 = vadd.f32 %v3470, %v3473
        %vm3475 = vweird.f32 %v3368
        %vm3476 = vweird.f32 %v3470
        %vm3477 = vmor %vm3475, %vm3476
        %v3478 = vsel %vm3477, %v3470, %v3474
        %v3479 = vand.u32 2147483647, %v3368
        %vm3480 = vcmp.eq.f32.partialorder %v3479, 8.507059e+37
        %v3481 = vand.u32 %v3368, 2147483648
        %v3482 = vor.u32 1.1754944e-38, %v3481
        %v3483 = vsel %vm3480, %v3482, %v3478
        %v3484 = vmul.f32 1.0, %v3483
        %v3485 = vrcp.pop %v3369
        %v3486 = vmul.f32 %v3369, %v3485
        %v3487 = vsub.f32 1.0, %v3486
        %v3488 = vmul.f32 %v3485, %v3487
        %v3489 = vadd.f32 %v3485, %v3488
        %vm3490 = vweird.f32 %v3369
        %vm3491 = vweird.f32 %v3485
        %vm3492 = vmor %vm3490, %vm3491
        %v3493 = vsel %vm3492, %v3485, %v3489
        %v3494 = vand.u32 2147483647, %v3369
        %vm3495 = vcmp.eq.f32.partialorder %v3494, 8.507059e+37
        %v3496 = vand.u32 %v3369, 2147483648
        %v3497 = vor.u32 1.1754944e-38, %v3496
        %v3498 = vsel %vm3495, %v3497, %v3493
        %v3499 = vmul.f32 1.0, %v3498
        %v3500 = vrcp.pop %v3370
        %v3501 = vmul.f32 %v3370, %v3500
        %v3502 = vsub.f32 1.0, %v3501
        %v3503 = vmul.f32 %v3500, %v3502
        %v3504 = vadd.f32 %v3500, %v3503
        %vm3505 = vweird.f32 %v3370
        %vm3506 = vweird.f32 %v3500
        %vm3507 = vmor %vm3505, %vm3506
        %v3508 = vsel %vm3507, %v3500, %v3504
        %v3509 = vand.u32 2147483647, %v3370
        %vm3510 = vcmp.eq.f32.partialorder %v3509, 8.507059e+37
        %v3511 = vand.u32 %v3370, 2147483648
        %v3512 = vor.u32 1.1754944e-38, %v3511
        %v3513 = vsel %vm3510, %v3512, %v3508
        %v3514 = vmul.f32 1.0, %v3513
        %v3515 = vrcp.pop %v3371
        %v3516 = vmul.f32 %v3371, %v3515
        %v3517 = vsub.f32 1.0, %v3516
        %v3518 = vmul.f32 %v3515, %v3517
        %v3519 = vadd.f32 %v3515, %v3518
        %vm3520 = vweird.f32 %v3371
        %vm3521 = vweird.f32 %v3515
        %vm3522 = vmor %vm3520, %vm3521
        %v3523 = vsel %vm3522, %v3515, %v3519
        %v3524 = vand.u32 2147483647, %v3371
        %vm3525 = vcmp.eq.f32.partialorder %v3524, 8.507059e+37
        %v3526 = vand.u32 %v3371, 2147483648
        %v3527 = vor.u32 1.1754944e-38, %v3526
        %v3528 = vsel %vm3525, %v3527, %v3523
        %v3529 = vmul.f32 1.0, %v3528
        %v3530 = vrcp.pop %v3372
        %v3531 = vmul.f32 %v3372, %v3530
        %v3532 = vsub.f32 1.0, %v3531
        %v3533 = vmul.f32 %v3530, %v3532
        %v3534 = vadd.f32 %v3530, %v3533
        %vm3535 = vweird.f32 %v3372
        %vm3536 = vweird.f32 %v3530
        %vm3537 = vmor %vm3535, %vm3536
        %v3538 = vsel %vm3537, %v3530, %v3534
        %v3539 = vand.u32 2147483647, %v3372
        %vm3540 = vcmp.eq.f32.partialorder %v3539, 8.507059e+37
        %v3541 = vand.u32 %v3372, 2147483648
        %v3542 = vor.u32 1.1754944e-38, %v3541
        %v3543 = vsel %vm3540, %v3542, %v3538
        %v3544 = vmul.f32 1.0, %v3543
        %v3545 = vrcp.pop %v3373
        %v3546 = vmul.f32 %v3373, %v3545
        %v3547 = vsub.f32 1.0, %v3546
        %v3548 = vmul.f32 %v3545, %v3547
        %v3549 = vadd.f32 %v3545, %v3548
        %vm3550 = vweird.f32 %v3373
        %vm3551 = vweird.f32 %v3545
        %vm3552 = vmor %vm3550, %vm3551
        %v3553 = vsel %vm3552, %v3545, %v3549
        %v3554 = vand.u32 2147483647, %v3373
        %vm3555 = vcmp.eq.f32.partialorder %v3554, 8.507059e+37
        %v3556 = vand.u32 %v3373, 2147483648
        %v3557 = vor.u32 1.1754944e-38, %v3556
        %v3558 = vsel %vm3555, %v3557, %v3553
        %v3559 = vmul.f32 1.0, %v3558
        %v3560 = vrcp.pop %v3374
        %v3561 = vmul.f32 %v3374, %v3560
        %v3562 = vsub.f32 1.0, %v3561
        %v3563 = vmul.f32 %v3560, %v3562
        %v3564 = vadd.f32 %v3560, %v3563
        %vm3565 = vweird.f32 %v3374
        %vm3566 = vweird.f32 %v3560
        %vm3567 = vmor %vm3565, %vm3566
        %v3568 = vsel %vm3567, %v3560, %v3564
        %v3569 = vand.u32 2147483647, %v3374
        %vm3570 = vcmp.eq.f32.partialorder %v3569, 8.507059e+37
        %v3571 = vand.u32 %v3374, 2147483648
        %v3572 = vor.u32 1.1754944e-38, %v3571
        %v3573 = vsel %vm3570, %v3572, %v3568
        %v3574 = vmul.f32 1.0, %v3573
        %v3575 = vrcp.pop %v3375
        %v3576 = vmul.f32 %v3375, %v3575
        %v3577 = vsub.f32 1.0, %v3576
        %v3578 = vmul.f32 %v3575, %v3577
        %v3579 = vadd.f32 %v3575, %v3578
        %vm3580 = vweird.f32 %v3375
        %vm3581 = vweird.f32 %v3575
        %vm3582 = vmor %vm3580, %vm3581
        %v3583 = vsel %vm3582, %v3575, %v3579
        %v3584 = vand.u32 2147483647, %v3375
        %vm3585 = vcmp.eq.f32.partialorder %v3584, 8.507059e+37
        %v3586 = vand.u32 %v3375, 2147483648
        %v3587 = vor.u32 1.1754944e-38, %v3586
        %v3588 = vsel %vm3585, %v3587, %v3583
        %v3589 = vmul.f32 1.0, %v3588
        %v3590 = vrcp.pop %v3376
        %v3591 = vmul.f32 %v3376, %v3590
        %v3592 = vsub.f32 1.0, %v3591
        %v3593 = vmul.f32 %v3590, %v3592
        %v3594 = vadd.f32 %v3590, %v3593
        %vm3595 = vweird.f32 %v3376
        %vm3596 = vweird.f32 %v3590
        %vm3597 = vmor %vm3595, %vm3596
        %v3598 = vsel %vm3597, %v3590, %v3594
        %v3599 = vand.u32 2147483647, %v3376
        %vm3600 = vcmp.eq.f32.partialorder %v3599, 8.507059e+37
        %v3601 = vand.u32 %v3376, 2147483648
        %v3602 = vor.u32 1.1754944e-38, %v3601
        %v3603 = vsel %vm3600, %v3602, %v3598
        %v3604 = vmul.f32 1.0, %v3603
        %v3605 = vrcp.pop %v3377
        %v3606 = vmul.f32 %v3377, %v3605
        %v3607 = vsub.f32 1.0, %v3606
        %v3608 = vmul.f32 %v3605, %v3607
        %v3609 = vadd.f32 %v3605, %v3608
        %vm3610 = vweird.f32 %v3377
        %vm3611 = vweird.f32 %v3605
        %vm3612 = vmor %vm3610, %vm3611
        %v3613 = vsel %vm3612, %v3605, %v3609
        %v3614 = vand.u32 2147483647, %v3377
        %vm3615 = vcmp.eq.f32.partialorder %v3614, 8.507059e+37
        %v3616 = vand.u32 %v3377, 2147483648
        %v3617 = vor.u32 1.1754944e-38, %v3616
        %v3618 = vsel %vm3615, %v3617, %v3613
        %v3619 = vmul.f32 1.0, %v3618
        %v3620 = vrcp.pop %v3378
        %v3621 = vmul.f32 %v3378, %v3620
        %v3622 = vsub.f32 1.0, %v3621
        %v3623 = vmul.f32 %v3620, %v3622
        %v3624 = vadd.f32 %v3620, %v3623
        %vm3625 = vweird.f32 %v3378
        %vm3626 = vweird.f32 %v3620
        %vm3627 = vmor %vm3625, %vm3626
        %v3628 = vsel %vm3627, %v3620, %v3624
        %v3629 = vand.u32 2147483647, %v3378
        %vm3630 = vcmp.eq.f32.partialorder %v3629, 8.507059e+37
        %v3631 = vand.u32 %v3378, 2147483648
        %v3632 = vor.u32 1.1754944e-38, %v3631
        %v3633 = vsel %vm3630, %v3632, %v3628
        %v3634 = vmul.f32 1.0, %v3633
        %v3635 = vrcp.pop %v3379
        %v3636 = vmul.f32 %v3379, %v3635
        %v3637 = vsub.f32 1.0, %v3636
        %v3638 = vmul.f32 %v3635, %v3637
        %v3639 = vadd.f32 %v3635, %v3638
        %vm3640 = vweird.f32 %v3379
        %vm3641 = vweird.f32 %v3635
        %vm3642 = vmor %vm3640, %vm3641
        %v3643 = vsel %vm3642, %v3635, %v3639
        %v3644 = vand.u32 2147483647, %v3379
        %vm3645 = vcmp.eq.f32.partialorder %v3644, 8.507059e+37
        %v3646 = vand.u32 %v3379, 2147483648
        %v3647 = vor.u32 1.1754944e-38, %v3646
        %v3648 = vsel %vm3645, %v3647, %v3643
        %v3649 = vmul.f32 1.0, %v3648
        %v3650 = vrcp.pop %v3380
        %v3651 = vmul.f32 %v3380, %v3650
        %v3652 = vsub.f32 1.0, %v3651
        %v3653 = vmul.f32 %v3650, %v3652
        %v3654 = vadd.f32 %v3650, %v3653
        %vm3655 = vweird.f32 %v3380
        %vm3656 = vweird.f32 %v3650
        %vm3657 = vmor %vm3655, %vm3656
        %v3658 = vsel %vm3657, %v3650, %v3654
        %v3659 = vand.u32 2147483647, %v3380
        %vm3660 = vcmp.eq.f32.partialorder %v3659, 8.507059e+37
        %v3661 = vand.u32 %v3380, 2147483648
        %v3662 = vor.u32 1.1754944e-38, %v3661
        %v3663 = vsel %vm3660, %v3662, %v3658
        %v3664 = vmul.f32 1.0, %v3663
        %v3665 = vrcp.pop %v3381
        %v3666 = vmul.f32 %v3381, %v3665
        %v3667 = vsub.f32 1.0, %v3666
        %v3668 = vmul.f32 %v3665, %v3667
        %v3669 = vadd.f32 %v3665, %v3668
        %vm3670 = vweird.f32 %v3381
        %vm3671 = vweird.f32 %v3665
        %vm3672 = vmor %vm3670, %vm3671
        %v3673 = vsel %vm3672, %v3665, %v3669
        %v3674 = vand.u32 2147483647, %v3381
        %vm3675 = vcmp.eq.f32.partialorder %v3674, 8.507059e+37
        %v3676 = vand.u32 %v3381, 2147483648
        %v3677 = vor.u32 1.1754944e-38, %v3676
        %v3678 = vsel %vm3675, %v3677, %v3673
        %v3679 = vmul.f32 1.0, %v3678
        %v3680 = vrcp.pop %v3382
        %v3681 = vmul.f32 %v3382, %v3680
        %v3682 = vsub.f32 1.0, %v3681
        %v3683 = vmul.f32 %v3680, %v3682
        %v3684 = vadd.f32 %v3680, %v3683
        %vm3685 = vweird.f32 %v3382
        %vm3686 = vweird.f32 %v3680
        %vm3687 = vmor %vm3685, %vm3686
        %v3688 = vsel %vm3687, %v3680, %v3684
        %v3689 = vand.u32 2147483647, %v3382
        %vm3690 = vcmp.eq.f32.partialorder %v3689, 8.507059e+37
        %v3691 = vand.u32 %v3382, 2147483648
        %v3692 = vor.u32 1.1754944e-38, %v3691
        %v3693 = vsel %vm3690, %v3692, %v3688
        %v3694 = vmul.f32 1.0, %v3693
        %v3695 = vrcp.pop %v3383
        %v3696 = vmul.f32 %v3383, %v3695
        %v3697 = vsub.f32 1.0, %v3696
        %v3698 = vmul.f32 %v3695, %v3697
        %v3699 = vadd.f32 %v3695, %v3698
        %vm3700 = vweird.f32 %v3383
        %vm3701 = vweird.f32 %v3695
        %vm3702 = vmor %vm3700, %vm3701
        %v3703 = vsel %vm3702, %v3695, %v3699
        %v3704 = vand.u32 2147483647, %v3383
        %vm3705 = vcmp.eq.f32.partialorder %v3704, 8.507059e+37
        %v3706 = vand.u32 %v3383, 2147483648
        %v3707 = vor.u32 1.1754944e-38, %v3706
        %v3708 = vsel %vm3705, %v3707, %v3703
        %v3709 = vmul.f32 1.0, %v3708
        %v3710 = vrcp.pop %v3384
        %v3711 = vmul.f32 %v3384, %v3710
        %v3712 = vsub.f32 1.0, %v3711
        %v3713 = vmul.f32 %v3710, %v3712
        %v3714 = vadd.f32 %v3710, %v3713
        %vm3715 = vweird.f32 %v3384
        %vm3716 = vweird.f32 %v3710
        %vm3717 = vmor %vm3715, %vm3716
        %v3718 = vsel %vm3717, %v3710, %v3714
        %v3719 = vand.u32 2147483647, %v3384
        %vm3720 = vcmp.eq.f32.partialorder %v3719, 8.507059e+37
        %v3721 = vand.u32 %v3384, 2147483648
        %v3722 = vor.u32 1.1754944e-38, %v3721
        %v3723 = vsel %vm3720, %v3722, %v3718
        %v3724 = vmul.f32 1.0, %v3723
        %v3725 = vrcp.pop %v3385
        %v3726 = vmul.f32 %v3385, %v3725
        %v3727 = vsub.f32 1.0, %v3726
        %v3728 = vmul.f32 %v3725, %v3727
        %v3729 = vadd.f32 %v3725, %v3728
        %vm3730 = vweird.f32 %v3385
        %vm3731 = vweird.f32 %v3725
        %vm3732 = vmor %vm3730, %vm3731
        %v3733 = vsel %vm3732, %v3725, %v3729
        %v3734 = vand.u32 2147483647, %v3385
        %vm3735 = vcmp.eq.f32.partialorder %v3734, 8.507059e+37
        %v3736 = vand.u32 %v3385, 2147483648
        %v3737 = vor.u32 1.1754944e-38, %v3736
        %v3738 = vsel %vm3735, %v3737, %v3733
        %v3739 = vmul.f32 1.0, %v3738
        %v3740 = vrcp.pop %v3386
        %v3741 = vmul.f32 %v3386, %v3740
        %v3742 = vsub.f32 1.0, %v3741
        %v3743 = vmul.f32 %v3740, %v3742
        %v3744 = vadd.f32 %v3740, %v3743
        %vm3745 = vweird.f32 %v3386
        %vm3746 = vweird.f32 %v3740
        %vm3747 = vmor %vm3745, %vm3746
        %v3748 = vsel %vm3747, %v3740, %v3744
        %v3749 = vand.u32 2147483647, %v3386
        %vm3750 = vcmp.eq.f32.partialorder %v3749, 8.507059e+37
        %v3751 = vand.u32 %v3386, 2147483648
        %v3752 = vor.u32 1.1754944e-38, %v3751
        %v3753 = vsel %vm3750, %v3752, %v3748
        %v3754 = vmul.f32 1.0, %v3753
        %v3755 = vrcp.pop %v3387
        %v3756 = vmul.f32 %v3387, %v3755
        %v3757 = vsub.f32 1.0, %v3756
        %v3758 = vmul.f32 %v3755, %v3757
        %v3759 = vadd.f32 %v3755, %v3758
        %vm3760 = vweird.f32 %v3387
        %vm3761 = vweird.f32 %v3755
        %vm3762 = vmor %vm3760, %vm3761
        %v3763 = vsel %vm3762, %v3755, %v3759
        %v3764 = vand.u32 2147483647, %v3387
        %vm3765 = vcmp.eq.f32.partialorder %v3764, 8.507059e+37
        %v3766 = vand.u32 %v3387, 2147483648
        %v3767 = vor.u32 1.1754944e-38, %v3766
        %v3768 = vsel %vm3765, %v3767, %v3763
        %v3769 = vmul.f32 1.0, %v3768
        %v3770 = vrcp.pop %v3388
        %v3771 = vmul.f32 %v3388, %v3770
        %v3772 = vsub.f32 1.0, %v3771
        %v3773 = vmul.f32 %v3770, %v3772
        %v3774 = vadd.f32 %v3770, %v3773
        %vm3775 = vweird.f32 %v3388
        %vm3776 = vweird.f32 %v3770
        %vm3777 = vmor %vm3775, %vm3776
        %v3778 = vsel %vm3777, %v3770, %v3774
        %v3779 = vand.u32 2147483647, %v3388
        %vm3780 = vcmp.eq.f32.partialorder %v3779, 8.507059e+37
        %v3781 = vand.u32 %v3388, 2147483648
        %v3782 = vor.u32 1.1754944e-38, %v3781
        %v3783 = vsel %vm3780, %v3782, %v3778
        %v3784 = vmul.f32 1.0, %v3783
        %v3785 = vrcp.pop %v3389
        %v3786 = vmul.f32 %v3389, %v3785
        %v3787 = vsub.f32 1.0, %v3786
        %v3788 = vmul.f32 %v3785, %v3787
        %v3789 = vadd.f32 %v3785, %v3788
        %vm3790 = vweird.f32 %v3389
        %vm3791 = vweird.f32 %v3785
        %vm3792 = vmor %vm3790, %vm3791
        %v3793 = vsel %vm3792, %v3785, %v3789
        %v3794 = vand.u32 2147483647, %v3389
        %vm3795 = vcmp.eq.f32.partialorder %v3794, 8.507059e+37
        %v3796 = vand.u32 %v3389, 2147483648
        %v3797 = vor.u32 1.1754944e-38, %v3796
        %v3798 = vsel %vm3795, %v3797, %v3793
        %v3799 = vmul.f32 1.0, %v3798
        %v3800 = vrcp.pop %v3390
        %v3801 = vmul.f32 %v3390, %v3800
        %v3802 = vsub.f32 1.0, %v3801
        %v3803 = vmul.f32 %v3800, %v3802
        %v3804 = vadd.f32 %v3800, %v3803
        %vm3805 = vweird.f32 %v3390
        %vm3806 = vweird.f32 %v3800
        %vm3807 = vmor %vm3805, %vm3806
        %v3808 = vsel %vm3807, %v3800, %v3804
        %v3809 = vand.u32 2147483647, %v3390
        %vm3810 = vcmp.eq.f32.partialorder %v3809, 8.507059e+37
        %v3811 = vand.u32 %v3390, 2147483648
        %v3812 = vor.u32 1.1754944e-38, %v3811
        %v3813 = vsel %vm3810, %v3812, %v3808
        %v3814 = vmul.f32 1.0, %v3813
        %v3815 = vrcp.pop %v3391
        %v3816 = vmul.f32 %v3391, %v3815
        %v3817 = vsub.f32 1.0, %v3816
        %v3818 = vmul.f32 %v3815, %v3817
        %v3819 = vadd.f32 %v3815, %v3818
        %vm3820 = vweird.f32 %v3391
        %vm3821 = vweird.f32 %v3815
        %vm3822 = vmor %vm3820, %vm3821
        %v3823 = vsel %vm3822, %v3815, %v3819
        %v3824 = vand.u32 2147483647, %v3391
        %vm3825 = vcmp.eq.f32.partialorder %v3824, 8.507059e+37
        %v3826 = vand.u32 %v3391, 2147483648
        %v3827 = vor.u32 1.1754944e-38, %v3826
        %v3828 = vsel %vm3825, %v3827, %v3823
        %v3829 = vmul.f32 1.0, %v3828
        %v3830 = vrcp.pop %v3392
        %v3831 = vmul.f32 %v3392, %v3830
        %v3832 = vsub.f32 1.0, %v3831
        %v3833 = vmul.f32 %v3830, %v3832
        %v3834 = vadd.f32 %v3830, %v3833
        %vm3835 = vweird.f32 %v3392
        %vm3836 = vweird.f32 %v3830
        %vm3837 = vmor %vm3835, %vm3836
        %v3838 = vsel %vm3837, %v3830, %v3834
        %v3839 = vand.u32 2147483647, %v3392
        %vm3840 = vcmp.eq.f32.partialorder %v3839, 8.507059e+37
        %v3841 = vand.u32 %v3392, 2147483648
        %v3842 = vor.u32 1.1754944e-38, %v3841
        %v3843 = vsel %vm3840, %v3842, %v3838
        %v3844 = vmul.f32 1.0, %v3843
        %v3845 = vrcp.pop %v3393
        %v3846 = vmul.f32 %v3393, %v3845
        %v3847 = vsub.f32 1.0, %v3846
        %v3848 = vmul.f32 %v3845, %v3847
        %v3849 = vadd.f32 %v3845, %v3848
        %vm3850 = vweird.f32 %v3393
        %vm3851 = vweird.f32 %v3845
        %vm3852 = vmor %vm3850, %vm3851
        %v3853 = vsel %vm3852, %v3845, %v3849
        %v3854 = vand.u32 2147483647, %v3393
        %vm3855 = vcmp.eq.f32.partialorder %v3854, 8.507059e+37
        %v3856 = vand.u32 %v3393, 2147483648
        %v3857 = vor.u32 1.1754944e-38, %v3856
        %v3858 = vsel %vm3855, %v3857, %v3853
        %v3859 = vmul.f32 1.0, %v3858
        %v3860 = vrcp.pop %v3394
        %v3861 = vmul.f32 %v3394, %v3860
        %v3862 = vsub.f32 1.0, %v3861
        %v3863 = vmul.f32 %v3860, %v3862
        %v3864 = vadd.f32 %v3860, %v3863
        %vm3865 = vweird.f32 %v3394
        %vm3866 = vweird.f32 %v3860
        %vm3867 = vmor %vm3865, %vm3866
        %v3868 = vsel %vm3867, %v3860, %v3864
        %v3869 = vand.u32 2147483647, %v3394
        %vm3870 = vcmp.eq.f32.partialorder %v3869, 8.507059e+37
        %v3871 = vand.u32 %v3394, 2147483648
        %v3872 = vor.u32 1.1754944e-38, %v3871
        %v3873 = vsel %vm3870, %v3872, %v3868
        %v3874 = vmul.f32 1.0, %v3873
        %v3875 = vmul.f32 %v3235, %v3409
        %v3876 = vmul.f32 %v3236, %v3424
        %v3877 = vmul.f32 %v3237, %v3439
        %v3878 = vmul.f32 %v3238, %v3454
        %v3879 = vmul.f32 %v3239, %v3469
        %v3880 = vmul.f32 %v3240, %v3484
        %v3881 = vmul.f32 %v3241, %v3499
        %v3882 = vmul.f32 %v3242, %v3514
        %v3883 = vmul.f32 %v3243, %v3529
        %v3884 = vmul.f32 %v3244, %v3544
        %v3885 = vmul.f32 %v3245, %v3559
        %v3886 = vmul.f32 %v3246, %v3574
        %v3887 = vmul.f32 %v3247, %v3589
        %v3888 = vmul.f32 %v3248, %v3604
        %v3889 = vmul.f32 %v3249, %v3619
        %v3890 = vmul.f32 %v3250, %v3634
        %v3891 = vmul.f32 %v3251, %v3649
        %v3892 = vmul.f32 %v3252, %v3664
        %v3893 = vmul.f32 %v3253, %v3679
        %v3894 = vmul.f32 %v3254, %v3694
        %v3895 = vmul.f32 %v3255, %v3709
        %v3896 = vmul.f32 %v3256, %v3724
        %v3897 = vmul.f32 %v3257, %v3739
        %v3898 = vmul.f32 %v3258, %v3754
        %v3899 = vmul.f32 %v3259, %v3769
        %v3900 = vmul.f32 %v3260, %v3784
        %v3901 = vmul.f32 %v3261, %v3799
        %v3902 = vmul.f32 %v3262, %v3814
        %v3903 = vmul.f32 %v3263, %v3829
        %v3904 = vmul.f32 %v3264, %v3844
        %v3905 = vmul.f32 %v3265, %v3859
        %v3906 = vmul.f32 %v3266, %v3874
        %v3907 = vadd.f32 %v3875, %v246
        %v3908 = vadd.f32 %v3876, %v247
        %v3909 = vadd.f32 %v3877, %v248
        %v3910 = vadd.f32 %v3878, %v249
        %v3911 = vadd.f32 %v3879, %v250
        %v3912 = vadd.f32 %v3880, %v251
        %v3913 = vadd.f32 %v3881, %v252
        %v3914 = vadd.f32 %v3882, %v253
        %v3915 = vadd.f32 %v3883, %v254
        %v3916 = vadd.f32 %v3884, %v255
        %v3917 = vadd.f32 %v3885, %v256
        %v3918 = vadd.f32 %v3886, %v257
        %v3919 = vadd.f32 %v3887, %v258
        %v3920 = vadd.f32 %v3888, %v259
        %v3921 = vadd.f32 %v3889, %v260
        %v3922 = vadd.f32 %v3890, %v261
        %v3923 = vadd.f32 %v3891, %v262
        %v3924 = vadd.f32 %v3892, %v263
        %v3925 = vadd.f32 %v3893, %v264
        %v3926 = vadd.f32 %v3894, %v265
        %v3927 = vadd.f32 %v3895, %v266
        %v3928 = vadd.f32 %v3896, %v267
        %v3929 = vadd.f32 %v3897, %v268
        %v3930 = vadd.f32 %v3898, %v269
        %v3931 = vadd.f32 %v3899, %v270
        %v3932 = vadd.f32 %v3900, %v271
        %v3933 = vadd.f32 %v3901, %v272
        %v3934 = vadd.f32 %v3902, %v273
        %v3935 = vadd.f32 %v3903, %v274
        %v3936 = vadd.f32 %v3904, %v275
        %v3937 = vadd.f32 %v3905, %v276
        %v3938 = vadd.f32 %v3906, %v277
        %3939 = vst.msk [vmem:[%s244] sm:$0xff] %vm330, %v3907
        %3940 = vst.msk [vmem:[%s244 + $0x8] sm:$0xff] %vm330, %v3908
        %3941 = vst.msk [vmem:[%s244 + $0x10] sm:$0xff] %vm330, %v3909
        %3942 = vst.msk [vmem:[%s244 + $0x18] sm:$0xff] %vm330, %v3910
        %3943 = vst.msk [vmem:[%s244 + $0x20] sm:$0xff] %vm330, %v3911
        %3944 = vst.msk [vmem:[%s244 + $0x28] sm:$0xff] %vm330, %v3912
        %3945 = vst.msk [vmem:[%s244 + $0x30] sm:$0xff] %vm330, %v3913
        %3946 = vst.msk [vmem:[%s244 + $0x38] sm:$0xff] %vm330, %v3914
        %3947 = vst.msk [vmem:[%s244 + $0x40] sm:$0xff] %vm330, %v3915
        %3948 = vst.msk [vmem:[%s244 + $0x48] sm:$0xff] %vm330, %v3916
        %3949 = vst.msk [vmem:[%s244 + $0x50] sm:$0xff] %vm330, %v3917
        %3950 = vst.msk [vmem:[%s244 + $0x58] sm:$0xff] %vm330, %v3918
        %3951 = vst.msk [vmem:[%s244 + $0x60] sm:$0xff] %vm330, %v3919
        %3952 = vst.msk [vmem:[%s244 + $0x68] sm:$0xff] %vm330, %v3920
        %3953 = vst.msk [vmem:[%s244 + $0x70] sm:$0xff] %vm330, %v3921
        %3954 = vst.msk [vmem:[%s244 + $0x78] sm:$0xff] %vm330, %v3922
        %3955 = vst.msk [vmem:[%s244 + $0x80] sm:$0xff] %vm330, %v3923
        %3956 = vst.msk [vmem:[%s244 + $0x88] sm:$0xff] %vm330, %v3924
        %3957 = vst.msk [vmem:[%s244 + $0x90] sm:$0xff] %vm330, %v3925
        %3958 = vst.msk [vmem:[%s244 + $0x98] sm:$0xff] %vm330, %v3926
        %3959 = vst.msk [vmem:[%s244 + $0xa0] sm:$0xff] %vm330, %v3927
        %3960 = vst.msk [vmem:[%s244 + $0xa8] sm:$0xff] %vm330, %v3928
        %3961 = vst.msk [vmem:[%s244 + $0xb0] sm:$0xff] %vm330, %v3929
        %3962 = vst.msk [vmem:[%s244 + $0xb8] sm:$0xff] %vm330, %v3930
        %3963 = vst.msk [vmem:[%s244 + $0xc0] sm:$0xff] %vm330, %v3931
        %3964 = vst.msk [vmem:[%s244 + $0xc8] sm:$0xff] %vm330, %v3932
        %3965 = vst.msk [vmem:[%s244 + $0xd0] sm:$0xff] %vm330, %v3933
        %3966 = vst.msk [vmem:[%s244 + $0xd8] sm:$0xff] %vm330, %v3934
        %3967 = vst.msk [vmem:[%s244 + $0xe0] sm:$0xff] %vm330, %v3935
        %3968 = vst.msk [vmem:[%s244 + $0xe8] sm:$0xff] %vm330, %v3936
        %3969 = vst.msk [vmem:[%s244 + $0xf0] sm:$0xff] %vm330, %v3937
        %3970 = vst.msk [vmem:[%s244 + $0xf8] sm:$0xff] %vm330, %v3938
        %s3971 = sand.u32 %s140, 1
        %s3972 = scalar_lea.sflag [#allocation5], %s3971
        %s3973 = sand.u32 %s140, 1
        %s3974 = smul.addr %s3973, 256
        %s3975 = scalar_lea.vmem [#allocation6], %s3974
        // Predicated region
        $region45: #{tpu_custom_call.1} parent=39 // pred_check
          %p3976 = pneg %p150
        $region46: #{tpu_custom_call.1} parent=39 // pred_check_branch
          %3978 = sbr.rel (%p3976) target = $region48
        $region47: #{tpu_custom_call.1} parent=39 // pred_region
          %3980 = vsyncadd %s3972, 0
          %s3981 = smul.addr %s22, 32
          %s3982 = smul.addr %s3981, 8
          %s3983 = scalar_lea.hbm %s5, %s3982
          %s3984 = sshll.u32 %s3975, 4
          %s3985 = int_to_ptr.vmem [resolvable:$true] %s3984
          %s3986 = sshll.u32 %s3983, 4
          %s3987 = int_to_ptr.hbm [resolvable:$true] %s3986
          %3992 = dma.vmem_to_hbm [thread:$0]  %s3985, 4096, %s3987, %s3972, 128, 128, 8
        $region48: #{tpu_custom_call.1} parent=39 // pred_fallthru
          _
      $region40: #{tpu_custom_call.1} parent=5 // pred_fallthru
        _
      %p3993 = scmp.le.s32.totalorder 2, %s17
      // Predicated region
      $region49: #{tpu_custom_call.1} parent=5 // pred_check
        %p3994 = pneg %p3993
      $region50: #{tpu_custom_call.1} parent=5 // pred_check_branch
        %3996 = sbr.rel (%p3994) target = $region52
      $region51: #{tpu_custom_call.1} parent=5 // pred_region
        %s3997 = ssub.s32 %s17, 2
        // Predicated region
        $region53: #{tpu_custom_call.1} parent=51 // pred_check
          %p3998 = pneg %p156
        $region54: #{tpu_custom_call.1} parent=51 // pred_check_branch
          %4000 = sbr.rel (%p3998) target = $region56
        $region55: #{tpu_custom_call.1} parent=51 // pred_region
          %s4001 = sand.u32 %s141, 1
          %s4002 = scalar_lea.sflag [#allocation5], %s4001
          %s4003 = sand.u32 %s141, 1
          %s4004 = smul.addr %s4003, 256
          %s4005 = scalar_lea.vmem [#allocation6], %s4004
          %4007 = dma.done %s4002, 4096
        $region56: #{tpu_custom_call.1} parent=51 // pred_fallthru
          _
      $region52: #{tpu_custom_call.1} parent=5 // pred_fallthru
        _
    $region6: #{tpu_custom_call.1} parent=1 // loop_footer
      %s21 = sadd.s32 1, %s17
    $region7: #{tpu_custom_call.1} parent=1 // loop_footer_branch
      %16 = sbr.rel target = $region3
    $region8: #{tpu_custom_call.1} parent=1 // loop_exit
      _
    %4008 = vsyncpa [#allocation4], 1
    %s4009 = scalar_lea.sflag [#allocation4], 1
    %4010 = vsyncpa %s4009, 1
    %4011 = vsyncpa [#allocation5], 1
    %s4012 = scalar_lea.sflag [#allocation5], 1
    %4013 = vsyncpa %s4012, 1

</llo_original>
